<compile_context>
chip_gen: v7x
topology: tpu7x:2x2x1
jax: 0.10.0
libtpu: 0.0.40
codegen_flags: <defaults>
</compile_context>

<pallas_src>
import jax
import jax.numpy as jnp
from jax import lax
from jax.experimental import pallas as pl
from jax.experimental.pallas import tpu as pltpu


# ---------------------------------------------------------------------------
# Slab packing helpers (host side)
# ---------------------------------------------------------------------------
def _ru8(n):
    return (n + 7) // 8 * 8


def _build_slab(named_arrays):
    """Pack 2-D arrays into one (rows, lanes) f32 slab.

    Each piece starts on an 8-row boundary; lanes = max width over pieces.
    Returns (slab, offsets) with offsets[name] = (row0, nrows, ncols) as
    plain Python ints (usable as static slice bounds inside the kernel).
    """
    lanes = max(a.shape[1] for _, a in named_arrays)
    offsets = {}
    pieces = []
    r0 = 0
    for name, a in named_arrays:
        a = jnp.asarray(a, jnp.float32)
        nr, nc = a.shape
        offsets[name] = (r0, nr, nc)
        pieces.append(jnp.pad(a, ((0, _ru8(nr) - nr), (0, lanes - nc))))
        r0 += _ru8(nr)
    return jnp.concatenate(pieces, axis=0), offsets


def pack_params(params):
    """Fold/concat/pad parameters into two VMEM-friendly slabs (done once)."""
    C, _E = params["embed"].shape
    H = params["whh0"].shape[0]
    assert 1 + C <= 128

    # embedding folded into the layer-0 input projection (parameter-only)
    emb_proj = jnp.dot(params["embed"], params["wih0_emb"],
                       precision=lax.Precision.HIGHEST)            # (C, 4H)
    # fused layer-1 weight: [Wih1 ; Whh1]
    w1cat = jnp.concatenate([params["wih1"], params["whh1"]], axis=0)  # (2H,4H)
    # fused time/marker head padded to 128 lanes (lane-dense output store)
    head_w, head_b = params["head"]
    n_out = head_w.shape[1]
    head_w_pad = jnp.zeros((H, 128), jnp.float32).at[:, :n_out].set(head_w)
    head_b_pad = jnp.zeros((1, 128), jnp.float32).at[:, :n_out].set(head_b)

    lstm_slab, lstm_off = _build_slab([
        ("emb_proj", emb_proj),
        ("wih0_ts", params["wih0_ts"]),
        ("b0", params["b0"]),
        ("b1", params["b1"]),
        ("whh0", params["whh0"]),
        ("w1cat", w1cat),
        ("head_w", head_w_pad),
        ("head_b", head_b_pad),
    ])

    mlp_slab, mlp_off = _build_slab([
        ("p_attn_w", params["p_attn"][0]), ("a_attn_w", params["a_attn"][0]),
        ("i_attn_w", params["i_attn"][0]), ("attn_w", params["attn"][0]),
        ("p2o_w", params["p2o"][0]), ("o2p_w", params["o2p"][0]),
        ("out1_w", params["out1"][0]), ("out2_w", params["out2"][0]),
        ("p_attn_b", params["p_attn"][1]), ("a_attn_b", params["a_attn"][1]),
        ("i_attn_b", params["i_attn"][1]), ("attn_b", params["attn"][1]),
        ("p2o_b", params["p2o"][1]), ("o2p_b", params["o2p"][1]),
        ("out1_b", params["out1"][1]), ("out2_b", params["out2"][1]),
    ])

    dims = {"C": C, "H": H}
    return lstm_slab, lstm_off, mlp_slab, mlp_off, dims


# ---------------------------------------------------------------------------
# Fused decoder kernel (built as a closure over static dims / slab offsets)
# ---------------------------------------------------------------------------
def _make_kernel(*, L, B, H, C, lstm_off, mlp_off):
    f32 = jnp.float32
    LB = L * B
    OUT_LANES = 128

    def _get(ref, off, name):
        r0, nr, nc = off[name]
        return ref[r0:r0 + nr, 0:nc]

    def kernel(ts_ref, cat_ref, h_ref, c_ref,
               p_enc_ref, a_enc_ref, i_enc_ref,
               lstm_ref, mlp_ref,
               out_ref, stout_ref):
        # ---- static weight views (zero-cost slab slices) -------------------
        emb_proj = _get(lstm_ref, lstm_off, "emb_proj")       # (C, 4H)
        wih0_ts = _get(lstm_ref, lstm_off, "wih0_ts")         # (1, 4H)
        b0 = _get(lstm_ref, lstm_off, "b0")                   # (1, 4H)
        b1 = _get(lstm_ref, lstm_off, "b1")
        whh0 = _get(lstm_ref, lstm_off, "whh0")               # (H, 4H)
        w1cat = _get(lstm_ref, lstm_off, "w1cat")             # (2H, 4H)
        head_w = _get(lstm_ref, lstm_off, "head_w")           # (H, 128)
        head_b = _get(lstm_ref, lstm_off, "head_b")           # (1, 128)

        # ---- hoisted encoder energy projections (independent of the
        #      recurrence -> latency filler for the LSTM chain) --------------
        p_enc = p_enc_ref[...]                                # (B*Sp, Ep)
        a_enc = a_enc_ref[...]                                # (B*Sa, Eo)
        i_enc = i_enc_ref[...]                                # (B*Si, Eo)

        def energize(enc, wname, bname):
            return (jnp.dot(enc, _get(mlp_ref, mlp_off, wname),
                            preferred_element_type=f32)
                    + _get(mlp_ref, mlp_off, bname))          # (S, H)

        energy_p = energize(p_enc, "p_attn_w", "p_attn_b")
        energy_a = energize(a_enc, "a_attn_w", "a_attn_b")
        energy_i = energize(i_enc, "i_attn_w", "i_attn_b")

        # ---- layer-0 input projection for ALL timesteps: ONE matmul --------
        cat_iota = lax.broadcasted_iota(jnp.int32, (LB, C), 1)
        onehot = (cat_ref[...] == cat_iota).astype(f32)        # (LB, C)
        x_all = (ts_ref[...] * wih0_ts
                 + jnp.dot(onehot, emb_proj, preferred_element_type=f32)
                 + b0)                                         # (LB, 4H)

        # ---- 2-layer LSTM, fully unrolled (L is tiny) ----------------------
        gate_lane = lax.broadcasted_iota(jnp.int32, (B, 4 * H), 1)
        is_g_gate = (gate_lane >= 2 * H) & (gate_lane < 3 * H)

        def cell(gates, c_prev):
            # full-vreg tanh + sigmoid, then lane-select i/f/g/o
            act = jnp.where(is_g_gate, jnp.tanh(gates), jax.nn.sigmoid(gates))
            i = act[:, 0:H]
            f = act[:, H:2 * H]
            g = act[:, 2 * H:3 * H]
            o = act[:, 3 * H:4 * H]
            c_new = f * c_prev + i * g
            return o * jnp.tanh(c_new), c_new

        h0 = h_ref[0:B, :]
        h1 = h_ref[B:2 * B, :]
        c0 = c_ref[0:B, :]
        c1 = c_ref[B:2 * B, :]

        dec_steps = []
        for t in range(L):
            rec0 = jnp.dot(h0, whh0, preferred_element_type=f32)
            h0, c0 = cell(x_all[t * B:(t + 1) * B, :] + rec0, c0)
            g1 = jnp.dot(jnp.concatenate([h0, h1], axis=1), w1cat,
                         preferred_element_type=f32) + b1
            h1, c1 = cell(g1, c1)
            dec_steps.append(h1)

        stout_ref[...] = jnp.concatenate([h0, h1, c0, c1], axis=0)
        # decoder outputs, assembled in registers, rows = t*B + b
        dec = jnp.concatenate(dec_steps, axis=0)               # (LB, H)

        # ---- batch-fused attention via block-diagonal (batch-parity) mask --
        def attend(energy, enc):
            S = energy.shape[0]
            scores = lax.dot_general(dec, energy, (((1,), (1,)), ((), ())),
                                     preferred_element_type=f32)   # (LB, S)
            same = ((lax.broadcasted_iota(jnp.int32, (LB, S), 0) % B)
                    == (lax.broadcasted_iota(jnp.int32, (LB, S), 1) % B))
            scores = jnp.where(same, scores, -jnp.inf)
            m = jnp.max(scores, axis=-1, keepdims=True)
            e = jnp.exp(scores - m)
            wts = e * pl.reciprocal(jnp.sum(e, axis=-1, keepdims=True),
                                    approx=True)
            return jnp.dot(wts, enc, preferred_element_type=f32)    # (LB, E)

        p_ctx = attend(energy_p, p_enc)                        # (LB, Ep)
        a_ctx = attend(energy_a, a_enc)                        # (LB, Eo)
        i_ctx = attend(energy_i, i_enc)                        # (LB, Eo)

        p2o = jnp.maximum(
            jnp.dot(p_ctx, _get(mlp_ref, mlp_off, "p2o_w"),
                    preferred_element_type=f32)
            + _get(mlp_ref, mlp_off, "p2o_b"), 0.0)            # (LB, Eo)

        combined = jnp.concatenate([p2o, a_ctx, i_ctx], axis=0)    # (3*LB, Eo)
        energy_c = (jnp.dot(combined, _get(mlp_ref, mlp_off, "attn_w"),
                            preferred_element_type=f32)
                    + _get(mlp_ref, mlp_off, "attn_b"))
        ctx = attend(energy_c, combined)                       # (LB, Eo)

        ctx = jnp.maximum(
            jnp.dot(ctx, _get(mlp_ref, mlp_off, "o2p_w"),
                    preferred_element_type=f32)
            + _get(mlp_ref, mlp_off, "o2p_b"), 0.0)            # (LB, H)

        # ---- MLP tail on the stacked (B*L, .) block ------------------------
        out1_w = _get(mlp_ref, mlp_off, "out1_w")              # (2H, Hi)
        hidden = jnp.maximum(
            jnp.dot(ctx, out1_w[0:H, :], preferred_element_type=f32)
            + jnp.dot(dec, out1_w[H:2 * H, :], preferred_element_type=f32)
            + _get(mlp_ref, mlp_off, "out1_b"), 0.0)           # (LB, Hi)
        output = jnp.maximum(
            jnp.dot(hidden, _get(mlp_ref, mlp_off, "out2_w"),
                    preferred_element_type=f32)
            + _get(mlp_ref, mlp_off, "out2_b"), 0.0)           # (LB, H)

        # ---- fused time/marker head: ONE lane-dense (LB, 128) store --------
        y = jnp.dot(output, head_w, preferred_element_type=f32) + head_b
        lane = lax.broadcasted_iota(jnp.int32, (LB, OUT_LANES), 1)
        valid = (lane >= 1) & (lane < 1 + C)
        m = jnp.max(jnp.where(valid, y, -jnp.inf), axis=-1, keepdims=True)
        z = y - m
        denom = jnp.sum(jnp.exp(jnp.where(valid, z, -jnp.inf)),
                        axis=-1, keepdims=True)
        logsm = z - jnp.log(denom)
        out_ref[...] = jnp.where(lane == 0, jnp.maximum(y, 0.0),
                                 jnp.where(valid, logsm, 0.0))

    return kernel


# ---------------------------------------------------------------------------
# Wrapper: single grid-less pallas_call, everything VMEM-resident
# ---------------------------------------------------------------------------
def build_decoder(params):
    lstm_slab, lstm_off, mlp_slab, mlp_off, dims = pack_params(params)
    H, C = dims["H"], dims["C"]

    @jax.jit
    def forward(p_ts, p_cat, p_hn, p_hc, p_enc, a_enc, i_enc):
        L, B = p_ts.shape
        Sp, _, Ep = p_enc.shape
        Sa, _, Eo = a_enc.shape
        Si = i_enc.shape[0]

        # cheap (view-only) reshapes; everything stays sequence-major with
        # batch as the fastest-varying row index (row = t*B + b / s*B + b)
        args = (
            p_ts.reshape(L * B, 1).astype(jnp.float32),
            p_cat.reshape(L * B, 1).astype(jnp.int32),
            p_hn.reshape(2 * B, H).astype(jnp.float32),
            p_hc.reshape(2 * B, H).astype(jnp.float32),
            p_enc.reshape(Sp * B, Ep).astype(jnp.float32),
            a_enc.reshape(Sa * B, Eo).astype(jnp.float32),
            i_enc.reshape(Si * B, Eo).astype(jnp.float32),
            lstm_slab, mlp_slab,
        )

        kernel = _make_kernel(L=L, B=B, H=H, C=C,
                              lstm_off=lstm_off, mlp_off=mlp_off)
        vmem = pl.BlockSpec(memory_space=pltpu.MemorySpace.VMEM)
        out_main, state_out = pl.pallas_call(
            kernel,
            out_shape=(jax.ShapeDtypeStruct((L * B, 128), jnp.float32),
                       jax.ShapeDtypeStruct((4 * B, H), jnp.float32)),
            in_specs=[vmem] * len(args),
            out_specs=(vmem, vmem),
        )(*args)

        ts = out_main[:, 0:1].reshape(L, B, 1)
        cat = out_main[:, 1:1 + C].reshape(L, B, C)
        hn = state_out[:2 * B].reshape(2, B, H)
        cn = state_out[2 * B:].reshape(2, B, H)
        return ts, cat, hn, cn

    return forward


# ---------------------------------------------------------------------------
# Pure-JAX reference (same parameterization) for numerical cross-check
# ---------------------------------------------------------------------------
def reference_forward(params, p_ts, p_cat, p_hn, p_hc, p_enc, a_enc, i_enc):
    H = params["whh0"].shape[0]
    emb = params["embed"][p_cat]                                    # (L,B,E)
    x = jnp.concatenate([p_ts[..., None], emb], axis=2)             # (L,B,1+E)
    wih0 = jnp.concatenate([params["wih0_ts"], params["wih0_emb"]], axis=0)

    def cell(x_t, h, c, wih, whh, bias):
        g = x_t @ wih + h @ whh + bias
        i = jax.nn.sigmoid(g[:, :H])
        f = jax.nn.sigmoid(g[:, H:2 * H])
        gg = jnp.tanh(g[:, 2 * H:3 * H])
        o = jax.nn.sigmoid(g[:, 3 * H:])
        c = f * c + i * gg
        return o * jnp.tanh(c), c

    h0, c0, h1, c1 = p_hn[0], p_hc[0], p_hn[1], p_hc[1]
    outs = []
    for t in range(x.shape[0]):
        h0, c0 = cell(x[t], h0, c0, wih0, params["whh0"], params["b0"])
        h1, c1 = cell(h0, h1, c1, params["wih1"], params["whh1"], params["b1"])
        outs.append(h1)
    p_out = jnp.stack(outs, axis=0)                                  # (L,B,H)
    hn = jnp.stack([h0, h1], axis=0)
    cn = jnp.stack([c0, c1], axis=0)

    def attn(enc, dec, w, bias):
        energy = jnp.einsum("sbe,eh->sbh", enc, w) + bias            # (S,B,H)
        scores = jnp.einsum("lbh,sbh->bls", dec, energy)             # (B,L,S)
        wts = jax.nn.softmax(scores, axis=-1)
        return jnp.einsum("bls,sbe->ble", wts, enc)                  # (B,L,E)

    p_ctx = attn(p_enc, p_out, *params["p_attn"])
    a_ctx = attn(a_enc, p_out, *params["a_attn"])
    i_ctx = attn(i_enc, p_out, *params["i_attn"])

    p2o = jax.nn.relu(p_ctx @ params["p2o"][0] + params["p2o"][1])   # (B,L,Eo)
    combined = jnp.concatenate(
        [jnp.transpose(p2o, (1, 0, 2)),
         jnp.transpose(a_ctx, (1, 0, 2)),
         jnp.transpose(i_ctx, (1, 0, 2))], axis=0)                   # (3L,B,Eo)
    ctx = attn(combined, p_out, *params["attn"])                     # (B,L,Eo)
    ctx = jax.nn.relu(jnp.transpose(ctx, (1, 0, 2)) @ params["o2p"][0]
                      + params["o2p"][1])                            # (L,B,H)
    out_in = jnp.concatenate([ctx, p_out], axis=2)                   # (L,B,2H)
    hidden = jax.nn.relu(out_in @ params["out1"][0] + params["out1"][1])
    output = jax.nn.relu(hidden @ params["out2"][0] + params["out2"][1])
    y = output @ params["head"][0] + params["head"][1]               # (L,B,1+C)
    ts = jax.nn.relu(y[..., :1])
    cat = jax.nn.log_softmax(y[..., 1:], axis=-1)
    return ts, cat, hn, cn


# ---------------------------------------------------------------------------
# Deterministic parameter init (shapes follow the PyTorch __init__)
# ---------------------------------------------------------------------------
def init_params(key, num_categories, embed_dim, p_enc_hidden, o_enc_hidden,
                p_dec_hidden, p_dec_inner):
    keys = iter(jax.random.split(key, 48))

    def lin(din, dout, scale=0.1):
        # stored pre-transposed as (Din, Dout) so kernels do x @ W directly
        w = jax.random.normal(next(keys), (din, dout), jnp.float32) * scale
        b = jax.random.normal(next(keys), (1, dout), jnp.float32) * scale
        return (w, b)

    H = p_dec_hidden
    emb = jax.random.normal(next(keys), (num_categories, embed_dim),
                            jnp.float32) * 0.1
    params = {
        "embed": emb.at[0].set(0.0),                       # padding_idx = 0
        # LSTM layer 0 input weights, split into [time column | embedding rows]
        "wih0_ts": jax.random.normal(next(keys), (1, 4 * H), jnp.float32) * 0.1,
        "wih0_emb": jax.random.normal(next(keys), (embed_dim, 4 * H),
                                      jnp.float32) * 0.1,
        "whh0": jax.random.normal(next(keys), (H, 4 * H), jnp.float32) * 0.1,
        "b0": jax.random.normal(next(keys), (1, 4 * H), jnp.float32) * 0.1,
        "wih1": jax.random.normal(next(keys), (H, 4 * H), jnp.float32) * 0.1,
        "whh1": jax.random.normal(next(keys), (H, 4 * H), jnp.float32) * 0.1,
        "b1": jax.random.normal(next(keys), (1, 4 * H), jnp.float32) * 0.1,
        # GlobalAttn projections (enc_dim -> dec_hidden)
        "p_attn": lin(p_enc_hidden, H),
        "a_attn": lin(o_enc_hidden, H),
        "i_attn": lin(o_enc_hidden, H),
        "attn": lin(o_enc_hidden, H),
        # feed-forward pieces
        "p2o": lin(p_enc_hidden, o_enc_hidden),
        "o2p": lin(o_enc_hidden, H),
        "out1": lin(2 * H, p_dec_inner),
        "out2": lin(p_dec_inner, H),
        # fused output head: column 0 = time_gen, columns 1: = marker_gen
        "head": lin(H, 1 + num_categories),
    }
    return params


# ---------------------------------------------------------------------------
if __name__ == "__main__":
    num_categories = 10
    embed_dim = 8
    p_enc_hidden = 16
    o_enc_hidden = 12
    p_dec_hidden = 32
    p_dec_inner = 24

    L, B = 8, 2           # decoder sequence length, batch
    Sp, Sa, Si = 6, 5, 5  # encoder sequence lengths

    key = jax.random.PRNGKey(0)
    kp, k1, k2, k3, k4, k5, k6, k7 = jax.random.split(key, 8)

    params = init_params(kp, num_categories, embed_dim, p_enc_hidden,
                         o_enc_hidden, p_dec_hidden, p_dec_inner)

    p_ts = jax.random.normal(k1, (L, B), jnp.float32)
    p_cat = jax.random.randint(k2, (L, B), 0, num_categories, jnp.int32)
    p_hn = jax.random.normal(k3, (2, B, p_dec_hidden), jnp.float32) * 0.1
    p_hc = jax.random.normal(k4, (2, B, p_dec_hidden), jnp.float32) * 0.1
    p_encoder_outputs = jax.random.normal(k5, (Sp, B, p_enc_hidden), jnp.float32)
    a_encoder_outputs = jax.random.normal(k6, (Sa, B, o_enc_hidden), jnp.float32)
    i_encoder_outputs = jax.random.normal(k7, (Si, B, o_enc_hidden), jnp.float32)

    decoder_forward = build_decoder(params)
    ts, cat, hn, cn = decoder_forward(p_ts, p_cat, p_hn, p_hc,
                                      p_encoder_outputs, a_encoder_outputs,
                                      i_encoder_outputs)
    jax.block_until_ready((ts, cat, hn, cn))

    assert ts.shape == (L, B, 1)
    assert cat.shape == (L, B, num_categories)
    assert hn.shape == (2, B, p_dec_hidden)
    assert cn.shape == (2, B, p_dec_hidden)
    # log-softmax rows must sum to 1 in prob space
    assert jnp.allclose(jnp.exp(cat).sum(-1), 1.0, atol=1e-4)

    # cross-check the fused kernel against a plain-JAX reference
    # (tolerance covers the approx-reciprocal softmax inside the kernel)
    with jax.default_matmul_precision("highest"):
        ts_r, cat_r, hn_r, cn_r = reference_forward(
            params, p_ts, p_cat, p_hn, p_hc,
            p_encoder_outputs, a_encoder_outputs, i_encoder_outputs)
    for got, want in ((ts, ts_r), (cat, cat_r), (hn, hn_r), (cn, cn_r)):
        assert bool(jnp.allclose(got, want, rtol=3e-2, atol=3e-2)), (
            "max abs diff", float(jnp.max(jnp.abs(got - want))))

    print("KERNEL_OK")
</pallas_src>

<mosaic_0001>
module attributes {stable_mosaic.version = 11 : i64} {
  func.func @kernel(%arg0: memref<16x1xf32, #tpu.memory_space<vmem>>, %arg1: memref<16x1xi32, #tpu.memory_space<vmem>>, %arg2: memref<4x32xf32, #tpu.memory_space<vmem>>, %arg3: memref<4x32xf32, #tpu.memory_space<vmem>>, %arg4: memref<12x16xf32, #tpu.memory_space<vmem>>, %arg5: memref<10x12xf32, #tpu.memory_space<vmem>>, %arg6: memref<10x12xf32, #tpu.memory_space<vmem>>, %arg7: memref<176x128xf32, #tpu.memory_space<vmem>>, %arg8: memref<248x32xf32, #tpu.memory_space<vmem>>, %arg9: memref<16x128xf32, #tpu.memory_space<vmem>>, %arg10: memref<8x32xf32, #tpu.memory_space<vmem>>) attributes {dimension_semantics = [], scalar_prefetch = 0 : i64, scratch_operands = 0 : i64, tpu.core_type = #tpu.core_type<tc>} {
    %c0 = arith.constant 0 : index
    %c0_0 = arith.constant 0 : index
    %0 = vector.load %arg7[%c0, %c0_0] : memref<176x128xf32, #tpu.memory_space<vmem>>, vector<10x128xf32>
    %c16 = arith.constant 16 : index
    %c0_1 = arith.constant 0 : index
    %1 = vector.load %arg7[%c16, %c0_1] : memref<176x128xf32, #tpu.memory_space<vmem>>, vector<1x128xf32>
    %c24 = arith.constant 24 : index
    %c0_2 = arith.constant 0 : index
    %2 = vector.load %arg7[%c24, %c0_2] : memref<176x128xf32, #tpu.memory_space<vmem>>, vector<1x128xf32>
    %c32 = arith.constant 32 : index
    %c0_3 = arith.constant 0 : index
    %3 = vector.load %arg7[%c32, %c0_3] : memref<176x128xf32, #tpu.memory_space<vmem>>, vector<1x128xf32>
    %c40 = arith.constant 40 : index
    %c0_4 = arith.constant 0 : index
    %4 = vector.load %arg7[%c40, %c0_4] : memref<176x128xf32, #tpu.memory_space<vmem>>, vector<32x128xf32>
    %c72 = arith.constant 72 : index
    %c0_5 = arith.constant 0 : index
    %5 = vector.load %arg7[%c72, %c0_5] : memref<176x128xf32, #tpu.memory_space<vmem>>, vector<64x128xf32>
    %c136 = arith.constant 136 : index
    %c0_6 = arith.constant 0 : index
    %6 = vector.load %arg7[%c136, %c0_6] : memref<176x128xf32, #tpu.memory_space<vmem>>, vector<32x128xf32>
    %c168 = arith.constant 168 : index
    %c0_7 = arith.constant 0 : index
    %7 = vector.load %arg7[%c168, %c0_7] : memref<176x128xf32, #tpu.memory_space<vmem>>, vector<1x128xf32>
    %c0_8 = arith.constant 0 : index
    %c0_9 = arith.constant 0 : index
    %8 = vector.load %arg4[%c0_8, %c0_9] : memref<12x16xf32, #tpu.memory_space<vmem>>, vector<12x16xf32>
    %c0_10 = arith.constant 0 : index
    %c0_11 = arith.constant 0 : index
    %9 = vector.load %arg5[%c0_10, %c0_11] : memref<10x12xf32, #tpu.memory_space<vmem>>, vector<10x12xf32>
    %c0_12 = arith.constant 0 : index
    %c0_13 = arith.constant 0 : index
    %10 = vector.load %arg6[%c0_12, %c0_13] : memref<10x12xf32, #tpu.memory_space<vmem>>, vector<10x12xf32>
    %c0_14 = arith.constant 0 : index
    %c0_15 = arith.constant 0 : index
    %11 = vector.load %arg8[%c0_14, %c0_15] : memref<248x32xf32, #tpu.memory_space<vmem>>, vector<16x32xf32>
    %cst = arith.constant dense<0.000000e+00> : vector<12x32xf32>
    %12 = tpu.matmul %8, %11, %cst {dimension_numbers = #tpu.dot_dimension_numbers<[1], [0], [0], [1], [0, 0, 1, 1], [], []>} : vector<12x16xf32>, vector<16x32xf32>, vector<12x32xf32> -> vector<12x32xf32>
    %c184 = arith.constant 184 : index
    %c0_16 = arith.constant 0 : index
    %13 = vector.load %arg8[%c184, %c0_16] : memref<248x32xf32, #tpu.memory_space<vmem>>, vector<1x32xf32>
    %14 = vector.broadcast %13 : vector<1x32xf32> to vector<12x32xf32>
    %15 = arith.addf %12, %14 : vector<12x32xf32>
    %c16_17 = arith.constant 16 : index
    %c0_18 = arith.constant 0 : index
    %16 = vector.load %arg8[%c16_17, %c0_18] : memref<248x32xf32, #tpu.memory_space<vmem>>, vector<12x32xf32>
    %cst_19 = arith.constant dense<0.000000e+00> : vector<10x32xf32>
    %17 = tpu.matmul %9, %16, %cst_19 {dimension_numbers = #tpu.dot_dimension_numbers<[1], [0], [0], [1], [0, 0, 1, 1], [], []>} : vector<10x12xf32>, vector<12x32xf32>, vector<10x32xf32> -> vector<10x32xf32>
    %c192 = arith.constant 192 : index
    %c0_20 = arith.constant 0 : index
    %18 = vector.load %arg8[%c192, %c0_20] : memref<248x32xf32, #tpu.memory_space<vmem>>, vector<1x32xf32>
    %19 = vector.broadcast %18 : vector<1x32xf32> to vector<10x32xf32>
    %20 = arith.addf %17, %19 : vector<10x32xf32>
    %c32_21 = arith.constant 32 : index
    %c0_22 = arith.constant 0 : index
    %21 = vector.load %arg8[%c32_21, %c0_22] : memref<248x32xf32, #tpu.memory_space<vmem>>, vector<12x32xf32>
    %cst_23 = arith.constant dense<0.000000e+00> : vector<10x32xf32>
    %22 = tpu.matmul %10, %21, %cst_23 {dimension_numbers = #tpu.dot_dimension_numbers<[1], [0], [0], [1], [0, 0, 1, 1], [], []>} : vector<10x12xf32>, vector<12x32xf32>, vector<10x32xf32> -> vector<10x32xf32>
    %c200 = arith.constant 200 : index
    %c0_24 = arith.constant 0 : index
    %23 = vector.load %arg8[%c200, %c0_24] : memref<248x32xf32, #tpu.memory_space<vmem>>, vector<1x32xf32>
    %24 = vector.broadcast %23 : vector<1x32xf32> to vector<10x32xf32>
    %25 = arith.addf %22, %24 : vector<10x32xf32>
    %26 = tpu.iota {dimensions = array<i32: 1>} : vector<16x10xi32>
    %c0_25 = arith.constant 0 : index
    %c0_26 = arith.constant 0 : index
    %27 = vector.load %arg1[%c0_25, %c0_26] : memref<16x1xi32, #tpu.memory_space<vmem>>, vector<16x1xi32>
    %28 = vector.broadcast %27 : vector<16x1xi32> to vector<16x10xi32>
    %29 = arith.cmpi eq, %28, %26 : vector<16x10xi32>
    %30 = arith.extui %29 : vector<16x10xi1> to vector<16x10xi32>
    %31 = arith.sitofp %30 : vector<16x10xi32> to vector<16x10xf32>
    %c0_27 = arith.constant 0 : index
    %c0_28 = arith.constant 0 : index
    %32 = vector.load %arg0[%c0_27, %c0_28] : memref<16x1xf32, #tpu.memory_space<vmem>>, vector<16x1xf32>
    %33 = vector.broadcast %32 : vector<16x1xf32> to vector<16x128xf32>
    %34 = vector.broadcast %1 : vector<1x128xf32> to vector<16x128xf32>
    %35 = arith.mulf %33, %34 : vector<16x128xf32>
    %cst_29 = arith.constant dense<0.000000e+00> : vector<16x128xf32>
    %36 = tpu.matmul %31, %0, %cst_29 {dimension_numbers = #tpu.dot_dimension_numbers<[1], [0], [0], [1], [0, 0, 1, 1], [], []>} : vector<16x10xf32>, vector<10x128xf32>, vector<16x128xf32> -> vector<16x128xf32>
    %37 = arith.addf %35, %36 : vector<16x128xf32>
    %38 = vector.broadcast %2 : vector<1x128xf32> to vector<16x128xf32>
    %39 = arith.addf %37, %38 : vector<16x128xf32>
    %40 = tpu.iota {dimensions = array<i32: 1>} : vector<2x128xi32>
    %c64_i32 = arith.constant 64 : i32
    %41 = vector.broadcast %c64_i32 : i32 to vector<2x128xi32>
    %42 = arith.cmpi sge, %40, %41 : vector<2x128xi32>
    %c96_i32 = arith.constant 96 : i32
    %43 = vector.broadcast %c96_i32 : i32 to vector<2x128xi32>
    %44 = arith.cmpi slt, %40, %43 : vector<2x128xi32>
    %45 = arith.andi %42, %44 : vector<2x128xi1>
    %c0_30 = arith.constant 0 : index
    %c0_31 = arith.constant 0 : index
    %46 = vector.load %arg2[%c0_30, %c0_31] : memref<4x32xf32, #tpu.memory_space<vmem>>, vector<2x32xf32>
    %c2 = arith.constant 2 : index
    %c0_32 = arith.constant 0 : index
    %47 = vector.load %arg2[%c2, %c0_32] : memref<4x32xf32, #tpu.memory_space<vmem>>, vector<2x32xf32>
    %c0_33 = arith.constant 0 : index
    %c0_34 = arith.constant 0 : index
    %48 = vector.load %arg3[%c0_33, %c0_34] : memref<4x32xf32, #tpu.memory_space<vmem>>, vector<2x32xf32>
    %c2_35 = arith.constant 2 : index
    %c0_36 = arith.constant 0 : index
    %49 = vector.load %arg3[%c2_35, %c0_36] : memref<4x32xf32, #tpu.memory_space<vmem>>, vector<2x32xf32>
    %cst_37 = arith.constant dense<0.000000e+00> : vector<2x128xf32>
    %50 = tpu.matmul %46, %4, %cst_37 {dimension_numbers = #tpu.dot_dimension_numbers<[1], [0], [0], [1], [0, 0, 1, 1], [], []>} : vector<2x32xf32>, vector<32x128xf32>, vector<2x128xf32> -> vector<2x128xf32>
    %51 = vector.extract_strided_slice %39 {offsets = [0, 0], sizes = [2, 128], strides = [1, 1]} : vector<16x128xf32> to vector<2x128xf32>
    %52 = arith.addf %51, %50 : vector<2x128xf32>
    %53 = math.tanh %52 : vector<2x128xf32>
    %54 = arith.negf %52 : vector<2x128xf32>
    %55 = math.exp %54 : vector<2x128xf32>
    %cst_38 = arith.constant 1.000000e+00 : f32
    %56 = vector.broadcast %cst_38 : f32 to vector<2x128xf32>
    %57 = arith.addf %56, %55 : vector<2x128xf32>
    %58 = arith.divf %56, %57 : vector<2x128xf32>
    %59 = arith.select %45, %53, %58 : vector<2x128xi1>, vector<2x128xf32>
    %60 = vector.extract_strided_slice %59 {offsets = [0, 0], sizes = [2, 32], strides = [1, 1]} : vector<2x128xf32> to vector<2x32xf32>
    %61 = vector.extract_strided_slice %59 {offsets = [0, 32], sizes = [2, 32], strides = [1, 1]} : vector<2x128xf32> to vector<2x32xf32>
    %62 = vector.extract_strided_slice %59 {offsets = [0, 64], sizes = [2, 32], strides = [1, 1]} : vector<2x128xf32> to vector<2x32xf32>
    %63 = vector.extract_strided_slice %59 {offsets = [0, 96], sizes = [2, 32], strides = [1, 1]} : vector<2x128xf32> to vector<2x32xf32>
    %64 = arith.mulf %61, %48 : vector<2x32xf32>
    %65 = arith.mulf %60, %62 : vector<2x32xf32>
    %66 = arith.addf %64, %65 : vector<2x32xf32>
    %67 = math.tanh %66 : vector<2x32xf32>
    %68 = arith.mulf %63, %67 : vector<2x32xf32>
    %69 = tpu.concatenate %68, %47 in 1 : vector<2x32xf32>, vector<2x32xf32> -> vector<2x64xf32>
    %cst_39 = arith.constant dense<0.000000e+00> : vector<2x128xf32>
    %70 = tpu.matmul %69, %5, %cst_39 {dimension_numbers = #tpu.dot_dimension_numbers<[1], [0], [0], [1], [0, 0, 1, 1], [], []>} : vector<2x64xf32>, vector<64x128xf32>, vector<2x128xf32> -> vector<2x128xf32>
    %71 = vector.broadcast %3 : vector<1x128xf32> to vector<2x128xf32>
    %72 = arith.addf %70, %71 : vector<2x128xf32>
    %73 = math.tanh %72 : vector<2x128xf32>
    %74 = arith.negf %72 : vector<2x128xf32>
    %75 = math.exp %74 : vector<2x128xf32>
    %cst_40 = arith.constant 1.000000e+00 : f32
    %76 = vector.broadcast %cst_40 : f32 to vector<2x128xf32>
    %77 = arith.addf %76, %75 : vector<2x128xf32>
    %78 = arith.divf %76, %77 : vector<2x128xf32>
    %79 = arith.select %45, %73, %78 : vector<2x128xi1>, vector<2x128xf32>
    %80 = vector.extract_strided_slice %79 {offsets = [0, 0], sizes = [2, 32], strides = [1, 1]} : vector<2x128xf32> to vector<2x32xf32>
    %81 = vector.extract_strided_slice %79 {offsets = [0, 32], sizes = [2, 32], strides = [1, 1]} : vector<2x128xf32> to vector<2x32xf32>
    %82 = vector.extract_strided_slice %79 {offsets = [0, 64], sizes = [2, 32], strides = [1, 1]} : vector<2x128xf32> to vector<2x32xf32>
    %83 = vector.extract_strided_slice %79 {offsets = [0, 96], sizes = [2, 32], strides = [1, 1]} : vector<2x128xf32> to vector<2x32xf32>
    %84 = arith.mulf %81, %49 : vector<2x32xf32>
    %85 = arith.mulf %80, %82 : vector<2x32xf32>
    %86 = arith.addf %84, %85 : vector<2x32xf32>
    %87 = math.tanh %86 : vector<2x32xf32>
    %88 = arith.mulf %83, %87 : vector<2x32xf32>
    %cst_41 = arith.constant dense<0.000000e+00> : vector<2x128xf32>
    %89 = tpu.matmul %68, %4, %cst_41 {dimension_numbers = #tpu.dot_dimension_numbers<[1], [0], [0], [1], [0, 0, 1, 1], [], []>} : vector<2x32xf32>, vector<32x128xf32>, vector<2x128xf32> -> vector<2x128xf32>
    %90 = vector.extract_strided_slice %39 {offsets = [2, 0], sizes = [2, 128], strides = [1, 1]} : vector<16x128xf32> to vector<2x128xf32>
    %91 = arith.addf %90, %89 : vector<2x128xf32>
    %92 = math.tanh %91 : vector<2x128xf32>
    %93 = arith.negf %91 : vector<2x128xf32>
    %94 = math.exp %93 : vector<2x128xf32>
    %cst_42 = arith.constant 1.000000e+00 : f32
    %95 = vector.broadcast %cst_42 : f32 to vector<2x128xf32>
    %96 = arith.addf %95, %94 : vector<2x128xf32>
    %97 = arith.divf %95, %96 : vector<2x128xf32>
    %98 = arith.select %45, %92, %97 : vector<2x128xi1>, vector<2x128xf32>
    %99 = vector.extract_strided_slice %98 {offsets = [0, 0], sizes = [2, 32], strides = [1, 1]} : vector<2x128xf32> to vector<2x32xf32>
    %100 = vector.extract_strided_slice %98 {offsets = [0, 32], sizes = [2, 32], strides = [1, 1]} : vector<2x128xf32> to vector<2x32xf32>
    %101 = vector.extract_strided_slice %98 {offsets = [0, 64], sizes = [2, 32], strides = [1, 1]} : vector<2x128xf32> to vector<2x32xf32>
    %102 = vector.extract_strided_slice %98 {offsets = [0, 96], sizes = [2, 32], strides = [1, 1]} : vector<2x128xf32> to vector<2x32xf32>
    %103 = arith.mulf %100, %66 : vector<2x32xf32>
    %104 = arith.mulf %99, %101 : vector<2x32xf32>
    %105 = arith.addf %103, %104 : vector<2x32xf32>
    %106 = math.tanh %105 : vector<2x32xf32>
    %107 = arith.mulf %102, %106 : vector<2x32xf32>
    %108 = tpu.concatenate %107, %88 in 1 : vector<2x32xf32>, vector<2x32xf32> -> vector<2x64xf32>
    %cst_43 = arith.constant dense<0.000000e+00> : vector<2x128xf32>
    %109 = tpu.matmul %108, %5, %cst_43 {dimension_numbers = #tpu.dot_dimension_numbers<[1], [0], [0], [1], [0, 0, 1, 1], [], []>} : vector<2x64xf32>, vector<64x128xf32>, vector<2x128xf32> -> vector<2x128xf32>
    %110 = vector.broadcast %3 : vector<1x128xf32> to vector<2x128xf32>
    %111 = arith.addf %109, %110 : vector<2x128xf32>
    %112 = math.tanh %111 : vector<2x128xf32>
    %113 = arith.negf %111 : vector<2x128xf32>
    %114 = math.exp %113 : vector<2x128xf32>
    %cst_44 = arith.constant 1.000000e+00 : f32
    %115 = vector.broadcast %cst_44 : f32 to vector<2x128xf32>
    %116 = arith.addf %115, %114 : vector<2x128xf32>
    %117 = arith.divf %115, %116 : vector<2x128xf32>
    %118 = arith.select %45, %112, %117 : vector<2x128xi1>, vector<2x128xf32>
    %119 = vector.extract_strided_slice %118 {offsets = [0, 0], sizes = [2, 32], strides = [1, 1]} : vector<2x128xf32> to vector<2x32xf32>
    %120 = vector.extract_strided_slice %118 {offsets = [0, 32], sizes = [2, 32], strides = [1, 1]} : vector<2x128xf32> to vector<2x32xf32>
    %121 = vector.extract_strided_slice %118 {offsets = [0, 64], sizes = [2, 32], strides = [1, 1]} : vector<2x128xf32> to vector<2x32xf32>
    %122 = vector.extract_strided_slice %118 {offsets = [0, 96], sizes = [2, 32], strides = [1, 1]} : vector<2x128xf32> to vector<2x32xf32>
    %123 = arith.mulf %120, %86 : vector<2x32xf32>
    %124 = arith.mulf %119, %121 : vector<2x32xf32>
    %125 = arith.addf %123, %124 : vector<2x32xf32>
    %126 = math.tanh %125 : vector<2x32xf32>
    %127 = arith.mulf %122, %126 : vector<2x32xf32>
    %cst_45 = arith.constant dense<0.000000e+00> : vector<2x128xf32>
    %128 = tpu.matmul %107, %4, %cst_45 {dimension_numbers = #tpu.dot_dimension_numbers<[1], [0], [0], [1], [0, 0, 1, 1], [], []>} : vector<2x32xf32>, vector<32x128xf32>, vector<2x128xf32> -> vector<2x128xf32>
    %129 = vector.extract_strided_slice %39 {offsets = [4, 0], sizes = [2, 128], strides = [1, 1]} : vector<16x128xf32> to vector<2x128xf32>
    %130 = arith.addf %129, %128 : vector<2x128xf32>
    %131 = math.tanh %130 : vector<2x128xf32>
    %132 = arith.negf %130 : vector<2x128xf32>
    %133 = math.exp %132 : vector<2x128xf32>
    %cst_46 = arith.constant 1.000000e+00 : f32
    %134 = vector.broadcast %cst_46 : f32 to vector<2x128xf32>
    %135 = arith.addf %134, %133 : vector<2x128xf32>
    %136 = arith.divf %134, %135 : vector<2x128xf32>
    %137 = arith.select %45, %131, %136 : vector<2x128xi1>, vector<2x128xf32>
    %138 = vector.extract_strided_slice %137 {offsets = [0, 0], sizes = [2, 32], strides = [1, 1]} : vector<2x128xf32> to vector<2x32xf32>
    %139 = vector.extract_strided_slice %137 {offsets = [0, 32], sizes = [2, 32], strides = [1, 1]} : vector<2x128xf32> to vector<2x32xf32>
    %140 = vector.extract_strided_slice %137 {offsets = [0, 64], sizes = [2, 32], strides = [1, 1]} : vector<2x128xf32> to vector<2x32xf32>
    %141 = vector.extract_strided_slice %137 {offsets = [0, 96], sizes = [2, 32], strides = [1, 1]} : vector<2x128xf32> to vector<2x32xf32>
    %142 = arith.mulf %139, %105 : vector<2x32xf32>
    %143 = arith.mulf %138, %140 : vector<2x32xf32>
    %144 = arith.addf %142, %143 : vector<2x32xf32>
    %145 = math.tanh %144 : vector<2x32xf32>
    %146 = arith.mulf %141, %145 : vector<2x32xf32>
    %147 = tpu.concatenate %146, %127 in 1 : vector<2x32xf32>, vector<2x32xf32> -> vector<2x64xf32>
    %cst_47 = arith.constant dense<0.000000e+00> : vector<2x128xf32>
    %148 = tpu.matmul %147, %5, %cst_47 {dimension_numbers = #tpu.dot_dimension_numbers<[1], [0], [0], [1], [0, 0, 1, 1], [], []>} : vector<2x64xf32>, vector<64x128xf32>, vector<2x128xf32> -> vector<2x128xf32>
    %149 = vector.broadcast %3 : vector<1x128xf32> to vector<2x128xf32>
    %150 = arith.addf %148, %149 : vector<2x128xf32>
    %151 = math.tanh %150 : vector<2x128xf32>
    %152 = arith.negf %150 : vector<2x128xf32>
    %153 = math.exp %152 : vector<2x128xf32>
    %cst_48 = arith.constant 1.000000e+00 : f32
    %154 = vector.broadcast %cst_48 : f32 to vector<2x128xf32>
    %155 = arith.addf %154, %153 : vector<2x128xf32>
    %156 = arith.divf %154, %155 : vector<2x128xf32>
    %157 = arith.select %45, %151, %156 : vector<2x128xi1>, vector<2x128xf32>
    %158 = vector.extract_strided_slice %157 {offsets = [0, 0], sizes = [2, 32], strides = [1, 1]} : vector<2x128xf32> to vector<2x32xf32>
    %159 = vector.extract_strided_slice %157 {offsets = [0, 32], sizes = [2, 32], strides = [1, 1]} : vector<2x128xf32> to vector<2x32xf32>
    %160 = vector.extract_strided_slice %157 {offsets = [0, 64], sizes = [2, 32], strides = [1, 1]} : vector<2x128xf32> to vector<2x32xf32>
    %161 = vector.extract_strided_slice %157 {offsets = [0, 96], sizes = [2, 32], strides = [1, 1]} : vector<2x128xf32> to vector<2x32xf32>
    %162 = arith.mulf %159, %125 : vector<2x32xf32>
    %163 = arith.mulf %158, %160 : vector<2x32xf32>
    %164 = arith.addf %162, %163 : vector<2x32xf32>
    %165 = math.tanh %164 : vector<2x32xf32>
    %166 = arith.mulf %161, %165 : vector<2x32xf32>
    %cst_49 = arith.constant dense<0.000000e+00> : vector<2x128xf32>
    %167 = tpu.matmul %146, %4, %cst_49 {dimension_numbers = #tpu.dot_dimension_numbers<[1], [0], [0], [1], [0, 0, 1, 1], [], []>} : vector<2x32xf32>, vector<32x128xf32>, vector<2x128xf32> -> vector<2x128xf32>
    %168 = vector.extract_strided_slice %39 {offsets = [6, 0], sizes = [2, 128], strides = [1, 1]} : vector<16x128xf32> to vector<2x128xf32>
    %169 = arith.addf %168, %167 : vector<2x128xf32>
    %170 = math.tanh %169 : vector<2x128xf32>
    %171 = arith.negf %169 : vector<2x128xf32>
    %172 = math.exp %171 : vector<2x128xf32>
    %cst_50 = arith.constant 1.000000e+00 : f32
    %173 = vector.broadcast %cst_50 : f32 to vector<2x128xf32>
    %174 = arith.addf %173, %172 : vector<2x128xf32>
    %175 = arith.divf %173, %174 : vector<2x128xf32>
    %176 = arith.select %45, %170, %175 : vector<2x128xi1>, vector<2x128xf32>
    %177 = vector.extract_strided_slice %176 {offsets = [0, 0], sizes = [2, 32], strides = [1, 1]} : vector<2x128xf32> to vector<2x32xf32>
    %178 = vector.extract_strided_slice %176 {offsets = [0, 32], sizes = [2, 32], strides = [1, 1]} : vector<2x128xf32> to vector<2x32xf32>
    %179 = vector.extract_strided_slice %176 {offsets = [0, 64], sizes = [2, 32], strides = [1, 1]} : vector<2x128xf32> to vector<2x32xf32>
    %180 = vector.extract_strided_slice %176 {offsets = [0, 96], sizes = [2, 32], strides = [1, 1]} : vector<2x128xf32> to vector<2x32xf32>
    %181 = arith.mulf %178, %144 : vector<2x32xf32>
    %182 = arith.mulf %177, %179 : vector<2x32xf32>
    %183 = arith.addf %181, %182 : vector<2x32xf32>
    %184 = math.tanh %183 : vector<2x32xf32>
    %185 = arith.mulf %180, %184 : vector<2x32xf32>
    %186 = tpu.concatenate %185, %166 in 1 : vector<2x32xf32>, vector<2x32xf32> -> vector<2x64xf32>
    %cst_51 = arith.constant dense<0.000000e+00> : vector<2x128xf32>
    %187 = tpu.matmul %186, %5, %cst_51 {dimension_numbers = #tpu.dot_dimension_numbers<[1], [0], [0], [1], [0, 0, 1, 1], [], []>} : vector<2x64xf32>, vector<64x128xf32>, vector<2x128xf32> -> vector<2x128xf32>
    %188 = vector.broadcast %3 : vector<1x128xf32> to vector<2x128xf32>
    %189 = arith.addf %187, %188 : vector<2x128xf32>
    %190 = math.tanh %189 : vector<2x128xf32>
    %191 = arith.negf %189 : vector<2x128xf32>
    %192 = math.exp %191 : vector<2x128xf32>
    %cst_52 = arith.constant 1.000000e+00 : f32
    %193 = vector.broadcast %cst_52 : f32 to vector<2x128xf32>
    %194 = arith.addf %193, %192 : vector<2x128xf32>
    %195 = arith.divf %193, %194 : vector<2x128xf32>
    %196 = arith.select %45, %190, %195 : vector<2x128xi1>, vector<2x128xf32>
    %197 = vector.extract_strided_slice %196 {offsets = [0, 0], sizes = [2, 32], strides = [1, 1]} : vector<2x128xf32> to vector<2x32xf32>
    %198 = vector.extract_strided_slice %196 {offsets = [0, 32], sizes = [2, 32], strides = [1, 1]} : vector<2x128xf32> to vector<2x32xf32>
    %199 = vector.extract_strided_slice %196 {offsets = [0, 64], sizes = [2, 32], strides = [1, 1]} : vector<2x128xf32> to vector<2x32xf32>
    %200 = vector.extract_strided_slice %196 {offsets = [0, 96], sizes = [2, 32], strides = [1, 1]} : vector<2x128xf32> to vector<2x32xf32>
    %201 = arith.mulf %198, %164 : vector<2x32xf32>
    %202 = arith.mulf %197, %199 : vector<2x32xf32>
    %203 = arith.addf %201, %202 : vector<2x32xf32>
    %204 = math.tanh %203 : vector<2x32xf32>
    %205 = arith.mulf %200, %204 : vector<2x32xf32>
    %cst_53 = arith.constant dense<0.000000e+00> : vector<2x128xf32>
    %206 = tpu.matmul %185, %4, %cst_53 {dimension_numbers = #tpu.dot_dimension_numbers<[1], [0], [0], [1], [0, 0, 1, 1], [], []>} : vector<2x32xf32>, vector<32x128xf32>, vector<2x128xf32> -> vector<2x128xf32>
    %207 = vector.extract_strided_slice %39 {offsets = [8, 0], sizes = [2, 128], strides = [1, 1]} : vector<16x128xf32> to vector<2x128xf32>
    %208 = arith.addf %207, %206 : vector<2x128xf32>
    %209 = math.tanh %208 : vector<2x128xf32>
    %210 = arith.negf %208 : vector<2x128xf32>
    %211 = math.exp %210 : vector<2x128xf32>
    %cst_54 = arith.constant 1.000000e+00 : f32
    %212 = vector.broadcast %cst_54 : f32 to vector<2x128xf32>
    %213 = arith.addf %212, %211 : vector<2x128xf32>
    %214 = arith.divf %212, %213 : vector<2x128xf32>
    %215 = arith.select %45, %209, %214 : vector<2x128xi1>, vector<2x128xf32>
    %216 = vector.extract_strided_slice %215 {offsets = [0, 0], sizes = [2, 32], strides = [1, 1]} : vector<2x128xf32> to vector<2x32xf32>
    %217 = vector.extract_strided_slice %215 {offsets = [0, 32], sizes = [2, 32], strides = [1, 1]} : vector<2x128xf32> to vector<2x32xf32>
    %218 = vector.extract_strided_slice %215 {offsets = [0, 64], sizes = [2, 32], strides = [1, 1]} : vector<2x128xf32> to vector<2x32xf32>
    %219 = vector.extract_strided_slice %215 {offsets = [0, 96], sizes = [2, 32], strides = [1, 1]} : vector<2x128xf32> to vector<2x32xf32>
    %220 = arith.mulf %217, %183 : vector<2x32xf32>
    %221 = arith.mulf %216, %218 : vector<2x32xf32>
    %222 = arith.addf %220, %221 : vector<2x32xf32>
    %223 = math.tanh %222 : vector<2x32xf32>
    %224 = arith.mulf %219, %223 : vector<2x32xf32>
    %225 = tpu.concatenate %224, %205 in 1 : vector<2x32xf32>, vector<2x32xf32> -> vector<2x64xf32>
    %cst_55 = arith.constant dense<0.000000e+00> : vector<2x128xf32>
    %226 = tpu.matmul %225, %5, %cst_55 {dimension_numbers = #tpu.dot_dimension_numbers<[1], [0], [0], [1], [0, 0, 1, 1], [], []>} : vector<2x64xf32>, vector<64x128xf32>, vector<2x128xf32> -> vector<2x128xf32>
    %227 = vector.broadcast %3 : vector<1x128xf32> to vector<2x128xf32>
    %228 = arith.addf %226, %227 : vector<2x128xf32>
    %229 = math.tanh %228 : vector<2x128xf32>
    %230 = arith.negf %228 : vector<2x128xf32>
    %231 = math.exp %230 : vector<2x128xf32>
    %cst_56 = arith.constant 1.000000e+00 : f32
    %232 = vector.broadcast %cst_56 : f32 to vector<2x128xf32>
    %233 = arith.addf %232, %231 : vector<2x128xf32>
    %234 = arith.divf %232, %233 : vector<2x128xf32>
    %235 = arith.select %45, %229, %234 : vector<2x128xi1>, vector<2x128xf32>
    %236 = vector.extract_strided_slice %235 {offsets = [0, 0], sizes = [2, 32], strides = [1, 1]} : vector<2x128xf32> to vector<2x32xf32>
    %237 = vector.extract_strided_slice %235 {offsets = [0, 32], sizes = [2, 32], strides = [1, 1]} : vector<2x128xf32> to vector<2x32xf32>
    %238 = vector.extract_strided_slice %235 {offsets = [0, 64], sizes = [2, 32], strides = [1, 1]} : vector<2x128xf32> to vector<2x32xf32>
    %239 = vector.extract_strided_slice %235 {offsets = [0, 96], sizes = [2, 32], strides = [1, 1]} : vector<2x128xf32> to vector<2x32xf32>
    %240 = arith.mulf %237, %203 : vector<2x32xf32>
    %241 = arith.mulf %236, %238 : vector<2x32xf32>
    %242 = arith.addf %240, %241 : vector<2x32xf32>
    %243 = math.tanh %242 : vector<2x32xf32>
    %244 = arith.mulf %239, %243 : vector<2x32xf32>
    %cst_57 = arith.constant dense<0.000000e+00> : vector<2x128xf32>
    %245 = tpu.matmul %224, %4, %cst_57 {dimension_numbers = #tpu.dot_dimension_numbers<[1], [0], [0], [1], [0, 0, 1, 1], [], []>} : vector<2x32xf32>, vector<32x128xf32>, vector<2x128xf32> -> vector<2x128xf32>
    %246 = vector.extract_strided_slice %39 {offsets = [10, 0], sizes = [2, 128], strides = [1, 1]} : vector<16x128xf32> to vector<2x128xf32>
    %247 = arith.addf %246, %245 : vector<2x128xf32>
    %248 = math.tanh %247 : vector<2x128xf32>
    %249 = arith.negf %247 : vector<2x128xf32>
    %250 = math.exp %249 : vector<2x128xf32>
    %cst_58 = arith.constant 1.000000e+00 : f32
    %251 = vector.broadcast %cst_58 : f32 to vector<2x128xf32>
    %252 = arith.addf %251, %250 : vector<2x128xf32>
    %253 = arith.divf %251, %252 : vector<2x128xf32>
    %254 = arith.select %45, %248, %253 : vector<2x128xi1>, vector<2x128xf32>
    %255 = vector.extract_strided_slice %254 {offsets = [0, 0], sizes = [2, 32], strides = [1, 1]} : vector<2x128xf32> to vector<2x32xf32>
    %256 = vector.extract_strided_slice %254 {offsets = [0, 32], sizes = [2, 32], strides = [1, 1]} : vector<2x128xf32> to vector<2x32xf32>
    %257 = vector.extract_strided_slice %254 {offsets = [0, 64], sizes = [2, 32], strides = [1, 1]} : vector<2x128xf32> to vector<2x32xf32>
    %258 = vector.extract_strided_slice %254 {offsets = [0, 96], sizes = [2, 32], strides = [1, 1]} : vector<2x128xf32> to vector<2x32xf32>
    %259 = arith.mulf %256, %222 : vector<2x32xf32>
    %260 = arith.mulf %255, %257 : vector<2x32xf32>
    %261 = arith.addf %259, %260 : vector<2x32xf32>
    %262 = math.tanh %261 : vector<2x32xf32>
    %263 = arith.mulf %258, %262 : vector<2x32xf32>
    %264 = tpu.concatenate %263, %244 in 1 : vector<2x32xf32>, vector<2x32xf32> -> vector<2x64xf32>
    %cst_59 = arith.constant dense<0.000000e+00> : vector<2x128xf32>
    %265 = tpu.matmul %264, %5, %cst_59 {dimension_numbers = #tpu.dot_dimension_numbers<[1], [0], [0], [1], [0, 0, 1, 1], [], []>} : vector<2x64xf32>, vector<64x128xf32>, vector<2x128xf32> -> vector<2x128xf32>
    %266 = vector.broadcast %3 : vector<1x128xf32> to vector<2x128xf32>
    %267 = arith.addf %265, %266 : vector<2x128xf32>
    %268 = math.tanh %267 : vector<2x128xf32>
    %269 = arith.negf %267 : vector<2x128xf32>
    %270 = math.exp %269 : vector<2x128xf32>
    %cst_60 = arith.constant 1.000000e+00 : f32
    %271 = vector.broadcast %cst_60 : f32 to vector<2x128xf32>
    %272 = arith.addf %271, %270 : vector<2x128xf32>
    %273 = arith.divf %271, %272 : vector<2x128xf32>
    %274 = arith.select %45, %268, %273 : vector<2x128xi1>, vector<2x128xf32>
    %275 = vector.extract_strided_slice %274 {offsets = [0, 0], sizes = [2, 32], strides = [1, 1]} : vector<2x128xf32> to vector<2x32xf32>
    %276 = vector.extract_strided_slice %274 {offsets = [0, 32], sizes = [2, 32], strides = [1, 1]} : vector<2x128xf32> to vector<2x32xf32>
    %277 = vector.extract_strided_slice %274 {offsets = [0, 64], sizes = [2, 32], strides = [1, 1]} : vector<2x128xf32> to vector<2x32xf32>
    %278 = vector.extract_strided_slice %274 {offsets = [0, 96], sizes = [2, 32], strides = [1, 1]} : vector<2x128xf32> to vector<2x32xf32>
    %279 = arith.mulf %276, %242 : vector<2x32xf32>
    %280 = arith.mulf %275, %277 : vector<2x32xf32>
    %281 = arith.addf %279, %280 : vector<2x32xf32>
    %282 = math.tanh %281 : vector<2x32xf32>
    %283 = arith.mulf %278, %282 : vector<2x32xf32>
    %cst_61 = arith.constant dense<0.000000e+00> : vector<2x128xf32>
    %284 = tpu.matmul %263, %4, %cst_61 {dimension_numbers = #tpu.dot_dimension_numbers<[1], [0], [0], [1], [0, 0, 1, 1], [], []>} : vector<2x32xf32>, vector<32x128xf32>, vector<2x128xf32> -> vector<2x128xf32>
    %285 = vector.extract_strided_slice %39 {offsets = [12, 0], sizes = [2, 128], strides = [1, 1]} : vector<16x128xf32> to vector<2x128xf32>
    %286 = arith.addf %285, %284 : vector<2x128xf32>
    %287 = math.tanh %286 : vector<2x128xf32>
    %288 = arith.negf %286 : vector<2x128xf32>
    %289 = math.exp %288 : vector<2x128xf32>
    %cst_62 = arith.constant 1.000000e+00 : f32
    %290 = vector.broadcast %cst_62 : f32 to vector<2x128xf32>
    %291 = arith.addf %290, %289 : vector<2x128xf32>
    %292 = arith.divf %290, %291 : vector<2x128xf32>
    %293 = arith.select %45, %287, %292 : vector<2x128xi1>, vector<2x128xf32>
    %294 = vector.extract_strided_slice %293 {offsets = [0, 0], sizes = [2, 32], strides = [1, 1]} : vector<2x128xf32> to vector<2x32xf32>
    %295 = vector.extract_strided_slice %293 {offsets = [0, 32], sizes = [2, 32], strides = [1, 1]} : vector<2x128xf32> to vector<2x32xf32>
    %296 = vector.extract_strided_slice %293 {offsets = [0, 64], sizes = [2, 32], strides = [1, 1]} : vector<2x128xf32> to vector<2x32xf32>
    %297 = vector.extract_strided_slice %293 {offsets = [0, 96], sizes = [2, 32], strides = [1, 1]} : vector<2x128xf32> to vector<2x32xf32>
    %298 = arith.mulf %295, %261 : vector<2x32xf32>
    %299 = arith.mulf %294, %296 : vector<2x32xf32>
    %300 = arith.addf %298, %299 : vector<2x32xf32>
    %301 = math.tanh %300 : vector<2x32xf32>
    %302 = arith.mulf %297, %301 : vector<2x32xf32>
    %303 = tpu.concatenate %302, %283 in 1 : vector<2x32xf32>, vector<2x32xf32> -> vector<2x64xf32>
    %cst_63 = arith.constant dense<0.000000e+00> : vector<2x128xf32>
    %304 = tpu.matmul %303, %5, %cst_63 {dimension_numbers = #tpu.dot_dimension_numbers<[1], [0], [0], [1], [0, 0, 1, 1], [], []>} : vector<2x64xf32>, vector<64x128xf32>, vector<2x128xf32> -> vector<2x128xf32>
    %305 = vector.broadcast %3 : vector<1x128xf32> to vector<2x128xf32>
    %306 = arith.addf %304, %305 : vector<2x128xf32>
    %307 = math.tanh %306 : vector<2x128xf32>
    %308 = arith.negf %306 : vector<2x128xf32>
    %309 = math.exp %308 : vector<2x128xf32>
    %cst_64 = arith.constant 1.000000e+00 : f32
    %310 = vector.broadcast %cst_64 : f32 to vector<2x128xf32>
    %311 = arith.addf %310, %309 : vector<2x128xf32>
    %312 = arith.divf %310, %311 : vector<2x128xf32>
    %313 = arith.select %45, %307, %312 : vector<2x128xi1>, vector<2x128xf32>
    %314 = vector.extract_strided_slice %313 {offsets = [0, 0], sizes = [2, 32], strides = [1, 1]} : vector<2x128xf32> to vector<2x32xf32>
    %315 = vector.extract_strided_slice %313 {offsets = [0, 32], sizes = [2, 32], strides = [1, 1]} : vector<2x128xf32> to vector<2x32xf32>
    %316 = vector.extract_strided_slice %313 {offsets = [0, 64], sizes = [2, 32], strides = [1, 1]} : vector<2x128xf32> to vector<2x32xf32>
    %317 = vector.extract_strided_slice %313 {offsets = [0, 96], sizes = [2, 32], strides = [1, 1]} : vector<2x128xf32> to vector<2x32xf32>
    %318 = arith.mulf %315, %281 : vector<2x32xf32>
    %319 = arith.mulf %314, %316 : vector<2x32xf32>
    %320 = arith.addf %318, %319 : vector<2x32xf32>
    %321 = math.tanh %320 : vector<2x32xf32>
    %322 = arith.mulf %317, %321 : vector<2x32xf32>
    %cst_65 = arith.constant dense<0.000000e+00> : vector<2x128xf32>
    %323 = tpu.matmul %302, %4, %cst_65 {dimension_numbers = #tpu.dot_dimension_numbers<[1], [0], [0], [1], [0, 0, 1, 1], [], []>} : vector<2x32xf32>, vector<32x128xf32>, vector<2x128xf32> -> vector<2x128xf32>
    %324 = vector.extract_strided_slice %39 {offsets = [14, 0], sizes = [2, 128], strides = [1, 1]} : vector<16x128xf32> to vector<2x128xf32>
    %325 = arith.addf %324, %323 : vector<2x128xf32>
    %326 = math.tanh %325 : vector<2x128xf32>
    %327 = arith.negf %325 : vector<2x128xf32>
    %328 = math.exp %327 : vector<2x128xf32>
    %cst_66 = arith.constant 1.000000e+00 : f32
    %329 = vector.broadcast %cst_66 : f32 to vector<2x128xf32>
    %330 = arith.addf %329, %328 : vector<2x128xf32>
    %331 = arith.divf %329, %330 : vector<2x128xf32>
    %332 = arith.select %45, %326, %331 : vector<2x128xi1>, vector<2x128xf32>
    %333 = vector.extract_strided_slice %332 {offsets = [0, 0], sizes = [2, 32], strides = [1, 1]} : vector<2x128xf32> to vector<2x32xf32>
    %334 = vector.extract_strided_slice %332 {offsets = [0, 32], sizes = [2, 32], strides = [1, 1]} : vector<2x128xf32> to vector<2x32xf32>
    %335 = vector.extract_strided_slice %332 {offsets = [0, 64], sizes = [2, 32], strides = [1, 1]} : vector<2x128xf32> to vector<2x32xf32>
    %336 = vector.extract_strided_slice %332 {offsets = [0, 96], sizes = [2, 32], strides = [1, 1]} : vector<2x128xf32> to vector<2x32xf32>
    %337 = arith.mulf %334, %300 : vector<2x32xf32>
    %338 = arith.mulf %333, %335 : vector<2x32xf32>
    %339 = arith.addf %337, %338 : vector<2x32xf32>
    %340 = math.tanh %339 : vector<2x32xf32>
    %341 = arith.mulf %336, %340 : vector<2x32xf32>
    %342 = tpu.concatenate %341, %322 in 1 : vector<2x32xf32>, vector<2x32xf32> -> vector<2x64xf32>
    %cst_67 = arith.constant dense<0.000000e+00> : vector<2x128xf32>
    %343 = tpu.matmul %342, %5, %cst_67 {dimension_numbers = #tpu.dot_dimension_numbers<[1], [0], [0], [1], [0, 0, 1, 1], [], []>} : vector<2x64xf32>, vector<64x128xf32>, vector<2x128xf32> -> vector<2x128xf32>
    %344 = vector.broadcast %3 : vector<1x128xf32> to vector<2x128xf32>
    %345 = arith.addf %343, %344 : vector<2x128xf32>
    %346 = math.tanh %345 : vector<2x128xf32>
    %347 = arith.negf %345 : vector<2x128xf32>
    %348 = math.exp %347 : vector<2x128xf32>
    %cst_68 = arith.constant 1.000000e+00 : f32
    %349 = vector.broadcast %cst_68 : f32 to vector<2x128xf32>
    %350 = arith.addf %349, %348 : vector<2x128xf32>
    %351 = arith.divf %349, %350 : vector<2x128xf32>
    %352 = arith.select %45, %346, %351 : vector<2x128xi1>, vector<2x128xf32>
    %353 = vector.extract_strided_slice %352 {offsets = [0, 0], sizes = [2, 32], strides = [1, 1]} : vector<2x128xf32> to vector<2x32xf32>
    %354 = vector.extract_strided_slice %352 {offsets = [0, 32], sizes = [2, 32], strides = [1, 1]} : vector<2x128xf32> to vector<2x32xf32>
    %355 = vector.extract_strided_slice %352 {offsets = [0, 64], sizes = [2, 32], strides = [1, 1]} : vector<2x128xf32> to vector<2x32xf32>
    %356 = vector.extract_strided_slice %352 {offsets = [0, 96], sizes = [2, 32], strides = [1, 1]} : vector<2x128xf32> to vector<2x32xf32>
    %357 = arith.mulf %354, %320 : vector<2x32xf32>
    %358 = arith.mulf %353, %355 : vector<2x32xf32>
    %359 = arith.addf %357, %358 : vector<2x32xf32>
    %360 = math.tanh %359 : vector<2x32xf32>
    %361 = arith.mulf %356, %360 : vector<2x32xf32>
    %362 = tpu.concatenate %341, %361, %339, %359 in 0 : vector<2x32xf32>, vector<2x32xf32>, vector<2x32xf32>, vector<2x32xf32> -> vector<8x32xf32>
    %c0_69 = arith.constant 0 : index
    %c0_70 = arith.constant 0 : index
    %363 = vector.load %arg10[%c0_69, %c0_70] : memref<8x32xf32, #tpu.memory_space<vmem>>, vector<8x32xf32>
    tpu.vector_store %arg10[%c0_69, %c0_70], %362 {strides = array<i32>} : memref<8x32xf32, #tpu.memory_space<vmem>>, vector<8x32xf32>,
    %364 = tpu.concatenate %88, %127, %166, %205, %244, %283, %322, %361 in 0 : vector<2x32xf32>, vector<2x32xf32>, vector<2x32xf32>, vector<2x32xf32>, vector<2x32xf32>, vector<2x32xf32>, vector<2x32xf32>, vector<2x32xf32> -> vector<16x32xf32>
    %cst_71 = arith.constant dense<0.000000e+00> : vector<16x12xf32>
    %365 = tpu.matmul %364, %15, %cst_71 {dimension_numbers = #tpu.dot_dimension_numbers<[1], [1], [0], [0], [0, 0, 1, 0], [], []>} : vector<16x32xf32>, vector<12x32xf32>, vector<16x12xf32> -> vector<16x12xf32>
    %366 = tpu.iota {dimensions = array<i32: 0>} : vector<16x12xi32>
    %c2_i32 = arith.constant 2 : i32
    %c0_i32 = arith.constant 0 : i32
    %367 = arith.cmpi eq, %c2_i32, %c0_i32 : i32
    %c1_i32 = arith.constant 1 : i32
    %368 = arith.select %367, %c1_i32, %c2_i32 : i32
    %369 = vector.broadcast %368 : i32 to vector<16x12xi32>
    %370 = arith.remsi %366, %369 : vector<16x12xi32>
    %c0_i32_72 = arith.constant 0 : i32
    %371 = vector.broadcast %c0_i32_72 : i32 to vector<16x12xi32>
    %372 = arith.cmpi ne, %370, %371 : vector<16x12xi32>
    %c0_i32_73 = arith.constant 0 : i32
    %373 = vector.broadcast %c0_i32_73 : i32 to vector<16x12xi32>
    %374 = arith.cmpi slt, %370, %373 : vector<16x12xi32>
    %c0_i32_74 = arith.constant 0 : i32
    %375 = arith.cmpi slt, %368, %c0_i32_74 : i32
    %376 = vector.broadcast %375 : i1 to vector<16x12xi1>
    %377 = vector.broadcast %376 : vector<16x12xi1> to vector<16x12xi1>
    %378 = arith.xori %374, %377 : vector<16x12xi1>
    %379 = arith.andi %378, %372 : vector<16x12xi1>
    %380 = vector.broadcast %368 : i32 to vector<16x12xi32>
    %381 = arith.addi %370, %380 : vector<16x12xi32>
    %382 = arith.select %379, %381, %370 : vector<16x12xi1>, vector<16x12xi32>
    %383 = tpu.iota {dimensions = array<i32: 1>} : vector<16x12xi32>
    %c2_i32_75 = arith.constant 2 : i32
    %c0_i32_76 = arith.constant 0 : i32
    %384 = arith.cmpi eq, %c2_i32_75, %c0_i32_76 : i32
    %c1_i32_77 = arith.constant 1 : i32
    %385 = arith.select %384, %c1_i32_77, %c2_i32_75 : i32
    %386 = vector.broadcast %385 : i32 to vector<16x12xi32>
    %387 = arith.remsi %383, %386 : vector<16x12xi32>
    %c0_i32_78 = arith.constant 0 : i32
    %388 = vector.broadcast %c0_i32_78 : i32 to vector<16x12xi32>
    %389 = arith.cmpi ne, %387, %388 : vector<16x12xi32>
    %c0_i32_79 = arith.constant 0 : i32
    %390 = vector.broadcast %c0_i32_79 : i32 to vector<16x12xi32>
    %391 = arith.cmpi slt, %387, %390 : vector<16x12xi32>
    %c0_i32_80 = arith.constant 0 : i32
    %392 = arith.cmpi slt, %385, %c0_i32_80 : i32
    %393 = vector.broadcast %392 : i1 to vector<16x12xi1>
    %394 = vector.broadcast %393 : vector<16x12xi1> to vector<16x12xi1>
    %395 = arith.xori %391, %394 : vector<16x12xi1>
    %396 = arith.andi %395, %389 : vector<16x12xi1>
    %397 = vector.broadcast %385 : i32 to vector<16x12xi32>
    %398 = arith.addi %387, %397 : vector<16x12xi32>
    %399 = arith.select %396, %398, %387 : vector<16x12xi1>, vector<16x12xi32>
    %400 = arith.cmpi eq, %382, %399 : vector<16x12xi32>
    %cst_81 = arith.constant 0xFF800000 : f32
    %401 = vector.broadcast %cst_81 : f32 to vector<16x12xf32>
    %402 = arith.select %400, %365, %401 : vector<16x12xi1>, vector<16x12xf32>
    %cst_82 = arith.constant dense<0xFF800000> : vector<16xf32>
    %403 = vector.multi_reduction <maximumf>, %402, %cst_82 [1] : vector<16x12xf32> to vector<16xf32>
    %404 = vector.shape_cast %403 : vector<16xf32> to vector<16x1xf32>
    %405 = vector.broadcast %404 : vector<16x1xf32> to vector<16x12xf32>
    %406 = arith.subf %402, %405 : vector<16x12xf32>
    %407 = math.exp %406 : vector<16x12xf32>
    %cst_83 = arith.constant dense<0.000000e+00> : vector<16xf32>
    %408 = vector.multi_reduction <add>, %407, %cst_83 [1] : vector<16x12xf32> to vector<16xf32>
    %409 = vector.shape_cast %408 : vector<16xf32> to vector<16x1xf32>
    %410 = tpu.reciprocal %409 {approx = true} : vector<16x1xf32> -> vector<16x1xf32>
    %411 = vector.broadcast %410 : vector<16x1xf32> to vector<16x12xf32>
    %412 = arith.mulf %407, %411 : vector<16x12xf32>
    %cst_84 = arith.constant dense<0.000000e+00> : vector<16x16xf32>
    %413 = tpu.matmul %412, %8, %cst_84 {dimension_numbers = #tpu.dot_dimension_numbers<[1], [0], [0], [1], [0, 0, 1, 1], [], []>} : vector<16x12xf32>, vector<12x16xf32>, vector<16x16xf32> -> vector<16x16xf32>
    %cst_85 = arith.constant dense<0.000000e+00> : vector<16x10xf32>
    %414 = tpu.matmul %364, %20, %cst_85 {dimension_numbers = #tpu.dot_dimension_numbers<[1], [1], [0], [0], [0, 0, 1, 0], [], []>} : vector<16x32xf32>, vector<10x32xf32>, vector<16x10xf32> -> vector<16x10xf32>
    %415 = tpu.iota {dimensions = array<i32: 0>} : vector<16x10xi32>
    %c2_i32_86 = arith.constant 2 : i32
    %c0_i32_87 = arith.constant 0 : i32
    %416 = arith.cmpi eq, %c2_i32_86, %c0_i32_87 : i32
    %c1_i32_88 = arith.constant 1 : i32
    %417 = arith.select %416, %c1_i32_88, %c2_i32_86 : i32
    %418 = vector.broadcast %417 : i32 to vector<16x10xi32>
    %419 = arith.remsi %415, %418 : vector<16x10xi32>
    %c0_i32_89 = arith.constant 0 : i32
    %420 = vector.broadcast %c0_i32_89 : i32 to vector<16x10xi32>
    %421 = arith.cmpi ne, %419, %420 : vector<16x10xi32>
    %c0_i32_90 = arith.constant 0 : i32
    %422 = vector.broadcast %c0_i32_90 : i32 to vector<16x10xi32>
    %423 = arith.cmpi slt, %419, %422 : vector<16x10xi32>
    %c0_i32_91 = arith.constant 0 : i32
    %424 = arith.cmpi slt, %417, %c0_i32_91 : i32
    %425 = vector.broadcast %424 : i1 to vector<16x10xi1>
    %426 = vector.broadcast %425 : vector<16x10xi1> to vector<16x10xi1>
    %427 = arith.xori %423, %426 : vector<16x10xi1>
    %428 = arith.andi %427, %421 : vector<16x10xi1>
    %429 = vector.broadcast %417 : i32 to vector<16x10xi32>
    %430 = arith.addi %419, %429 : vector<16x10xi32>
    %431 = arith.select %428, %430, %419 : vector<16x10xi1>, vector<16x10xi32>
    %432 = tpu.iota {dimensions = array<i32: 1>} : vector<16x10xi32>
    %c2_i32_92 = arith.constant 2 : i32
    %c0_i32_93 = arith.constant 0 : i32
    %433 = arith.cmpi eq, %c2_i32_92, %c0_i32_93 : i32
    %c1_i32_94 = arith.constant 1 : i32
    %434 = arith.select %433, %c1_i32_94, %c2_i32_92 : i32
    %435 = vector.broadcast %434 : i32 to vector<16x10xi32>
    %436 = arith.remsi %432, %435 : vector<16x10xi32>
    %c0_i32_95 = arith.constant 0 : i32
    %437 = vector.broadcast %c0_i32_95 : i32 to vector<16x10xi32>
    %438 = arith.cmpi ne, %436, %437 : vector<16x10xi32>
    %c0_i32_96 = arith.constant 0 : i32
    %439 = vector.broadcast %c0_i32_96 : i32 to vector<16x10xi32>
    %440 = arith.cmpi slt, %436, %439 : vector<16x10xi32>
    %c0_i32_97 = arith.constant 0 : i32
    %441 = arith.cmpi slt, %434, %c0_i32_97 : i32
    %442 = vector.broadcast %441 : i1 to vector<16x10xi1>
    %443 = vector.broadcast %442 : vector<16x10xi1> to vector<16x10xi1>
    %444 = arith.xori %440, %443 : vector<16x10xi1>
    %445 = arith.andi %444, %438 : vector<16x10xi1>
    %446 = vector.broadcast %434 : i32 to vector<16x10xi32>
    %447 = arith.addi %436, %446 : vector<16x10xi32>
    %448 = arith.select %445, %447, %436 : vector<16x10xi1>, vector<16x10xi32>
    %449 = arith.cmpi eq, %431, %448 : vector<16x10xi32>
    %cst_98 = arith.constant 0xFF800000 : f32
    %450 = vector.broadcast %cst_98 : f32 to vector<16x10xf32>
    %451 = arith.select %449, %414, %450 : vector<16x10xi1>, vector<16x10xf32>
    %cst_99 = arith.constant dense<0xFF800000> : vector<16xf32>
    %452 = vector.multi_reduction <maximumf>, %451, %cst_99 [1] : vector<16x10xf32> to vector<16xf32>
    %453 = vector.shape_cast %452 : vector<16xf32> to vector<16x1xf32>
    %454 = vector.broadcast %453 : vector<16x1xf32> to vector<16x10xf32>
    %455 = arith.subf %451, %454 : vector<16x10xf32>
    %456 = math.exp %455 : vector<16x10xf32>
    %cst_100 = arith.constant dense<0.000000e+00> : vector<16xf32>
    %457 = vector.multi_reduction <add>, %456, %cst_100 [1] : vector<16x10xf32> to vector<16xf32>
    %458 = vector.shape_cast %457 : vector<16xf32> to vector<16x1xf32>
    %459 = tpu.reciprocal %458 {approx = true} : vector<16x1xf32> -> vector<16x1xf32>
    %460 = vector.broadcast %459 : vector<16x1xf32> to vector<16x10xf32>
    %461 = arith.mulf %456, %460 : vector<16x10xf32>
    %cst_101 = arith.constant dense<0.000000e+00> : vector<16x12xf32>
    %462 = tpu.matmul %461, %9, %cst_101 {dimension_numbers = #tpu.dot_dimension_numbers<[1], [0], [0], [1], [0, 0, 1, 1], [], []>} : vector<16x10xf32>, vector<10x12xf32>, vector<16x12xf32> -> vector<16x12xf32>
    %cst_102 = arith.constant dense<0.000000e+00> : vector<16x10xf32>
    %463 = tpu.matmul %364, %25, %cst_102 {dimension_numbers = #tpu.dot_dimension_numbers<[1], [1], [0], [0], [0, 0, 1, 0], [], []>} : vector<16x32xf32>, vector<10x32xf32>, vector<16x10xf32> -> vector<16x10xf32>
    %464 = tpu.iota {dimensions = array<i32: 0>} : vector<16x10xi32>
    %c2_i32_103 = arith.constant 2 : i32
    %c0_i32_104 = arith.constant 0 : i32
    %465 = arith.cmpi eq, %c2_i32_103, %c0_i32_104 : i32
    %c1_i32_105 = arith.constant 1 : i32
    %466 = arith.select %465, %c1_i32_105, %c2_i32_103 : i32
    %467 = vector.broadcast %466 : i32 to vector<16x10xi32>
    %468 = arith.remsi %464, %467 : vector<16x10xi32>
    %c0_i32_106 = arith.constant 0 : i32
    %469 = vector.broadcast %c0_i32_106 : i32 to vector<16x10xi32>
    %470 = arith.cmpi ne, %468, %469 : vector<16x10xi32>
    %c0_i32_107 = arith.constant 0 : i32
    %471 = vector.broadcast %c0_i32_107 : i32 to vector<16x10xi32>
    %472 = arith.cmpi slt, %468, %471 : vector<16x10xi32>
    %c0_i32_108 = arith.constant 0 : i32
    %473 = arith.cmpi slt, %466, %c0_i32_108 : i32
    %474 = vector.broadcast %473 : i1 to vector<16x10xi1>
    %475 = vector.broadcast %474 : vector<16x10xi1> to vector<16x10xi1>
    %476 = arith.xori %472, %475 : vector<16x10xi1>
    %477 = arith.andi %476, %470 : vector<16x10xi1>
    %478 = vector.broadcast %466 : i32 to vector<16x10xi32>
    %479 = arith.addi %468, %478 : vector<16x10xi32>
    %480 = arith.select %477, %479, %468 : vector<16x10xi1>, vector<16x10xi32>
    %481 = tpu.iota {dimensions = array<i32: 1>} : vector<16x10xi32>
    %c2_i32_109 = arith.constant 2 : i32
    %c0_i32_110 = arith.constant 0 : i32
    %482 = arith.cmpi eq, %c2_i32_109, %c0_i32_110 : i32
    %c1_i32_111 = arith.constant 1 : i32
    %483 = arith.select %482, %c1_i32_111, %c2_i32_109 : i32
    %484 = vector.broadcast %483 : i32 to vector<16x10xi32>
    %485 = arith.remsi %481, %484 : vector<16x10xi32>
    %c0_i32_112 = arith.constant 0 : i32
    %486 = vector.broadcast %c0_i32_112 : i32 to vector<16x10xi32>
    %487 = arith.cmpi ne, %485, %486 : vector<16x10xi32>
    %c0_i32_113 = arith.constant 0 : i32
    %488 = vector.broadcast %c0_i32_113 : i32 to vector<16x10xi32>
    %489 = arith.cmpi slt, %485, %488 : vector<16x10xi32>
    %c0_i32_114 = arith.constant 0 : i32
    %490 = arith.cmpi slt, %483, %c0_i32_114 : i32
    %491 = vector.broadcast %490 : i1 to vector<16x10xi1>
    %492 = vector.broadcast %491 : vector<16x10xi1> to vector<16x10xi1>
    %493 = arith.xori %489, %492 : vector<16x10xi1>
    %494 = arith.andi %493, %487 : vector<16x10xi1>
    %495 = vector.broadcast %483 : i32 to vector<16x10xi32>
    %496 = arith.addi %485, %495 : vector<16x10xi32>
    %497 = arith.select %494, %496, %485 : vector<16x10xi1>, vector<16x10xi32>
    %498 = arith.cmpi eq, %480, %497 : vector<16x10xi32>
    %cst_115 = arith.constant 0xFF800000 : f32
    %499 = vector.broadcast %cst_115 : f32 to vector<16x10xf32>
    %500 = arith.select %498, %463, %499 : vector<16x10xi1>, vector<16x10xf32>
    %cst_116 = arith.constant dense<0xFF800000> : vector<16xf32>
    %501 = vector.multi_reduction <maximumf>, %500, %cst_116 [1] : vector<16x10xf32> to vector<16xf32>
    %502 = vector.shape_cast %501 : vector<16xf32> to vector<16x1xf32>
    %503 = vector.broadcast %502 : vector<16x1xf32> to vector<16x10xf32>
    %504 = arith.subf %500, %503 : vector<16x10xf32>
    %505 = math.exp %504 : vector<16x10xf32>
    %cst_117 = arith.constant dense<0.000000e+00> : vector<16xf32>
    %506 = vector.multi_reduction <add>, %505, %cst_117 [1] : vector<16x10xf32> to vector<16xf32>
    %507 = vector.shape_cast %506 : vector<16xf32> to vector<16x1xf32>
    %508 = tpu.reciprocal %507 {approx = true} : vector<16x1xf32> -> vector<16x1xf32>
    %509 = vector.broadcast %508 : vector<16x1xf32> to vector<16x10xf32>
    %510 = arith.mulf %505, %509 : vector<16x10xf32>
    %cst_118 = arith.constant dense<0.000000e+00> : vector<16x12xf32>
    %511 = tpu.matmul %510, %10, %cst_118 {dimension_numbers = #tpu.dot_dimension_numbers<[1], [0], [0], [1], [0, 0, 1, 1], [], []>} : vector<16x10xf32>, vector<10x12xf32>, vector<16x12xf32> -> vector<16x12xf32>
    %c64 = arith.constant 64 : index
    %c0_119 = arith.constant 0 : index
    %512 = vector.load %arg8[%c64, %c0_119] : memref<248x32xf32, #tpu.memory_space<vmem>>, vector<16x12xf32>
    %cst_120 = arith.constant dense<0.000000e+00> : vector<16x12xf32>
    %513 = tpu.matmul %413, %512, %cst_120 {dimension_numbers = #tpu.dot_dimension_numbers<[1], [0], [0], [1], [0, 0, 1, 1], [], []>} : vector<16x16xf32>, vector<16x12xf32>, vector<16x12xf32> -> vector<16x12xf32>
    %c216 = arith.constant 216 : index
    %c0_121 = arith.constant 0 : index
    %514 = vector.load %arg8[%c216, %c0_121] : memref<248x32xf32, #tpu.memory_space<vmem>>, vector<1x12xf32>
    %515 = vector.broadcast %514 : vector<1x12xf32> to vector<16x12xf32>
    %516 = arith.addf %513, %515 : vector<16x12xf32>
    %cst_122 = arith.constant 0.000000e+00 : f32
    %517 = vector.broadcast %cst_122 : f32 to vector<16x12xf32>
    %518 = arith.maximumf %516, %517 : vector<16x12xf32>
    %519 = tpu.concatenate %518, %462, %511 in 0 : vector<16x12xf32>, vector<16x12xf32>, vector<16x12xf32> -> vector<48x12xf32>
    %c48 = arith.constant 48 : index
    %c0_123 = arith.constant 0 : index
    %520 = vector.load %arg8[%c48, %c0_123] : memref<248x32xf32, #tpu.memory_space<vmem>>, vector<12x32xf32>
    %cst_124 = arith.constant dense<0.000000e+00> : vector<48x32xf32>
    %521 = tpu.matmul %519, %520, %cst_124 {dimension_numbers = #tpu.dot_dimension_numbers<[1], [0], [0], [1], [0, 0, 1, 1], [], []>} : vector<48x12xf32>, vector<12x32xf32>, vector<48x32xf32> -> vector<48x32xf32>
    %c208 = arith.constant 208 : index
    %c0_125 = arith.constant 0 : index
    %522 = vector.load %arg8[%c208, %c0_125] : memref<248x32xf32, #tpu.memory_space<vmem>>, vector<1x32xf32>
    %523 = vector.broadcast %522 : vector<1x32xf32> to vector<48x32xf32>
    %524 = arith.addf %521, %523 : vector<48x32xf32>
    %cst_126 = arith.constant dense<0.000000e+00> : vector<16x48xf32>
    %525 = tpu.matmul %364, %524, %cst_126 {dimension_numbers = #tpu.dot_dimension_numbers<[1], [1], [0], [0], [0, 0, 1, 0], [], []>} : vector<16x32xf32>, vector<48x32xf32>, vector<16x48xf32> -> vector<16x48xf32>
    %526 = tpu.iota {dimensions = array<i32: 0>} : vector<16x48xi32>
    %c2_i32_127 = arith.constant 2 : i32
    %c0_i32_128 = arith.constant 0 : i32
    %527 = arith.cmpi eq, %c2_i32_127, %c0_i32_128 : i32
    %c1_i32_129 = arith.constant 1 : i32
    %528 = arith.select %527, %c1_i32_129, %c2_i32_127 : i32
    %529 = vector.broadcast %528 : i32 to vector<16x48xi32>
    %530 = arith.remsi %526, %529 : vector<16x48xi32>
    %c0_i32_130 = arith.constant 0 : i32
    %531 = vector.broadcast %c0_i32_130 : i32 to vector<16x48xi32>
    %532 = arith.cmpi ne, %530, %531 : vector<16x48xi32>
    %c0_i32_131 = arith.constant 0 : i32
    %533 = vector.broadcast %c0_i32_131 : i32 to vector<16x48xi32>
    %534 = arith.cmpi slt, %530, %533 : vector<16x48xi32>
    %c0_i32_132 = arith.constant 0 : i32
    %535 = arith.cmpi slt, %528, %c0_i32_132 : i32
    %536 = vector.broadcast %535 : i1 to vector<16x48xi1>
    %537 = vector.broadcast %536 : vector<16x48xi1> to vector<16x48xi1>
    %538 = arith.xori %534, %537 : vector<16x48xi1>
    %539 = arith.andi %538, %532 : vector<16x48xi1>
    %540 = vector.broadcast %528 : i32 to vector<16x48xi32>
    %541 = arith.addi %530, %540 : vector<16x48xi32>
    %542 = arith.select %539, %541, %530 : vector<16x48xi1>, vector<16x48xi32>
    %543 = tpu.iota {dimensions = array<i32: 1>} : vector<16x48xi32>
    %c2_i32_133 = arith.constant 2 : i32
    %c0_i32_134 = arith.constant 0 : i32
    %544 = arith.cmpi eq, %c2_i32_133, %c0_i32_134 : i32
    %c1_i32_135 = arith.constant 1 : i32
    %545 = arith.select %544, %c1_i32_135, %c2_i32_133 : i32
    %546 = vector.broadcast %545 : i32 to vector<16x48xi32>
    %547 = arith.remsi %543, %546 : vector<16x48xi32>
    %c0_i32_136 = arith.constant 0 : i32
    %548 = vector.broadcast %c0_i32_136 : i32 to vector<16x48xi32>
    %549 = arith.cmpi ne, %547, %548 : vector<16x48xi32>
    %c0_i32_137 = arith.constant 0 : i32
    %550 = vector.broadcast %c0_i32_137 : i32 to vector<16x48xi32>
    %551 = arith.cmpi slt, %547, %550 : vector<16x48xi32>
    %c0_i32_138 = arith.constant 0 : i32
    %552 = arith.cmpi slt, %545, %c0_i32_138 : i32
    %553 = vector.broadcast %552 : i1 to vector<16x48xi1>
    %554 = vector.broadcast %553 : vector<16x48xi1> to vector<16x48xi1>
    %555 = arith.xori %551, %554 : vector<16x48xi1>
    %556 = arith.andi %555, %549 : vector<16x48xi1>
    %557 = vector.broadcast %545 : i32 to vector<16x48xi32>
    %558 = arith.addi %547, %557 : vector<16x48xi32>
    %559 = arith.select %556, %558, %547 : vector<16x48xi1>, vector<16x48xi32>
    %560 = arith.cmpi eq, %542, %559 : vector<16x48xi32>
    %cst_139 = arith.constant 0xFF800000 : f32
    %561 = vector.broadcast %cst_139 : f32 to vector<16x48xf32>
    %562 = arith.select %560, %525, %561 : vector<16x48xi1>, vector<16x48xf32>
    %cst_140 = arith.constant dense<0xFF800000> : vector<16xf32>
    %563 = vector.multi_reduction <maximumf>, %562, %cst_140 [1] : vector<16x48xf32> to vector<16xf32>
    %564 = vector.shape_cast %563 : vector<16xf32> to vector<16x1xf32>
    %565 = vector.broadcast %564 : vector<16x1xf32> to vector<16x48xf32>
    %566 = arith.subf %562, %565 : vector<16x48xf32>
    %567 = math.exp %566 : vector<16x48xf32>
    %cst_141 = arith.constant dense<0.000000e+00> : vector<16xf32>
    %568 = vector.multi_reduction <add>, %567, %cst_141 [1] : vector<16x48xf32> to vector<16xf32>
    %569 = vector.shape_cast %568 : vector<16xf32> to vector<16x1xf32>
    %570 = tpu.reciprocal %569 {approx = true} : vector<16x1xf32> -> vector<16x1xf32>
    %571 = vector.broadcast %570 : vector<16x1xf32> to vector<16x48xf32>
    %572 = arith.mulf %567, %571 : vector<16x48xf32>
    %cst_142 = arith.constant dense<0.000000e+00> : vector<16x12xf32>
    %573 = tpu.matmul %572, %519, %cst_142 {dimension_numbers = #tpu.dot_dimension_numbers<[1], [0], [0], [1], [0, 0, 1, 1], [], []>} : vector<16x48xf32>, vector<48x12xf32>, vector<16x12xf32> -> vector<16x12xf32>
    %c80 = arith.constant 80 : index
    %c0_143 = arith.constant 0 : index
    %574 = vector.load %arg8[%c80, %c0_143] : memref<248x32xf32, #tpu.memory_space<vmem>>, vector<12x32xf32>
    %cst_144 = arith.constant dense<0.000000e+00> : vector<16x32xf32>
    %575 = tpu.matmul %573, %574, %cst_144 {dimension_numbers = #tpu.dot_dimension_numbers<[1], [0], [0], [1], [0, 0, 1, 1], [], []>} : vector<16x12xf32>, vector<12x32xf32>, vector<16x32xf32> -> vector<16x32xf32>
    %c224 = arith.constant 224 : index
    %c0_145 = arith.constant 0 : index
    %576 = vector.load %arg8[%c224, %c0_145] : memref<248x32xf32, #tpu.memory_space<vmem>>, vector<1x32xf32>
    %577 = vector.broadcast %576 : vector<1x32xf32> to vector<16x32xf32>
    %578 = arith.addf %575, %577 : vector<16x32xf32>
    %cst_146 = arith.constant 0.000000e+00 : f32
    %579 = vector.broadcast %cst_146 : f32 to vector<16x32xf32>
    %580 = arith.maximumf %578, %579 : vector<16x32xf32>
    %c96 = arith.constant 96 : index
    %c0_147 = arith.constant 0 : index
    %581 = vector.load %arg8[%c96, %c0_147] : memref<248x32xf32, #tpu.memory_space<vmem>>, vector<64x24xf32>
    %582 = vector.extract_strided_slice %581 {offsets = [0, 0], sizes = [32, 24], strides = [1, 1]} : vector<64x24xf32> to vector<32x24xf32>
    %cst_148 = arith.constant dense<0.000000e+00> : vector<16x24xf32>
    %583 = tpu.matmul %580, %582, %cst_148 {dimension_numbers = #tpu.dot_dimension_numbers<[1], [0], [0], [1], [0, 0, 1, 1], [], []>} : vector<16x32xf32>, vector<32x24xf32>, vector<16x24xf32> -> vector<16x24xf32>
    %584 = vector.extract_strided_slice %581 {offsets = [32, 0], sizes = [32, 24], strides = [1, 1]} : vector<64x24xf32> to vector<32x24xf32>
    %cst_149 = arith.constant dense<0.000000e+00> : vector<16x24xf32>
    %585 = tpu.matmul %364, %584, %cst_149 {dimension_numbers = #tpu.dot_dimension_numbers<[1], [0], [0], [1], [0, 0, 1, 1], [], []>} : vector<16x32xf32>, vector<32x24xf32>, vector<16x24xf32> -> vector<16x24xf32>
    %586 = arith.addf %583, %585 : vector<16x24xf32>
    %c232 = arith.constant 232 : index
    %c0_150 = arith.constant 0 : index
    %587 = vector.load %arg8[%c232, %c0_150] : memref<248x32xf32, #tpu.memory_space<vmem>>, vector<1x24xf32>
    %588 = vector.broadcast %587 : vector<1x24xf32> to vector<16x24xf32>
    %589 = arith.addf %586, %588 : vector<16x24xf32>
    %cst_151 = arith.constant 0.000000e+00 : f32
    %590 = vector.broadcast %cst_151 : f32 to vector<16x24xf32>
    %591 = arith.maximumf %589, %590 : vector<16x24xf32>
    %c160 = arith.constant 160 : index
    %c0_152 = arith.constant 0 : index
    %592 = vector.load %arg8[%c160, %c0_152] : memref<248x32xf32, #tpu.memory_space<vmem>>, vector<24x32xf32>
    %cst_153 = arith.constant dense<0.000000e+00> : vector<16x32xf32>
    %593 = tpu.matmul %591, %592, %cst_153 {dimension_numbers = #tpu.dot_dimension_numbers<[1], [0], [0], [1], [0, 0, 1, 1], [], []>} : vector<16x24xf32>, vector<24x32xf32>, vector<16x32xf32> -> vector<16x32xf32>
    %c240 = arith.constant 240 : index
    %c0_154 = arith.constant 0 : index
    %594 = vector.load %arg8[%c240, %c0_154] : memref<248x32xf32, #tpu.memory_space<vmem>>, vector<1x32xf32>
    %595 = vector.broadcast %594 : vector<1x32xf32> to vector<16x32xf32>
    %596 = arith.addf %593, %595 : vector<16x32xf32>
    %cst_155 = arith.constant 0.000000e+00 : f32
    %597 = vector.broadcast %cst_155 : f32 to vector<16x32xf32>
    %598 = arith.maximumf %596, %597 : vector<16x32xf32>
    %cst_156 = arith.constant dense<0.000000e+00> : vector<16x128xf32>
    %599 = tpu.matmul %598, %6, %cst_156 {dimension_numbers = #tpu.dot_dimension_numbers<[1], [0], [0], [1], [0, 0, 1, 1], [], []>} : vector<16x32xf32>, vector<32x128xf32>, vector<16x128xf32> -> vector<16x128xf32>
    %600 = vector.broadcast %7 : vector<1x128xf32> to vector<16x128xf32>
    %601 = arith.addf %599, %600 : vector<16x128xf32>
    %602 = tpu.iota {dimensions = array<i32: 1>} : vector<16x128xi32>
    %c1_i32_157 = arith.constant 1 : i32
    %603 = vector.broadcast %c1_i32_157 : i32 to vector<16x128xi32>
    %604 = arith.cmpi sge, %602, %603 : vector<16x128xi32>
    %c11_i32 = arith.constant 11 : i32
    %605 = vector.broadcast %c11_i32 : i32 to vector<16x128xi32>
    %606 = arith.cmpi slt, %602, %605 : vector<16x128xi32>
    %607 = arith.andi %604, %606 : vector<16x128xi1>
    %cst_158 = arith.constant 0xFF800000 : f32
    %608 = vector.broadcast %cst_158 : f32 to vector<16x128xf32>
    %609 = arith.select %607, %601, %608 : vector<16x128xi1>, vector<16x128xf32>
    %cst_159 = arith.constant dense<0xFF800000> : vector<16xf32>
    %610 = vector.multi_reduction <maximumf>, %609, %cst_159 [1] : vector<16x128xf32> to vector<16xf32>
    %611 = vector.shape_cast %610 : vector<16xf32> to vector<16x1xf32>
    %612 = vector.broadcast %611 : vector<16x1xf32> to vector<16x128xf32>
    %613 = arith.subf %601, %612 : vector<16x128xf32>
    %cst_160 = arith.constant 0xFF800000 : f32
    %614 = vector.broadcast %cst_160 : f32 to vector<16x128xf32>
    %615 = arith.select %607, %613, %614 : vector<16x128xi1>, vector<16x128xf32>
    %616 = math.exp %615 : vector<16x128xf32>
    %cst_161 = arith.constant dense<0.000000e+00> : vector<16xf32>
    %617 = vector.multi_reduction <add>, %616, %cst_161 [1] : vector<16x128xf32> to vector<16xf32>
    %618 = vector.shape_cast %617 : vector<16xf32> to vector<16x1xf32>
    %619 = math.log %618 : vector<16x1xf32>
    %620 = vector.broadcast %619 : vector<16x1xf32> to vector<16x128xf32>
    %621 = arith.subf %613, %620 : vector<16x128xf32>
    %c0_i32_162 = arith.constant 0 : i32
    %622 = vector.broadcast %c0_i32_162 : i32 to vector<16x128xi32>
    %623 = arith.cmpi eq, %602, %622 : vector<16x128xi32>
    %cst_163 = arith.constant 0.000000e+00 : f32
    %624 = vector.broadcast %cst_163 : f32 to vector<16x128xf32>
    %625 = arith.maximumf %601, %624 : vector<16x128xf32>
    %cst_164 = arith.constant 0.000000e+00 : f32
    %626 = vector.broadcast %cst_164 : f32 to vector<16x128xf32>
    %627 = arith.select %607, %621, %626 : vector<16x128xi1>, vector<16x128xf32>
    %628 = arith.select %623, %625, %627 : vector<16x128xi1>, vector<16x128xf32>
    %c0_165 = arith.constant 0 : index
    %c0_166 = arith.constant 0 : index
    %629 = vector.load %arg9[%c0_165, %c0_166] : memref<16x128xf32, #tpu.memory_space<vmem>>, vector<16x128xf32>
    tpu.vector_store %arg9[%c0_165, %c0_166], %628 {strides = array<i32>} : memref<16x128xf32, #tpu.memory_space<vmem>>, vector<16x128xf32>,
    return
  }
}

</mosaic_0001>

<llo_original>
// kernel: forward.1
$region0: #{forward.1}
  #allocation0 [shape = 'u32[]', space=smem, size = 0x4, offset = 0x4, fixed_abs, tag = 'smem constant byte address 0x4 - core index']
  #allocation1 [shape = 'u32[144,128]{1,0:T(1,128)}', space=vmem, size = 0x12000, scoped, tag = 'internal scratch']
  %s0 = inlined_call_operand.vmem [shape: f32[16,1], index: 0, kind: input, shape index: {}]
  %s1 = inlined_call_operand.vmem [shape: s32[16,1], index: 1, kind: input, shape index: {}]
  %s2 = inlined_call_operand.vmem [shape: f32[4,32], index: 2, kind: input, shape index: {}]
  %s3 = inlined_call_operand.hbm [shape: f32[4,32], index: 3, kind: input, shape index: {}]
  %s4 = inlined_call_operand.vmem [shape: f32[12,16], index: 4, kind: input, shape index: {}]
  %s5 = inlined_call_operand.vmem [shape: f32[10,12], index: 5, kind: input, shape index: {}]
  %s6 = inlined_call_operand.vmem [shape: f32[10,12], index: 6, kind: input, shape index: {}]
  %s7 = inlined_call_operand.vmem [shape: f32[176,128], index: 7, kind: input, shape index: {}]
  %s8 = inlined_call_operand.hbm [shape: f32[248,32], index: 8, kind: input, shape index: {}]
  %s9 = inlined_call_operand.vmem [shape: f32[16,128], index: 9, kind: output, shape index: {0}]
  %s10 = inlined_call_operand.vmem [shape: f32[8,32], index: 10, kind: output, shape index: {1}]
  %11 = xla_tuple %s9, %s10
  %s12 = sld [smem:[#allocation0]]
  $region62: #{forward.1} parent=0
    _
  %s14 = ssub.s32 1, %s12
  %s15 = scalar_select 0, %s14, %s12
  $region1: #{forward.1} parent=0
    #allocation2 [shape = 'u8[2048]{0}', space=vmem, size = 0x800, scoped, tag = 'input window, operand 3, single buffered']
    #allocation3 [shape = 's32[1]{0}', space=sflag, size = 0x4, scoped, tag = 'scoped memory for forward.1']
    #allocation4 [shape = 'u8[126976]{0}', space=vmem, size = 0x1f000, scoped, tag = 'input window, operand 8, single buffered']
    #allocation5 [shape = 's32[1]{0}', space=sflag, size = 0x4, scoped, tag = 'scoped memory for forward.1']
    %16 = vsyncpa [#allocation3], 0
    %17 = vsyncpa [#allocation5], 0
    // Predicated region
    $region2: #{forward.1} parent=1 // pred_check
      _
    $region3: #{forward.1} parent=1 // pred_check_branch
      %19 = sbr.rel (0) target = $region5
    $region4: #{forward.1} parent=1 // pred_region
      _
    $region5: #{forward.1} parent=1 // pred_fallthru
      _
    // Predicated region
    $region6: #{forward.1} parent=1 // pred_check
      _
    $region7: #{forward.1} parent=1 // pred_check_branch
      %21 = sbr.rel (0) target = $region9
    $region8: #{forward.1} parent=1 // pred_region
      _
    $region9: #{forward.1} parent=1 // pred_fallthru
      _
    // Predicated region
    $region10: #{forward.1} parent=1 // pred_check
      _
    $region11: #{forward.1} parent=1 // pred_check_branch
      %23 = sbr.rel (0) target = $region13
    $region12: #{forward.1} parent=1 // pred_region
      _
    $region13: #{forward.1} parent=1 // pred_fallthru
      _
    // Predicated region
    $region14: #{forward.1} parent=1 // pred_check
      _
    $region15: #{forward.1} parent=1 // pred_check_branch
      %25 = sbr.rel (0) target = $region17
    $region16: #{forward.1} parent=1 // pred_region
      %s27 = ssub.s32 64, 64
      %28 = vsyncadd [#allocation3], %s27
      %s30 = sshll.u32 [#allocation2], 4
      %s31 = int_to_ptr.vmem [resolvable:$true] %s30
      %33 = dma.hbm_to_vmem [thread:$0]  %s3, 64, %s31, [#allocation3]
    $region17: #{forward.1} parent=1 // pred_fallthru
      _
    // Predicated region
    $region18: #{forward.1} parent=1 // pred_check
      _
    $region19: #{forward.1} parent=1 // pred_check_branch
      %35 = sbr.rel (0) target = $region21
    $region20: #{forward.1} parent=1 // pred_region
      _
    $region21: #{forward.1} parent=1 // pred_fallthru
      _
    // Predicated region
    $region22: #{forward.1} parent=1 // pred_check
      _
    $region23: #{forward.1} parent=1 // pred_check_branch
      %37 = sbr.rel (0) target = $region25
    $region24: #{forward.1} parent=1 // pred_region
      _
    $region25: #{forward.1} parent=1 // pred_fallthru
      _
    // Predicated region
    $region26: #{forward.1} parent=1 // pred_check
      _
    $region27: #{forward.1} parent=1 // pred_check_branch
      %39 = sbr.rel (0) target = $region29
    $region28: #{forward.1} parent=1 // pred_region
      _
    $region29: #{forward.1} parent=1 // pred_fallthru
      _
    // Predicated region
    $region30: #{forward.1} parent=1 // pred_check
      _
    $region31: #{forward.1} parent=1 // pred_check_branch
      %41 = sbr.rel (0) target = $region33
    $region32: #{forward.1} parent=1 // pred_region
      _
    $region33: #{forward.1} parent=1 // pred_fallthru
      _
    // Predicated region
    $region34: #{forward.1} parent=1 // pred_check
      _
    $region35: #{forward.1} parent=1 // pred_check_branch
      %43 = sbr.rel (0) target = $region37
    $region36: #{forward.1} parent=1 // pred_region
      %s45 = ssub.s32 3968, 3968
      %46 = vsyncadd [#allocation5], %s45
      %s47 = sshll.u32 [#allocation4], 4
      %s48 = int_to_ptr.vmem [resolvable:$true] %s47
      %53 = dma.hbm_to_vmem [thread:$0]  %s8, 3968, %s48, [#allocation5], 128, 128, 8
    $region37: #{forward.1} parent=1 // pred_fallthru
      _
    // Predicated region
    $region38: #{forward.1} parent=1 // pred_check
      _
    $region39: #{forward.1} parent=1 // pred_check_branch
      %55 = sbr.rel (0) target = $region41
    $region40: #{forward.1} parent=1 // pred_region
      %56 = dma.done [#allocation3], 64
    $region41: #{forward.1} parent=1 // pred_fallthru
      _
    // Predicated region
    $region42: #{forward.1} parent=1 // pred_check
      _
    $region43: #{forward.1} parent=1 // pred_check_branch
      %58 = sbr.rel (0) target = $region45
    $region44: #{forward.1} parent=1 // pred_region
      %59 = dma.done [#allocation5], 3968
    $region45: #{forward.1} parent=1 // pred_fallthru
      _
    %v60 = vld [vmem:[%s7] sm:$0xff]
    %v61 = vld [vmem:[%s7 + $0x8] sm:$0x3]
    %v62 = vld [vmem:[%s7 + $0x10] sm:$0x1]
    %v63 = vld [vmem:[%s7 + $0x18] sm:$0x1]
    %v64 = vld [vmem:[%s7 + $0x20] sm:$0x1]
    %v65 = vld [vmem:[%s7 + $0x28] sm:$0xff]
    %v66 = vld [vmem:[%s7 + $0x30] sm:$0xff]
    %v67 = vld [vmem:[%s7 + $0x38] sm:$0xff]
    %v68 = vld [vmem:[%s7 + $0x40] sm:$0xff]
    %v69 = vld [vmem:[%s7 + $0x48] sm:$0xff]
    %v70 = vld [vmem:[%s7 + $0x50] sm:$0xff]
    %v71 = vld [vmem:[%s7 + $0x58] sm:$0xff]
    %v72 = vld [vmem:[%s7 + $0x60] sm:$0xff]
    %v73 = vld [vmem:[%s7 + $0x68] sm:$0xff]
    %v74 = vld [vmem:[%s7 + $0x70] sm:$0xff]
    %v75 = vld [vmem:[%s7 + $0x78] sm:$0xff]
    %v76 = vld [vmem:[%s7 + $0x80] sm:$0xff]
    %v77 = vld [vmem:[%s7 + $0x88] sm:$0xff]
    %v78 = vld [vmem:[%s7 + $0x90] sm:$0xff]
    %v79 = vld [vmem:[%s7 + $0x98] sm:$0xff]
    %v80 = vld [vmem:[%s7 + $0xa0] sm:$0xff]
    %v81 = vld [vmem:[%s7 + $0xa8] sm:$0x1]
    %v82 = vld [vmem:[%s4] sm:$0xff]
    %v83 = vld [vmem:[%s4 + $0x8] sm:$0xf]
    %v84 = vld [vmem:[%s5] sm:$0xff]
    %v85 = vld [vmem:[%s5 + $0x8] sm:$0x3]
    %v86 = vld [vmem:[%s6] sm:$0xff]
    %v87 = vld [vmem:[%s6 + $0x8] sm:$0x3]
    %v88 = vld [vmem:[#allocation4] sm:$0xff]
    %v89 = vld [vmem:[#allocation4 + $0x8] sm:$0xff]
    %v90 = vld [vmem:[#allocation4 + $0xb8] sm:$0x1]
    %v91 = vlaneseq
    %v92 = vshrl.u32 %v91, 7
    %v93 = vsub.s32 0, %v92
    %v94 = vrot.slane %v90, %v93
    %vm95 = vcmask 130048
    %v97 = vsel %vm95, %v82, 0
    %v100 = vsel %vm95, %v83, 0
    %102 = vmatprep.subr.mxu0 0.0
    %103 = vmatpush1.msra.mxu0 %v88
    %104 = vmatprep.subr.mxu0 0.0
    %105 = vmatpush1.msra.mxu0 %v89
    %106 = vmatprep.subr.mxu0 0.0
    %107 = vmatpush1.msra.mxu0 0.0
    %108 = vmatprep.subr.mxu0 0.0
    %109 = vmatpush1.msra.mxu0 0.0
    %110 = vmatprep.subr.mxu0 0.0
    %111 = vmatpush1.msra.mxu0 0.0
    %112 = vmatprep.subr.mxu0 0.0
    %113 = vmatpush1.msra.mxu0 0.0
    %114 = vmatprep.subr.mxu0 0.0
    %115 = vmatpush1.msra.mxu0 0.0
    %116 = vmatprep.subr.mxu0 0.0
    %117 = vmatpush1.msra.mxu0 0.0
    %118 = vmatprep.subr.mxu0 0.0
    %119 = vmatpush1.msra.mxu0 0.0
    %120 = vmatprep.subr.mxu0 0.0
    %121 = vmatpush1.msra.mxu0 0.0
    %122 = vmatprep.subr.mxu0 0.0
    %123 = vmatpush1.msra.mxu0 0.0
    %124 = vmatprep.subr.mxu0 0.0
    %125 = vmatpush1.msra.mxu0 0.0
    %126 = vmatprep.subr.mxu0 0.0
    %127 = vmatpush1.msra.mxu0 0.0
    %128 = vmatprep.subr.mxu0 0.0
    %129 = vmatpush1.msra.mxu0 0.0
    %130 = vmatprep.subr.mxu0 0.0
    %131 = vmatpush1.msra.mxu0 0.0
    %132 = vmatprep.subr.mxu0 0.0
    %133 = vmatpush1.msra.mxu0 0.0
    %134 = vmatprep.subr.mxu0 0.0
    %135 = vmatpush1.msra.mxu0 0.0
    %136 = vmatprep.subr.mxu0 0.0
    %137 = vmatpush1.msra.mxu0 0.0
    %138 = vmatprep.subr.mxu0 0.0
    %139 = vmatpush1.msra.mxu0 0.0
    %140 = vmatprep.subr.mxu0 0.0
    %141 = vmatpush1.msra.mxu0 0.0
    %142 = vmatprep.subr.mxu0 0.0
    %143 = vmatpush1.msra.mxu0 0.0
    %144 = vmatprep.subr.mxu0 0.0
    %145 = vmatpush1.msra.mxu0 0.0
    %146 = vmatprep.subr.mxu0 0.0
    %147 = vmatpush1.msra.mxu0 0.0
    %148 = vmatprep.subr.mxu0 0.0
    %149 = vmatpush1.msra.mxu0 0.0
    %150 = vmatprep.subr.mxu0 0.0
    %151 = vmatpush1.msra.mxu0 0.0
    %152 = vmatprep.subr.mxu0 0.0
    %153 = vmatpush1.msra.mxu0 0.0
    %154 = vmatprep.subr.mxu0 0.0
    %155 = vmatpush1.msra.mxu0 0.0
    %156 = vmatprep.subr.mxu0 0.0
    %157 = vmatpush1.msra.mxu0 0.0
    %158 = vmatprep.subr.mxu0 0.0
    %159 = vmatpush1.msra.mxu0 0.0
    %160 = vmatprep.subr.mxu0 0.0
    %161 = vmatpush1.msra.mxu0 0.0
    %162 = vmatprep.subr.mxu0 0.0
    %163 = vmatpush1.msra.mxu0 0.0
    %164 = vmatprep.subr.mxu0 0.0
    %165 = vmatpush1.msra.mxu0 0.0
    %166 = vmatprep.mubr.f32.mxu0 0.0
    %167 = vmatmul.mubr.f32.gmra.mrb[0].mxu0 %v97
    %v168 = vpop.f32.mrb[0].mxu0
    %v169 = vadd.f32 %v94, %v168
    %v170 = vpop.f32.mrb[0].mxu0
    %171 = vmatprep.mubr.f32.mxu0 0.0
    %172 = vmatmul.mubr.f32.gmra.mrb[0].mxu0 %v100
    %v173 = vpop.f32.mrb[0].mxu0
    %v174 = vadd.f32 %v94, %v173
    %v175 = vpop.f32.mrb[0].mxu0
    %176 = vdwg.mxu0
    %v177 = vld [vmem:[#allocation4 + $0x10] sm:$0xff]
    %v178 = vld [vmem:[#allocation4 + $0x18] sm:$0xf]
    %v179 = vld [vmem:[#allocation4 + $0xc0] sm:$0x1]
    %v180 = vlaneseq
    %v181 = vshrl.u32 %v180, 7
    %v182 = vsub.s32 0, %v181
    %v183 = vrot.slane %v179, %v182
    %vm184 = vcmask 97280
    %v186 = vsel %vm184, %v84, 0
    %v189 = vsel %vm184, %v85, 0
    %vm191 = vcmask 1043456
    %v193 = vsel %vm191, %v178, 0
    %195 = vmatprep.subr.mxu0 0.0
    %196 = vmatpush1.msra.mxu0 %v177
    %197 = vmatprep.subr.mxu0 0.0
    %198 = vmatpush1.msra.mxu0 %v193
    %199 = vmatprep.subr.mxu0 0.0
    %200 = vmatpush1.msra.mxu0 0.0
    %201 = vmatprep.subr.mxu0 0.0
    %202 = vmatpush1.msra.mxu0 0.0
    %203 = vmatprep.subr.mxu0 0.0
    %204 = vmatpush1.msra.mxu0 0.0
    %205 = vmatprep.subr.mxu0 0.0
    %206 = vmatpush1.msra.mxu0 0.0
    %207 = vmatprep.subr.mxu0 0.0
    %208 = vmatpush1.msra.mxu0 0.0
    %209 = vmatprep.subr.mxu0 0.0
    %210 = vmatpush1.msra.mxu0 0.0
    %211 = vmatprep.subr.mxu0 0.0
    %212 = vmatpush1.msra.mxu0 0.0
    %213 = vmatprep.subr.mxu0 0.0
    %214 = vmatpush1.msra.mxu0 0.0
    %215 = vmatprep.subr.mxu0 0.0
    %216 = vmatpush1.msra.mxu0 0.0
    %217 = vmatprep.subr.mxu0 0.0
    %218 = vmatpush1.msra.mxu0 0.0
    %219 = vmatprep.subr.mxu0 0.0
    %220 = vmatpush1.msra.mxu0 0.0
    %221 = vmatprep.subr.mxu0 0.0
    %222 = vmatpush1.msra.mxu0 0.0
    %223 = vmatprep.subr.mxu0 0.0
    %224 = vmatpush1.msra.mxu0 0.0
    %225 = vmatprep.subr.mxu0 0.0
    %226 = vmatpush1.msra.mxu0 0.0
    %227 = vmatprep.subr.mxu0 0.0
    %228 = vmatpush1.msra.mxu0 0.0
    %229 = vmatprep.subr.mxu0 0.0
    %230 = vmatpush1.msra.mxu0 0.0
    %231 = vmatprep.subr.mxu0 0.0
    %232 = vmatpush1.msra.mxu0 0.0
    %233 = vmatprep.subr.mxu0 0.0
    %234 = vmatpush1.msra.mxu0 0.0
    %235 = vmatprep.subr.mxu0 0.0
    %236 = vmatpush1.msra.mxu0 0.0
    %237 = vmatprep.subr.mxu0 0.0
    %238 = vmatpush1.msra.mxu0 0.0
    %239 = vmatprep.subr.mxu0 0.0
    %240 = vmatpush1.msra.mxu0 0.0
    %241 = vmatprep.subr.mxu0 0.0
    %242 = vmatpush1.msra.mxu0 0.0
    %243 = vmatprep.subr.mxu0 0.0
    %244 = vmatpush1.msra.mxu0 0.0
    %245 = vmatprep.subr.mxu0 0.0
    %246 = vmatpush1.msra.mxu0 0.0
    %247 = vmatprep.subr.mxu0 0.0
    %248 = vmatpush1.msra.mxu0 0.0
    %249 = vmatprep.subr.mxu0 0.0
    %250 = vmatpush1.msra.mxu0 0.0
    %251 = vmatprep.subr.mxu0 0.0
    %252 = vmatpush1.msra.mxu0 0.0
    %253 = vmatprep.subr.mxu0 0.0
    %254 = vmatpush1.msra.mxu0 0.0
    %255 = vmatprep.subr.mxu0 0.0
    %256 = vmatpush1.msra.mxu0 0.0
    %257 = vmatprep.subr.mxu0 0.0
    %258 = vmatpush1.msra.mxu0 0.0
    %259 = vmatprep.mubr.f32.mxu0 0.0
    %260 = vmatmul.mubr.f32.gmra.mrb[0].mxu0 %v186
    %v261 = vpop.f32.mrb[0].mxu0
    %v262 = vadd.f32 %v183, %v261
    %v263 = vpop.f32.mrb[0].mxu0
    %264 = vmatprep.mubr.f32.mxu0 0.0
    %265 = vmatmul.mubr.f32.gmra.mrb[0].mxu0 %v189
    %v266 = vpop.f32.mrb[0].mxu0
    %v267 = vadd.f32 %v183, %v266
    %v268 = vpop.f32.mrb[0].mxu0
    %269 = vdwg.mxu0
    %v270 = vld [vmem:[#allocation4 + $0x20] sm:$0xff]
    %v271 = vld [vmem:[#allocation4 + $0x28] sm:$0xf]
    %v272 = vld [vmem:[#allocation4 + $0xc8] sm:$0x1]
    %v273 = vlaneseq
    %v274 = vshrl.u32 %v273, 7
    %v275 = vsub.s32 0, %v274
    %v276 = vrot.slane %v272, %v275
    %v278 = vsel %vm184, %v86, 0
    %v281 = vsel %vm184, %v87, 0
    %v284 = vsel %vm191, %v271, 0
    %286 = vmatprep.subr.mxu0 0.0
    %287 = vmatpush1.msra.mxu0 %v270
    %288 = vmatprep.subr.mxu0 0.0
    %289 = vmatpush1.msra.mxu0 %v284
    %290 = vmatprep.subr.mxu0 0.0
    %291 = vmatpush1.msra.mxu0 0.0
    %292 = vmatprep.subr.mxu0 0.0
    %293 = vmatpush1.msra.mxu0 0.0
    %294 = vmatprep.subr.mxu0 0.0
    %295 = vmatpush1.msra.mxu0 0.0
    %296 = vmatprep.subr.mxu0 0.0
    %297 = vmatpush1.msra.mxu0 0.0
    %298 = vmatprep.subr.mxu0 0.0
    %299 = vmatpush1.msra.mxu0 0.0
    %300 = vmatprep.subr.mxu0 0.0
    %301 = vmatpush1.msra.mxu0 0.0
    %302 = vmatprep.subr.mxu0 0.0
    %303 = vmatpush1.msra.mxu0 0.0
    %304 = vmatprep.subr.mxu0 0.0
    %305 = vmatpush1.msra.mxu0 0.0
    %306 = vmatprep.subr.mxu0 0.0
    %307 = vmatpush1.msra.mxu0 0.0
    %308 = vmatprep.subr.mxu0 0.0
    %309 = vmatpush1.msra.mxu0 0.0
    %310 = vmatprep.subr.mxu0 0.0
    %311 = vmatpush1.msra.mxu0 0.0
    %312 = vmatprep.subr.mxu0 0.0
    %313 = vmatpush1.msra.mxu0 0.0
    %314 = vmatprep.subr.mxu0 0.0
    %315 = vmatpush1.msra.mxu0 0.0
    %316 = vmatprep.subr.mxu0 0.0
    %317 = vmatpush1.msra.mxu0 0.0
    %318 = vmatprep.subr.mxu0 0.0
    %319 = vmatpush1.msra.mxu0 0.0
    %320 = vmatprep.subr.mxu0 0.0
    %321 = vmatpush1.msra.mxu0 0.0
    %322 = vmatprep.subr.mxu0 0.0
    %323 = vmatpush1.msra.mxu0 0.0
    %324 = vmatprep.subr.mxu0 0.0
    %325 = vmatpush1.msra.mxu0 0.0
    %326 = vmatprep.subr.mxu0 0.0
    %327 = vmatpush1.msra.mxu0 0.0
    %328 = vmatprep.subr.mxu0 0.0
    %329 = vmatpush1.msra.mxu0 0.0
    %330 = vmatprep.subr.mxu0 0.0
    %331 = vmatpush1.msra.mxu0 0.0
    %332 = vmatprep.subr.mxu0 0.0
    %333 = vmatpush1.msra.mxu0 0.0
    %334 = vmatprep.subr.mxu0 0.0
    %335 = vmatpush1.msra.mxu0 0.0
    %336 = vmatprep.subr.mxu0 0.0
    %337 = vmatpush1.msra.mxu0 0.0
    %338 = vmatprep.subr.mxu0 0.0
    %339 = vmatpush1.msra.mxu0 0.0
    %340 = vmatprep.subr.mxu0 0.0
    %341 = vmatpush1.msra.mxu0 0.0
    %342 = vmatprep.subr.mxu0 0.0
    %343 = vmatpush1.msra.mxu0 0.0
    %344 = vmatprep.subr.mxu0 0.0
    %345 = vmatpush1.msra.mxu0 0.0
    %346 = vmatprep.subr.mxu0 0.0
    %347 = vmatpush1.msra.mxu0 0.0
    %348 = vmatprep.subr.mxu0 0.0
    %349 = vmatpush1.msra.mxu0 0.0
    %350 = vmatprep.mubr.f32.mxu0 0.0
    %351 = vmatmul.mubr.f32.gmra.mrb[0].mxu0 %v278
    %v352 = vpop.f32.mrb[0].mxu0
    %v353 = vadd.f32 %v276, %v352
    %v354 = vpop.f32.mrb[0].mxu0
    %355 = vmatprep.mubr.f32.mxu0 0.0
    %356 = vmatmul.mubr.f32.gmra.mrb[0].mxu0 %v281
    %v357 = vpop.f32.mrb[0].mxu0
    %v358 = vadd.f32 %v276, %v357
    %v359 = vpop.f32.mrb[0].mxu0
    %360 = vdwg.mxu0
    %v361 = vlaneseq
    %v362 = vand.u32 %v361, 127
    %v363 = vld [vmem:[%s1] sm:$0xff]
    %v364 = vld [vmem:[%s1 + $0x8] sm:$0xff]
    %365 = vset.pattern.permute.xlu0 0
    %366 = vperm.xlu0 %365, %v363
    %v367 = vpop.permute.xlu0 %366
    %368 = vset.pattern.permute.xlu0 0
    %369 = vperm.xlu0 %368, %v364
    %v370 = vpop.permute.xlu0 %369
    %vm371 = vcmp.eq.s32.totalorder %v367, %v362
    %vm372 = vcmp.eq.s32.totalorder %v370, %v362
    %v373 = vsel %vm371, 1, 0
    %v374 = vsel %vm372, 1, 0
    %v375 = vcvt.s32.f32 %v373
    %v376 = vcvt.s32.f32 %v374
    %v377 = vld [vmem:[%s0] sm:$0xff]
    %v378 = vld [vmem:[%s0 + $0x8] sm:$0xff]
    %380 = vset.pattern.permute.xlu0 0
    %381 = vperm.xlu0 %380, %v377
    %v382 = vpop.permute.xlu0 %381
    %385 = vset.pattern.permute.xlu0 0
    %386 = vperm.xlu0 %385, %v378
    %v387 = vpop.permute.xlu0 %386
    %v389 = vlaneseq
    %v390 = vshrl.u32 %v389, 7
    %v391 = vsub.s32 0, %v390
    %v392 = vrot.slane %v62, %v391
    %v393 = vmul.f32 %v382, %v392
    %v394 = vmul.f32 %v387, %v392
    %vm395 = vcmask 80896
    %v397 = vsel %vm395, %v375, 0
    %v400 = vsel %vm395, %v376, 0
    %vm402 = vcmask 1041408
    %v404 = vsel %vm402, %v61, 0
    %406 = vmatprep.subr.mxu0 0.0
    %407 = vmatpush1.msra.mxu0 %v60
    %408 = vmatprep.subr.mxu0 0.0
    %409 = vmatpush1.msra.mxu0 %v404
    %410 = vmatprep.subr.mxu0 0.0
    %411 = vmatpush1.msra.mxu0 0.0
    %412 = vmatprep.subr.mxu0 0.0
    %413 = vmatpush1.msra.mxu0 0.0
    %414 = vmatprep.subr.mxu0 0.0
    %415 = vmatpush1.msra.mxu0 0.0
    %416 = vmatprep.subr.mxu0 0.0
    %417 = vmatpush1.msra.mxu0 0.0
    %418 = vmatprep.subr.mxu0 0.0
    %419 = vmatpush1.msra.mxu0 0.0
    %420 = vmatprep.subr.mxu0 0.0
    %421 = vmatpush1.msra.mxu0 0.0
    %422 = vmatprep.subr.mxu0 0.0
    %423 = vmatpush1.msra.mxu0 0.0
    %424 = vmatprep.subr.mxu0 0.0
    %425 = vmatpush1.msra.mxu0 0.0
    %426 = vmatprep.subr.mxu0 0.0
    %427 = vmatpush1.msra.mxu0 0.0
    %428 = vmatprep.subr.mxu0 0.0
    %429 = vmatpush1.msra.mxu0 0.0
    %430 = vmatprep.subr.mxu0 0.0
    %431 = vmatpush1.msra.mxu0 0.0
    %432 = vmatprep.subr.mxu0 0.0
    %433 = vmatpush1.msra.mxu0 0.0
    %434 = vmatprep.subr.mxu0 0.0
    %435 = vmatpush1.msra.mxu0 0.0
    %436 = vmatprep.subr.mxu0 0.0
    %437 = vmatpush1.msra.mxu0 0.0
    %438 = vmatprep.subr.mxu0 0.0
    %439 = vmatpush1.msra.mxu0 0.0
    %440 = vmatprep.subr.mxu0 0.0
    %441 = vmatpush1.msra.mxu0 0.0
    %442 = vmatprep.subr.mxu0 0.0
    %443 = vmatpush1.msra.mxu0 0.0
    %444 = vmatprep.subr.mxu0 0.0
    %445 = vmatpush1.msra.mxu0 0.0
    %446 = vmatprep.subr.mxu0 0.0
    %447 = vmatpush1.msra.mxu0 0.0
    %448 = vmatprep.subr.mxu0 0.0
    %449 = vmatpush1.msra.mxu0 0.0
    %450 = vmatprep.subr.mxu0 0.0
    %451 = vmatpush1.msra.mxu0 0.0
    %452 = vmatprep.subr.mxu0 0.0
    %453 = vmatpush1.msra.mxu0 0.0
    %454 = vmatprep.subr.mxu0 0.0
    %455 = vmatpush1.msra.mxu0 0.0
    %456 = vmatprep.subr.mxu0 0.0
    %457 = vmatpush1.msra.mxu0 0.0
    %458 = vmatprep.subr.mxu0 0.0
    %459 = vmatpush1.msra.mxu0 0.0
    %460 = vmatprep.subr.mxu0 0.0
    %461 = vmatpush1.msra.mxu0 0.0
    %462 = vmatprep.subr.mxu0 0.0
    %463 = vmatpush1.msra.mxu0 0.0
    %464 = vmatprep.subr.mxu0 0.0
    %465 = vmatpush1.msra.mxu0 0.0
    %466 = vmatprep.subr.mxu0 0.0
    %467 = vmatpush1.msra.mxu0 0.0
    %468 = vmatprep.subr.mxu0 0.0
    %469 = vmatpush1.msra.mxu0 0.0
    %470 = vmatprep.mubr.f32.mxu0 0.0
    %471 = vmatmul.mubr.f32.gmra.mrb[0].mxu0 %v397
    %v472 = vpop.f32.mrb[0].mxu0
    %v473 = vadd.f32 0.0, %v472
    %v474 = vpop.f32.mrb[0].mxu0
    %475 = vmatprep.mubr.f32.mxu0 0.0
    %476 = vmatmul.mubr.f32.gmra.mrb[0].mxu0 %v400
    %v477 = vpop.f32.mrb[0].mxu0
    %v478 = vadd.f32 0.0, %v477
    %v479 = vpop.f32.mrb[0].mxu0
    %480 = vdwg.mxu0
    %v481 = vadd.f32 %v393, %v473
    %v482 = vadd.f32 %v394, %v478
    %v483 = vlaneseq
    %v484 = vshrl.u32 %v483, 7
    %v485 = vsub.s32 0, %v484
    %v486 = vrot.slane %v63, %v485
    %v487 = vadd.f32 %v481, %v486
    %v488 = vadd.f32 %v482, %v486
    %vm489 = vcmp.ge.s32.totalorder %v362, 64
    %vm490 = vcmp.lt.s32.totalorder %v362, 96
    %vm491 = vmand %vm489, %vm490
    %v492 = vld [vmem:[%s2] sm:$0x3]
    %v493 = vld [vmem:[%s2 + $0x2] sm:$0x3]
    %v494 = vld [vmem:[#allocation2] sm:$0x3]
    %v495 = vld [vmem:[#allocation2 + $0x2] sm:$0x3]
    %vm496 = vcmask 261120
    %v498 = vsel %vm496, %v492, 0
    %500 = vmatprep.subr.mxu0 0.0
    %501 = vmatpush1.msra.mxu0 %v65
    %502 = vmatprep.subr.mxu0 0.0
    %503 = vmatpush1.msra.mxu0 %v66
    %504 = vmatprep.subr.mxu0 0.0
    %505 = vmatpush1.msra.mxu0 %v67
    %506 = vmatprep.subr.mxu0 0.0
    %507 = vmatpush1.msra.mxu0 %v68
    %508 = vmatprep.subr.mxu0 0.0
    %509 = vmatpush1.msra.mxu0 0.0
    %510 = vmatprep.subr.mxu0 0.0
    %511 = vmatpush1.msra.mxu0 0.0
    %512 = vmatprep.subr.mxu0 0.0
    %513 = vmatpush1.msra.mxu0 0.0
    %514 = vmatprep.subr.mxu0 0.0
    %515 = vmatpush1.msra.mxu0 0.0
    %516 = vmatprep.subr.mxu0 0.0
    %517 = vmatpush1.msra.mxu0 0.0
    %518 = vmatprep.subr.mxu0 0.0
    %519 = vmatpush1.msra.mxu0 0.0
    %520 = vmatprep.subr.mxu0 0.0
    %521 = vmatpush1.msra.mxu0 0.0
    %522 = vmatprep.subr.mxu0 0.0
    %523 = vmatpush1.msra.mxu0 0.0
    %524 = vmatprep.subr.mxu0 0.0
    %525 = vmatpush1.msra.mxu0 0.0
    %526 = vmatprep.subr.mxu0 0.0
    %527 = vmatpush1.msra.mxu0 0.0
    %528 = vmatprep.subr.mxu0 0.0
    %529 = vmatpush1.msra.mxu0 0.0
    %530 = vmatprep.subr.mxu0 0.0
    %531 = vmatpush1.msra.mxu0 0.0
    %532 = vmatprep.subr.mxu0 0.0
    %533 = vmatpush1.msra.mxu0 0.0
    %534 = vmatprep.subr.mxu0 0.0
    %535 = vmatpush1.msra.mxu0 0.0
    %536 = vmatprep.subr.mxu0 0.0
    %537 = vmatpush1.msra.mxu0 0.0
    %538 = vmatprep.subr.mxu0 0.0
    %539 = vmatpush1.msra.mxu0 0.0
    %540 = vmatprep.subr.mxu0 0.0
    %541 = vmatpush1.msra.mxu0 0.0
    %542 = vmatprep.subr.mxu0 0.0
    %543 = vmatpush1.msra.mxu0 0.0
    %544 = vmatprep.subr.mxu0 0.0
    %545 = vmatpush1.msra.mxu0 0.0
    %546 = vmatprep.subr.mxu0 0.0
    %547 = vmatpush1.msra.mxu0 0.0
    %548 = vmatprep.subr.mxu0 0.0
    %549 = vmatpush1.msra.mxu0 0.0
    %550 = vmatprep.subr.mxu0 0.0
    %551 = vmatpush1.msra.mxu0 0.0
    %552 = vmatprep.subr.mxu0 0.0
    %553 = vmatpush1.msra.mxu0 0.0
    %554 = vmatprep.subr.mxu0 0.0
    %555 = vmatpush1.msra.mxu0 0.0
    %556 = vmatprep.subr.mxu0 0.0
    %557 = vmatpush1.msra.mxu0 0.0
    %558 = vmatprep.subr.mxu0 0.0
    %559 = vmatpush1.msra.mxu0 0.0
    %560 = vmatprep.subr.mxu0 0.0
    %561 = vmatpush1.msra.mxu0 0.0
    %562 = vmatprep.subr.mxu0 0.0
    %563 = vmatpush1.msra.mxu0 0.0
    %564 = vmatprep.mubr.f32.mxu0 0.0
    %565 = vmatmul.mubr.f32.gmra.mrb[0].mxu0 %v498
    %v566 = vpop.f32.mrb[0].mxu0
    %v567 = vadd.f32 0.0, %v566
    %v568 = vpop.f32.mrb[0].mxu0
    %569 = vdwg.mxu0
    %v570 = vadd.f32 %v487, %v567
    %v571 = vtanh.pop %v570
    %v572 = vxor.u32 %v570, 2147483648
    %v573 = vmul.f32 %v572, 1.442695
    %v574 = vpow.pop %v573
    %v575 = vadd.f32 %v574, 1.0
    %v576 = vrcp.pop %v575
    %v577 = vmul.f32 1.0, %v576
    %v578 = vsel %vm491, %v571, %v577
    %580 = vrot.lane.b32.xlu0 %v494, 32
    %v581 = vpop.permute.xlu0 %580
    %v583 = vmul.f32 %v578, %v581
    %585 = vrot.lane.b32.xlu0 %v578, 64
    %v586 = vpop.permute.xlu0 %585
    %v588 = vmul.f32 %v578, %v586
    %590 = vrot.lane.b32.xlu0 %v588, 32
    %v591 = vpop.permute.xlu0 %590
    %v593 = vadd.f32 %v583, %v591
    %v594 = vtanh.pop %v593
    %596 = vrot.lane.b32.xlu0 %v594, 64
    %v597 = vpop.permute.xlu0 %596
    %v599 = vmul.f32 %v578, %v597
    %601 = vrot.lane.b32.xlu0 %v599, 32
    %v602 = vpop.permute.xlu0 %601
    %605 = vrot.lane.b32.xlu0 %v493, 32
    %v606 = vpop.permute.xlu0 %605
    %v608 = vsel %vm496, %v602, %v606
    %v609 = vlaneseq
    %v610 = vshrl.u32 %v609, 7
    %v611 = vsub.s32 0, %v610
    %v612 = vrot.slane %v64, %v611
    %vm613 = vcmask 523264
    %v615 = vsel %vm613, %v608, 0
    %617 = vmatprep.subr.mxu0 0.0
    %618 = vmatpush1.msra.mxu0 %v69
    %619 = vmatprep.subr.mxu0 0.0
    %620 = vmatpush1.msra.mxu0 %v70
    %621 = vmatprep.subr.mxu0 0.0
    %622 = vmatpush1.msra.mxu0 %v71
    %623 = vmatprep.subr.mxu0 0.0
    %624 = vmatpush1.msra.mxu0 %v72
    %625 = vmatprep.subr.mxu0 0.0
    %626 = vmatpush1.msra.mxu0 %v73
    %627 = vmatprep.subr.mxu0 0.0
    %628 = vmatpush1.msra.mxu0 %v74
    %629 = vmatprep.subr.mxu0 0.0
    %630 = vmatpush1.msra.mxu0 %v75
    %631 = vmatprep.subr.mxu0 0.0
    %632 = vmatpush1.msra.mxu0 %v76
    %633 = vmatprep.subr.mxu0 0.0
    %634 = vmatpush1.msra.mxu0 0.0
    %635 = vmatprep.subr.mxu0 0.0
    %636 = vmatpush1.msra.mxu0 0.0
    %637 = vmatprep.subr.mxu0 0.0
    %638 = vmatpush1.msra.mxu0 0.0
    %639 = vmatprep.subr.mxu0 0.0
    %640 = vmatpush1.msra.mxu0 0.0
    %641 = vmatprep.subr.mxu0 0.0
    %642 = vmatpush1.msra.mxu0 0.0
    %643 = vmatprep.subr.mxu0 0.0
    %644 = vmatpush1.msra.mxu0 0.0
    %645 = vmatprep.subr.mxu0 0.0
    %646 = vmatpush1.msra.mxu0 0.0
    %647 = vmatprep.subr.mxu0 0.0
    %648 = vmatpush1.msra.mxu0 0.0
    %649 = vmatprep.subr.mxu0 0.0
    %650 = vmatpush1.msra.mxu0 0.0
    %651 = vmatprep.subr.mxu0 0.0
    %652 = vmatpush1.msra.mxu0 0.0
    %653 = vmatprep.subr.mxu0 0.0
    %654 = vmatpush1.msra.mxu0 0.0
    %655 = vmatprep.subr.mxu0 0.0
    %656 = vmatpush1.msra.mxu0 0.0
    %657 = vmatprep.subr.mxu0 0.0
    %658 = vmatpush1.msra.mxu0 0.0
    %659 = vmatprep.subr.mxu0 0.0
    %660 = vmatpush1.msra.mxu0 0.0
    %661 = vmatprep.subr.mxu0 0.0
    %662 = vmatpush1.msra.mxu0 0.0
    %663 = vmatprep.subr.mxu0 0.0
    %664 = vmatpush1.msra.mxu0 0.0
    %665 = vmatprep.subr.mxu0 0.0
    %666 = vmatpush1.msra.mxu0 0.0
    %667 = vmatprep.subr.mxu0 0.0
    %668 = vmatpush1.msra.mxu0 0.0
    %669 = vmatprep.subr.mxu0 0.0
    %670 = vmatpush1.msra.mxu0 0.0
    %671 = vmatprep.subr.mxu0 0.0
    %672 = vmatpush1.msra.mxu0 0.0
    %673 = vmatprep.subr.mxu0 0.0
    %674 = vmatpush1.msra.mxu0 0.0
    %675 = vmatprep.subr.mxu0 0.0
    %676 = vmatpush1.msra.mxu0 0.0
    %677 = vmatprep.subr.mxu0 0.0
    %678 = vmatpush1.msra.mxu0 0.0
    %679 = vmatprep.subr.mxu0 0.0
    %680 = vmatpush1.msra.mxu0 0.0
    %681 = vmatprep.mubr.f32.mxu0 0.0
    %682 = vmatmul.mubr.f32.gmra.mrb[0].mxu0 %v615
    %v683 = vpop.f32.mrb[0].mxu0
    %v684 = vadd.f32 %v612, %v683
    %v685 = vpop.f32.mrb[0].mxu0
    %686 = vdwg.mxu0
    %v687 = vtanh.pop %v684
    %v688 = vxor.u32 %v684, 2147483648
    %v689 = vmul.f32 %v688, 1.442695
    %v690 = vpow.pop %v689
    %v691 = vadd.f32 %v690, 1.0
    %v692 = vrcp.pop %v691
    %v693 = vmul.f32 1.0, %v692
    %v694 = vsel %vm491, %v687, %v693
    %696 = vrot.lane.b32.xlu0 %v495, 32
    %v697 = vpop.permute.xlu0 %696
    %v699 = vmul.f32 %v694, %v697
    %701 = vrot.lane.b32.xlu0 %v694, 64
    %v702 = vpop.permute.xlu0 %701
    %v704 = vmul.f32 %v694, %v702
    %706 = vrot.lane.b32.xlu0 %v704, 32
    %v707 = vpop.permute.xlu0 %706
    %v709 = vadd.f32 %v699, %v707
    %v710 = vtanh.pop %v709
    %712 = vrot.lane.b32.xlu0 %v710, 64
    %v713 = vpop.permute.xlu0 %712
    %v715 = vmul.f32 %v694, %v713
    %v716 = vsel %vm496, %v602, 0
    %718 = vmatprep.subr.mxu0 0.0
    %719 = vmatpush1.msra.mxu0 %v65
    %720 = vmatprep.subr.mxu0 0.0
    %721 = vmatpush1.msra.mxu0 %v66
    %722 = vmatprep.subr.mxu0 0.0
    %723 = vmatpush1.msra.mxu0 %v67
    %724 = vmatprep.subr.mxu0 0.0
    %725 = vmatpush1.msra.mxu0 %v68
    %726 = vmatprep.subr.mxu0 0.0
    %727 = vmatpush1.msra.mxu0 0.0
    %728 = vmatprep.subr.mxu0 0.0
    %729 = vmatpush1.msra.mxu0 0.0
    %730 = vmatprep.subr.mxu0 0.0
    %731 = vmatpush1.msra.mxu0 0.0
    %732 = vmatprep.subr.mxu0 0.0
    %733 = vmatpush1.msra.mxu0 0.0
    %734 = vmatprep.subr.mxu0 0.0
    %735 = vmatpush1.msra.mxu0 0.0
    %736 = vmatprep.subr.mxu0 0.0
    %737 = vmatpush1.msra.mxu0 0.0
    %738 = vmatprep.subr.mxu0 0.0
    %739 = vmatpush1.msra.mxu0 0.0
    %740 = vmatprep.subr.mxu0 0.0
    %741 = vmatpush1.msra.mxu0 0.0
    %742 = vmatprep.subr.mxu0 0.0
    %743 = vmatpush1.msra.mxu0 0.0
    %744 = vmatprep.subr.mxu0 0.0
    %745 = vmatpush1.msra.mxu0 0.0
    %746 = vmatprep.subr.mxu0 0.0
    %747 = vmatpush1.msra.mxu0 0.0
    %748 = vmatprep.subr.mxu0 0.0
    %749 = vmatpush1.msra.mxu0 0.0
    %750 = vmatprep.subr.mxu0 0.0
    %751 = vmatpush1.msra.mxu0 0.0
    %752 = vmatprep.subr.mxu0 0.0
    %753 = vmatpush1.msra.mxu0 0.0
    %754 = vmatprep.subr.mxu0 0.0
    %755 = vmatpush1.msra.mxu0 0.0
    %756 = vmatprep.subr.mxu0 0.0
    %757 = vmatpush1.msra.mxu0 0.0
    %758 = vmatprep.subr.mxu0 0.0
    %759 = vmatpush1.msra.mxu0 0.0
    %760 = vmatprep.subr.mxu0 0.0
    %761 = vmatpush1.msra.mxu0 0.0
    %762 = vmatprep.subr.mxu0 0.0
    %763 = vmatpush1.msra.mxu0 0.0
    %764 = vmatprep.subr.mxu0 0.0
    %765 = vmatpush1.msra.mxu0 0.0
    %766 = vmatprep.subr.mxu0 0.0
    %767 = vmatpush1.msra.mxu0 0.0
    %768 = vmatprep.subr.mxu0 0.0
    %769 = vmatpush1.msra.mxu0 0.0
    %770 = vmatprep.subr.mxu0 0.0
    %771 = vmatpush1.msra.mxu0 0.0
    %772 = vmatprep.subr.mxu0 0.0
    %773 = vmatpush1.msra.mxu0 0.0
    %774 = vmatprep.subr.mxu0 0.0
    %775 = vmatpush1.msra.mxu0 0.0
    %776 = vmatprep.subr.mxu0 0.0
    %777 = vmatpush1.msra.mxu0 0.0
    %778 = vmatprep.subr.mxu0 0.0
    %779 = vmatpush1.msra.mxu0 0.0
    %780 = vmatprep.subr.mxu0 0.0
    %781 = vmatpush1.msra.mxu0 0.0
    %782 = vmatprep.mubr.f32.mxu0 0.0
    %783 = vmatmul.mubr.f32.gmra.mrb[0].mxu0 %v716
    %v784 = vpop.f32.mrb[0].mxu0
    %v785 = vadd.f32 0.0, %v784
    %v786 = vpop.f32.mrb[0].mxu0
    %787 = vdwg.mxu0
    %v789 = vrot.slane %v785, 6
    %v791 = vadd.f32 %v487, %v789
    %v792 = vtanh.pop %v791
    %v793 = vxor.u32 %v791, 2147483648
    %v794 = vmul.f32 %v793, 1.442695
    %v795 = vpow.pop %v794
    %v796 = vadd.f32 %v795, 1.0
    %v797 = vrcp.pop %v796
    %v798 = vmul.f32 1.0, %v797
    %v799 = vsel %vm491, %v792, %v798
    %v801 = vrot.slane %v593, 6
    %v803 = vmul.f32 %v799, %v801
    %805 = vrot.lane.b32.xlu0 %v799, 64
    %v806 = vpop.permute.xlu0 %805
    %v808 = vmul.f32 %v799, %v806
    %810 = vrot.lane.b32.xlu0 %v808, 32
    %v811 = vpop.permute.xlu0 %810
    %v813 = vadd.f32 %v803, %v811
    %v814 = vtanh.pop %v813
    %816 = vrot.lane.b32.xlu0 %v814, 64
    %v817 = vpop.permute.xlu0 %816
    %v819 = vmul.f32 %v799, %v817
    %821 = vrot.lane.b32.xlu0 %v819, 32
    %v822 = vpop.permute.xlu0 %821
    %v825 = vrot.slane %v715, 6
    %826 = vrot.lane.b32.xlu0 %v825, 64
    %v827 = vpop.permute.xlu0 %826
    %v829 = vsel %vm496, %v822, %v827
    %v831 = vrot.slane %v829, 2
    %v832 = vsel %vm613, %v831, 0
    %834 = vmatprep.subr.mxu0 0.0
    %835 = vmatpush1.msra.mxu0 %v69
    %836 = vmatprep.subr.mxu0 0.0
    %837 = vmatpush1.msra.mxu0 %v70
    %838 = vmatprep.subr.mxu0 0.0
    %839 = vmatpush1.msra.mxu0 %v71
    %840 = vmatprep.subr.mxu0 0.0
    %841 = vmatpush1.msra.mxu0 %v72
    %842 = vmatprep.subr.mxu0 0.0
    %843 = vmatpush1.msra.mxu0 %v73
    %844 = vmatprep.subr.mxu0 0.0
    %845 = vmatpush1.msra.mxu0 %v74
    %846 = vmatprep.subr.mxu0 0.0
    %847 = vmatpush1.msra.mxu0 %v75
    %848 = vmatprep.subr.mxu0 0.0
    %849 = vmatpush1.msra.mxu0 %v76
    %850 = vmatprep.subr.mxu0 0.0
    %851 = vmatpush1.msra.mxu0 0.0
    %852 = vmatprep.subr.mxu0 0.0
    %853 = vmatpush1.msra.mxu0 0.0
    %854 = vmatprep.subr.mxu0 0.0
    %855 = vmatpush1.msra.mxu0 0.0
    %856 = vmatprep.subr.mxu0 0.0
    %857 = vmatpush1.msra.mxu0 0.0
    %858 = vmatprep.subr.mxu0 0.0
    %859 = vmatpush1.msra.mxu0 0.0
    %860 = vmatprep.subr.mxu0 0.0
    %861 = vmatpush1.msra.mxu0 0.0
    %862 = vmatprep.subr.mxu0 0.0
    %863 = vmatpush1.msra.mxu0 0.0
    %864 = vmatprep.subr.mxu0 0.0
    %865 = vmatpush1.msra.mxu0 0.0
    %866 = vmatprep.subr.mxu0 0.0
    %867 = vmatpush1.msra.mxu0 0.0
    %868 = vmatprep.subr.mxu0 0.0
    %869 = vmatpush1.msra.mxu0 0.0
    %870 = vmatprep.subr.mxu0 0.0
    %871 = vmatpush1.msra.mxu0 0.0
    %872 = vmatprep.subr.mxu0 0.0
    %873 = vmatpush1.msra.mxu0 0.0
    %874 = vmatprep.subr.mxu0 0.0
    %875 = vmatpush1.msra.mxu0 0.0
    %876 = vmatprep.subr.mxu0 0.0
    %877 = vmatpush1.msra.mxu0 0.0
    %878 = vmatprep.subr.mxu0 0.0
    %879 = vmatpush1.msra.mxu0 0.0
    %880 = vmatprep.subr.mxu0 0.0
    %881 = vmatpush1.msra.mxu0 0.0
    %882 = vmatprep.subr.mxu0 0.0
    %883 = vmatpush1.msra.mxu0 0.0
    %884 = vmatprep.subr.mxu0 0.0
    %885 = vmatpush1.msra.mxu0 0.0
    %886 = vmatprep.subr.mxu0 0.0
    %887 = vmatpush1.msra.mxu0 0.0
    %888 = vmatprep.subr.mxu0 0.0
    %889 = vmatpush1.msra.mxu0 0.0
    %890 = vmatprep.subr.mxu0 0.0
    %891 = vmatpush1.msra.mxu0 0.0
    %892 = vmatprep.subr.mxu0 0.0
    %893 = vmatpush1.msra.mxu0 0.0
    %894 = vmatprep.subr.mxu0 0.0
    %895 = vmatpush1.msra.mxu0 0.0
    %896 = vmatprep.subr.mxu0 0.0
    %897 = vmatpush1.msra.mxu0 0.0
    %898 = vmatprep.mubr.f32.mxu0 0.0
    %899 = vmatmul.mubr.f32.gmra.mrb[0].mxu0 %v832
    %v900 = vpop.f32.mrb[0].mxu0
    %v901 = vadd.f32 %v612, %v900
    %v902 = vpop.f32.mrb[0].mxu0
    %903 = vdwg.mxu0
    %v904 = vtanh.pop %v901
    %v905 = vxor.u32 %v901, 2147483648
    %v906 = vmul.f32 %v905, 1.442695
    %v907 = vpow.pop %v906
    %v908 = vadd.f32 %v907, 1.0
    %v909 = vrcp.pop %v908
    %v910 = vmul.f32 1.0, %v909
    %v911 = vsel %vm491, %v904, %v910
    %v912 = vmul.f32 %v911, %v709
    %914 = vrot.lane.b32.xlu0 %v911, 64
    %v915 = vpop.permute.xlu0 %914
    %v917 = vmul.f32 %v911, %v915
    %919 = vrot.lane.b32.xlu0 %v917, 32
    %v920 = vpop.permute.xlu0 %919
    %v922 = vadd.f32 %v912, %v920
    %v923 = vtanh.pop %v922
    %925 = vrot.lane.b32.xlu0 %v923, 64
    %v926 = vpop.permute.xlu0 %925
    %v928 = vmul.f32 %v911, %v926
    %v929 = vrot.slane %v819, 2
    %930 = vrot.lane.b32.xlu0 %v929, 32
    %v931 = vpop.permute.xlu0 %930
    %v932 = vsel %vm496, %v931, 0
    %934 = vmatprep.subr.mxu0 0.0
    %935 = vmatpush1.msra.mxu0 %v65
    %936 = vmatprep.subr.mxu0 0.0
    %937 = vmatpush1.msra.mxu0 %v66
    %938 = vmatprep.subr.mxu0 0.0
    %939 = vmatpush1.msra.mxu0 %v67
    %940 = vmatprep.subr.mxu0 0.0
    %941 = vmatpush1.msra.mxu0 %v68
    %942 = vmatprep.subr.mxu0 0.0
    %943 = vmatpush1.msra.mxu0 0.0
    %944 = vmatprep.subr.mxu0 0.0
    %945 = vmatpush1.msra.mxu0 0.0
    %946 = vmatprep.subr.mxu0 0.0
    %947 = vmatpush1.msra.mxu0 0.0
    %948 = vmatprep.subr.mxu0 0.0
    %949 = vmatpush1.msra.mxu0 0.0
    %950 = vmatprep.subr.mxu0 0.0
    %951 = vmatpush1.msra.mxu0 0.0
    %952 = vmatprep.subr.mxu0 0.0
    %953 = vmatpush1.msra.mxu0 0.0
    %954 = vmatprep.subr.mxu0 0.0
    %955 = vmatpush1.msra.mxu0 0.0
    %956 = vmatprep.subr.mxu0 0.0
    %957 = vmatpush1.msra.mxu0 0.0
    %958 = vmatprep.subr.mxu0 0.0
    %959 = vmatpush1.msra.mxu0 0.0
    %960 = vmatprep.subr.mxu0 0.0
    %961 = vmatpush1.msra.mxu0 0.0
    %962 = vmatprep.subr.mxu0 0.0
    %963 = vmatpush1.msra.mxu0 0.0
    %964 = vmatprep.subr.mxu0 0.0
    %965 = vmatpush1.msra.mxu0 0.0
    %966 = vmatprep.subr.mxu0 0.0
    %967 = vmatpush1.msra.mxu0 0.0
    %968 = vmatprep.subr.mxu0 0.0
    %969 = vmatpush1.msra.mxu0 0.0
    %970 = vmatprep.subr.mxu0 0.0
    %971 = vmatpush1.msra.mxu0 0.0
    %972 = vmatprep.subr.mxu0 0.0
    %973 = vmatpush1.msra.mxu0 0.0
    %974 = vmatprep.subr.mxu0 0.0
    %975 = vmatpush1.msra.mxu0 0.0
    %976 = vmatprep.subr.mxu0 0.0
    %977 = vmatpush1.msra.mxu0 0.0
    %978 = vmatprep.subr.mxu0 0.0
    %979 = vmatpush1.msra.mxu0 0.0
    %980 = vmatprep.subr.mxu0 0.0
    %981 = vmatpush1.msra.mxu0 0.0
    %982 = vmatprep.subr.mxu0 0.0
    %983 = vmatpush1.msra.mxu0 0.0
    %984 = vmatprep.subr.mxu0 0.0
    %985 = vmatpush1.msra.mxu0 0.0
    %986 = vmatprep.subr.mxu0 0.0
    %987 = vmatpush1.msra.mxu0 0.0
    %988 = vmatprep.subr.mxu0 0.0
    %989 = vmatpush1.msra.mxu0 0.0
    %990 = vmatprep.subr.mxu0 0.0
    %991 = vmatpush1.msra.mxu0 0.0
    %992 = vmatprep.subr.mxu0 0.0
    %993 = vmatpush1.msra.mxu0 0.0
    %994 = vmatprep.subr.mxu0 0.0
    %995 = vmatpush1.msra.mxu0 0.0
    %996 = vmatprep.subr.mxu0 0.0
    %997 = vmatpush1.msra.mxu0 0.0
    %998 = vmatprep.mubr.f32.mxu0 0.0
    %999 = vmatmul.mubr.f32.gmra.mrb[0].mxu0 %v932
    %v1000 = vpop.f32.mrb[0].mxu0
    %v1001 = vadd.f32 0.0, %v1000
    %v1002 = vpop.f32.mrb[0].mxu0
    %1003 = vdwg.mxu0
    %v1005 = vrot.slane %v1001, 4
    %v1007 = vadd.f32 %v487, %v1005
    %v1008 = vtanh.pop %v1007
    %v1009 = vxor.u32 %v1007, 2147483648
    %v1010 = vmul.f32 %v1009, 1.442695
    %v1011 = vpow.pop %v1010
    %v1012 = vadd.f32 %v1011, 1.0
    %v1013 = vrcp.pop %v1012
    %v1014 = vmul.f32 1.0, %v1013
    %v1015 = vsel %vm491, %v1008, %v1014
    %v1017 = vrot.slane %v813, 6
    %v1019 = vmul.f32 %v1015, %v1017
    %1021 = vrot.lane.b32.xlu0 %v1015, 64
    %v1022 = vpop.permute.xlu0 %1021
    %v1024 = vmul.f32 %v1015, %v1022
    %1026 = vrot.lane.b32.xlu0 %v1024, 32
    %v1027 = vpop.permute.xlu0 %1026
    %v1029 = vadd.f32 %v1019, %v1027
    %v1030 = vtanh.pop %v1029
    %1032 = vrot.lane.b32.xlu0 %v1030, 64
    %v1033 = vpop.permute.xlu0 %1032
    %v1035 = vmul.f32 %v1015, %v1033
    %1037 = vrot.lane.b32.xlu0 %v1035, 32
    %v1038 = vpop.permute.xlu0 %1037
    %v1041 = vrot.slane %v928, 4
    %1042 = vrot.lane.b32.xlu0 %v1041, 64
    %v1043 = vpop.permute.xlu0 %1042
    %v1045 = vsel %vm496, %v1038, %v1043
    %v1047 = vrot.slane %v1045, 4
    %v1048 = vsel %vm613, %v1047, 0
    %1050 = vmatprep.subr.mxu0 0.0
    %1051 = vmatpush1.msra.mxu0 %v69
    %1052 = vmatprep.subr.mxu0 0.0
    %1053 = vmatpush1.msra.mxu0 %v70
    %1054 = vmatprep.subr.mxu0 0.0
    %1055 = vmatpush1.msra.mxu0 %v71
    %1056 = vmatprep.subr.mxu0 0.0
    %1057 = vmatpush1.msra.mxu0 %v72
    %1058 = vmatprep.subr.mxu0 0.0
    %1059 = vmatpush1.msra.mxu0 %v73
    %1060 = vmatprep.subr.mxu0 0.0
    %1061 = vmatpush1.msra.mxu0 %v74
    %1062 = vmatprep.subr.mxu0 0.0
    %1063 = vmatpush1.msra.mxu0 %v75
    %1064 = vmatprep.subr.mxu0 0.0
    %1065 = vmatpush1.msra.mxu0 %v76
    %1066 = vmatprep.subr.mxu0 0.0
    %1067 = vmatpush1.msra.mxu0 0.0
    %1068 = vmatprep.subr.mxu0 0.0
    %1069 = vmatpush1.msra.mxu0 0.0
    %1070 = vmatprep.subr.mxu0 0.0
    %1071 = vmatpush1.msra.mxu0 0.0
    %1072 = vmatprep.subr.mxu0 0.0
    %1073 = vmatpush1.msra.mxu0 0.0
    %1074 = vmatprep.subr.mxu0 0.0
    %1075 = vmatpush1.msra.mxu0 0.0
    %1076 = vmatprep.subr.mxu0 0.0
    %1077 = vmatpush1.msra.mxu0 0.0
    %1078 = vmatprep.subr.mxu0 0.0
    %1079 = vmatpush1.msra.mxu0 0.0
    %1080 = vmatprep.subr.mxu0 0.0
    %1081 = vmatpush1.msra.mxu0 0.0
    %1082 = vmatprep.subr.mxu0 0.0
    %1083 = vmatpush1.msra.mxu0 0.0
    %1084 = vmatprep.subr.mxu0 0.0
    %1085 = vmatpush1.msra.mxu0 0.0
    %1086 = vmatprep.subr.mxu0 0.0
    %1087 = vmatpush1.msra.mxu0 0.0
    %1088 = vmatprep.subr.mxu0 0.0
    %1089 = vmatpush1.msra.mxu0 0.0
    %1090 = vmatprep.subr.mxu0 0.0
    %1091 = vmatpush1.msra.mxu0 0.0
    %1092 = vmatprep.subr.mxu0 0.0
    %1093 = vmatpush1.msra.mxu0 0.0
    %1094 = vmatprep.subr.mxu0 0.0
    %1095 = vmatpush1.msra.mxu0 0.0
    %1096 = vmatprep.subr.mxu0 0.0
    %1097 = vmatpush1.msra.mxu0 0.0
    %1098 = vmatprep.subr.mxu0 0.0
    %1099 = vmatpush1.msra.mxu0 0.0
    %1100 = vmatprep.subr.mxu0 0.0
    %1101 = vmatpush1.msra.mxu0 0.0
    %1102 = vmatprep.subr.mxu0 0.0
    %1103 = vmatpush1.msra.mxu0 0.0
    %1104 = vmatprep.subr.mxu0 0.0
    %1105 = vmatpush1.msra.mxu0 0.0
    %1106 = vmatprep.subr.mxu0 0.0
    %1107 = vmatpush1.msra.mxu0 0.0
    %1108 = vmatprep.subr.mxu0 0.0
    %1109 = vmatpush1.msra.mxu0 0.0
    %1110 = vmatprep.subr.mxu0 0.0
    %1111 = vmatpush1.msra.mxu0 0.0
    %1112 = vmatprep.subr.mxu0 0.0
    %1113 = vmatpush1.msra.mxu0 0.0
    %1114 = vmatprep.mubr.f32.mxu0 0.0
    %1115 = vmatmul.mubr.f32.gmra.mrb[0].mxu0 %v1048
    %v1116 = vpop.f32.mrb[0].mxu0
    %v1117 = vadd.f32 %v612, %v1116
    %v1118 = vpop.f32.mrb[0].mxu0
    %1119 = vdwg.mxu0
    %v1120 = vtanh.pop %v1117
    %v1121 = vxor.u32 %v1117, 2147483648
    %v1122 = vmul.f32 %v1121, 1.442695
    %v1123 = vpow.pop %v1122
    %v1124 = vadd.f32 %v1123, 1.0
    %v1125 = vrcp.pop %v1124
    %v1126 = vmul.f32 1.0, %v1125
    %v1127 = vsel %vm491, %v1120, %v1126
    %v1128 = vmul.f32 %v1127, %v922
    %1130 = vrot.lane.b32.xlu0 %v1127, 64
    %v1131 = vpop.permute.xlu0 %1130
    %v1133 = vmul.f32 %v1127, %v1131
    %1135 = vrot.lane.b32.xlu0 %v1133, 32
    %v1136 = vpop.permute.xlu0 %1135
    %v1138 = vadd.f32 %v1128, %v1136
    %v1139 = vtanh.pop %v1138
    %1141 = vrot.lane.b32.xlu0 %v1139, 64
    %v1142 = vpop.permute.xlu0 %1141
    %v1144 = vmul.f32 %v1127, %v1142
    %v1145 = vrot.slane %v1035, 4
    %1146 = vrot.lane.b32.xlu0 %v1145, 32
    %v1147 = vpop.permute.xlu0 %1146
    %v1148 = vsel %vm496, %v1147, 0
    %1150 = vmatprep.subr.mxu0 0.0
    %1151 = vmatpush1.msra.mxu0 %v65
    %1152 = vmatprep.subr.mxu0 0.0
    %1153 = vmatpush1.msra.mxu0 %v66
    %1154 = vmatprep.subr.mxu0 0.0
    %1155 = vmatpush1.msra.mxu0 %v67
    %1156 = vmatprep.subr.mxu0 0.0
    %1157 = vmatpush1.msra.mxu0 %v68
    %1158 = vmatprep.subr.mxu0 0.0
    %1159 = vmatpush1.msra.mxu0 0.0
    %1160 = vmatprep.subr.mxu0 0.0
    %1161 = vmatpush1.msra.mxu0 0.0
    %1162 = vmatprep.subr.mxu0 0.0
    %1163 = vmatpush1.msra.mxu0 0.0
    %1164 = vmatprep.subr.mxu0 0.0
    %1165 = vmatpush1.msra.mxu0 0.0
    %1166 = vmatprep.subr.mxu0 0.0
    %1167 = vmatpush1.msra.mxu0 0.0
    %1168 = vmatprep.subr.mxu0 0.0
    %1169 = vmatpush1.msra.mxu0 0.0
    %1170 = vmatprep.subr.mxu0 0.0
    %1171 = vmatpush1.msra.mxu0 0.0
    %1172 = vmatprep.subr.mxu0 0.0
    %1173 = vmatpush1.msra.mxu0 0.0
    %1174 = vmatprep.subr.mxu0 0.0
    %1175 = vmatpush1.msra.mxu0 0.0
    %1176 = vmatprep.subr.mxu0 0.0
    %1177 = vmatpush1.msra.mxu0 0.0
    %1178 = vmatprep.subr.mxu0 0.0
    %1179 = vmatpush1.msra.mxu0 0.0
    %1180 = vmatprep.subr.mxu0 0.0
    %1181 = vmatpush1.msra.mxu0 0.0
    %1182 = vmatprep.subr.mxu0 0.0
    %1183 = vmatpush1.msra.mxu0 0.0
    %1184 = vmatprep.subr.mxu0 0.0
    %1185 = vmatpush1.msra.mxu0 0.0
    %1186 = vmatprep.subr.mxu0 0.0
    %1187 = vmatpush1.msra.mxu0 0.0
    %1188 = vmatprep.subr.mxu0 0.0
    %1189 = vmatpush1.msra.mxu0 0.0
    %1190 = vmatprep.subr.mxu0 0.0
    %1191 = vmatpush1.msra.mxu0 0.0
    %1192 = vmatprep.subr.mxu0 0.0
    %1193 = vmatpush1.msra.mxu0 0.0
    %1194 = vmatprep.subr.mxu0 0.0
    %1195 = vmatpush1.msra.mxu0 0.0
    %1196 = vmatprep.subr.mxu0 0.0
    %1197 = vmatpush1.msra.mxu0 0.0
    %1198 = vmatprep.subr.mxu0 0.0
    %1199 = vmatpush1.msra.mxu0 0.0
    %1200 = vmatprep.subr.mxu0 0.0
    %1201 = vmatpush1.msra.mxu0 0.0
    %1202 = vmatprep.subr.mxu0 0.0
    %1203 = vmatpush1.msra.mxu0 0.0
    %1204 = vmatprep.subr.mxu0 0.0
    %1205 = vmatpush1.msra.mxu0 0.0
    %1206 = vmatprep.subr.mxu0 0.0
    %1207 = vmatpush1.msra.mxu0 0.0
    %1208 = vmatprep.subr.mxu0 0.0
    %1209 = vmatpush1.msra.mxu0 0.0
    %1210 = vmatprep.subr.mxu0 0.0
    %1211 = vmatpush1.msra.mxu0 0.0
    %1212 = vmatprep.subr.mxu0 0.0
    %1213 = vmatpush1.msra.mxu0 0.0
    %1214 = vmatprep.mubr.f32.mxu0 0.0
    %1215 = vmatmul.mubr.f32.gmra.mrb[0].mxu0 %v1148
    %v1216 = vpop.f32.mrb[0].mxu0
    %v1217 = vadd.f32 0.0, %v1216
    %v1218 = vpop.f32.mrb[0].mxu0
    %1219 = vdwg.mxu0
    %v1221 = vrot.slane %v1217, 2
    %v1223 = vadd.f32 %v487, %v1221
    %v1224 = vtanh.pop %v1223
    %v1225 = vxor.u32 %v1223, 2147483648
    %v1226 = vmul.f32 %v1225, 1.442695
    %v1227 = vpow.pop %v1226
    %v1228 = vadd.f32 %v1227, 1.0
    %v1229 = vrcp.pop %v1228
    %v1230 = vmul.f32 1.0, %v1229
    %v1231 = vsel %vm491, %v1224, %v1230
    %v1233 = vrot.slane %v1029, 6
    %v1235 = vmul.f32 %v1231, %v1233
    %1237 = vrot.lane.b32.xlu0 %v1231, 64
    %v1238 = vpop.permute.xlu0 %1237
    %v1240 = vmul.f32 %v1231, %v1238
    %1242 = vrot.lane.b32.xlu0 %v1240, 32
    %v1243 = vpop.permute.xlu0 %1242
    %v1245 = vadd.f32 %v1235, %v1243
    %v1246 = vtanh.pop %v1245
    %1248 = vrot.lane.b32.xlu0 %v1246, 64
    %v1249 = vpop.permute.xlu0 %1248
    %v1251 = vmul.f32 %v1231, %v1249
    %1253 = vrot.lane.b32.xlu0 %v1251, 32
    %v1254 = vpop.permute.xlu0 %1253
    %v1257 = vrot.slane %v1144, 2
    %1258 = vrot.lane.b32.xlu0 %v1257, 64
    %v1259 = vpop.permute.xlu0 %1258
    %v1261 = vsel %vm496, %v1254, %v1259
    %v1263 = vrot.slane %v1261, 6
    %v1264 = vsel %vm613, %v1263, 0
    %1266 = vmatprep.subr.mxu0 0.0
    %1267 = vmatpush1.msra.mxu0 %v69
    %1268 = vmatprep.subr.mxu0 0.0
    %1269 = vmatpush1.msra.mxu0 %v70
    %1270 = vmatprep.subr.mxu0 0.0
    %1271 = vmatpush1.msra.mxu0 %v71
    %1272 = vmatprep.subr.mxu0 0.0
    %1273 = vmatpush1.msra.mxu0 %v72
    %1274 = vmatprep.subr.mxu0 0.0
    %1275 = vmatpush1.msra.mxu0 %v73
    %1276 = vmatprep.subr.mxu0 0.0
    %1277 = vmatpush1.msra.mxu0 %v74
    %1278 = vmatprep.subr.mxu0 0.0
    %1279 = vmatpush1.msra.mxu0 %v75
    %1280 = vmatprep.subr.mxu0 0.0
    %1281 = vmatpush1.msra.mxu0 %v76
    %1282 = vmatprep.subr.mxu0 0.0
    %1283 = vmatpush1.msra.mxu0 0.0
    %1284 = vmatprep.subr.mxu0 0.0
    %1285 = vmatpush1.msra.mxu0 0.0
    %1286 = vmatprep.subr.mxu0 0.0
    %1287 = vmatpush1.msra.mxu0 0.0
    %1288 = vmatprep.subr.mxu0 0.0
    %1289 = vmatpush1.msra.mxu0 0.0
    %1290 = vmatprep.subr.mxu0 0.0
    %1291 = vmatpush1.msra.mxu0 0.0
    %1292 = vmatprep.subr.mxu0 0.0
    %1293 = vmatpush1.msra.mxu0 0.0
    %1294 = vmatprep.subr.mxu0 0.0
    %1295 = vmatpush1.msra.mxu0 0.0
    %1296 = vmatprep.subr.mxu0 0.0
    %1297 = vmatpush1.msra.mxu0 0.0
    %1298 = vmatprep.subr.mxu0 0.0
    %1299 = vmatpush1.msra.mxu0 0.0
    %1300 = vmatprep.subr.mxu0 0.0
    %1301 = vmatpush1.msra.mxu0 0.0
    %1302 = vmatprep.subr.mxu0 0.0
    %1303 = vmatpush1.msra.mxu0 0.0
    %1304 = vmatprep.subr.mxu0 0.0
    %1305 = vmatpush1.msra.mxu0 0.0
    %1306 = vmatprep.subr.mxu0 0.0
    %1307 = vmatpush1.msra.mxu0 0.0
    %1308 = vmatprep.subr.mxu0 0.0
    %1309 = vmatpush1.msra.mxu0 0.0
    %1310 = vmatprep.subr.mxu0 0.0
    %1311 = vmatpush1.msra.mxu0 0.0
    %1312 = vmatprep.subr.mxu0 0.0
    %1313 = vmatpush1.msra.mxu0 0.0
    %1314 = vmatprep.subr.mxu0 0.0
    %1315 = vmatpush1.msra.mxu0 0.0
    %1316 = vmatprep.subr.mxu0 0.0
    %1317 = vmatpush1.msra.mxu0 0.0
    %1318 = vmatprep.subr.mxu0 0.0
    %1319 = vmatpush1.msra.mxu0 0.0
    %1320 = vmatprep.subr.mxu0 0.0
    %1321 = vmatpush1.msra.mxu0 0.0
    %1322 = vmatprep.subr.mxu0 0.0
    %1323 = vmatpush1.msra.mxu0 0.0
    %1324 = vmatprep.subr.mxu0 0.0
    %1325 = vmatpush1.msra.mxu0 0.0
    %1326 = vmatprep.subr.mxu0 0.0
    %1327 = vmatpush1.msra.mxu0 0.0
    %1328 = vmatprep.subr.mxu0 0.0
    %1329 = vmatpush1.msra.mxu0 0.0
    %1330 = vmatprep.mubr.f32.mxu0 0.0
    %1331 = vmatmul.mubr.f32.gmra.mrb[0].mxu0 %v1264
    %v1332 = vpop.f32.mrb[0].mxu0
    %v1333 = vadd.f32 %v612, %v1332
    %v1334 = vpop.f32.mrb[0].mxu0
    %1335 = vdwg.mxu0
    %v1336 = vtanh.pop %v1333
    %v1337 = vxor.u32 %v1333, 2147483648
    %v1338 = vmul.f32 %v1337, 1.442695
    %v1339 = vpow.pop %v1338
    %v1340 = vadd.f32 %v1339, 1.0
    %v1341 = vrcp.pop %v1340
    %v1342 = vmul.f32 1.0, %v1341
    %v1343 = vsel %vm491, %v1336, %v1342
    %v1344 = vmul.f32 %v1343, %v1138
    %1346 = vrot.lane.b32.xlu0 %v1343, 64
    %v1347 = vpop.permute.xlu0 %1346
    %v1349 = vmul.f32 %v1343, %v1347
    %1351 = vrot.lane.b32.xlu0 %v1349, 32
    %v1352 = vpop.permute.xlu0 %1351
    %v1354 = vadd.f32 %v1344, %v1352
    %v1355 = vtanh.pop %v1354
    %1357 = vrot.lane.b32.xlu0 %v1355, 64
    %v1358 = vpop.permute.xlu0 %1357
    %v1360 = vmul.f32 %v1343, %v1358
    %v1361 = vrot.slane %v1251, 6
    %1362 = vrot.lane.b32.xlu0 %v1361, 32
    %v1363 = vpop.permute.xlu0 %1362
    %v1364 = vsel %vm496, %v1363, 0
    %1366 = vmatprep.subr.mxu0 0.0
    %1367 = vmatpush1.msra.mxu0 %v65
    %1368 = vmatprep.subr.mxu0 0.0
    %1369 = vmatpush1.msra.mxu0 %v66
    %1370 = vmatprep.subr.mxu0 0.0
    %1371 = vmatpush1.msra.mxu0 %v67
    %1372 = vmatprep.subr.mxu0 0.0
    %1373 = vmatpush1.msra.mxu0 %v68
    %1374 = vmatprep.subr.mxu0 0.0
    %1375 = vmatpush1.msra.mxu0 0.0
    %1376 = vmatprep.subr.mxu0 0.0
    %1377 = vmatpush1.msra.mxu0 0.0
    %1378 = vmatprep.subr.mxu0 0.0
    %1379 = vmatpush1.msra.mxu0 0.0
    %1380 = vmatprep.subr.mxu0 0.0
    %1381 = vmatpush1.msra.mxu0 0.0
    %1382 = vmatprep.subr.mxu0 0.0
    %1383 = vmatpush1.msra.mxu0 0.0
    %1384 = vmatprep.subr.mxu0 0.0
    %1385 = vmatpush1.msra.mxu0 0.0
    %1386 = vmatprep.subr.mxu0 0.0
    %1387 = vmatpush1.msra.mxu0 0.0
    %1388 = vmatprep.subr.mxu0 0.0
    %1389 = vmatpush1.msra.mxu0 0.0
    %1390 = vmatprep.subr.mxu0 0.0
    %1391 = vmatpush1.msra.mxu0 0.0
    %1392 = vmatprep.subr.mxu0 0.0
    %1393 = vmatpush1.msra.mxu0 0.0
    %1394 = vmatprep.subr.mxu0 0.0
    %1395 = vmatpush1.msra.mxu0 0.0
    %1396 = vmatprep.subr.mxu0 0.0
    %1397 = vmatpush1.msra.mxu0 0.0
    %1398 = vmatprep.subr.mxu0 0.0
    %1399 = vmatpush1.msra.mxu0 0.0
    %1400 = vmatprep.subr.mxu0 0.0
    %1401 = vmatpush1.msra.mxu0 0.0
    %1402 = vmatprep.subr.mxu0 0.0
    %1403 = vmatpush1.msra.mxu0 0.0
    %1404 = vmatprep.subr.mxu0 0.0
    %1405 = vmatpush1.msra.mxu0 0.0
    %1406 = vmatprep.subr.mxu0 0.0
    %1407 = vmatpush1.msra.mxu0 0.0
    %1408 = vmatprep.subr.mxu0 0.0
    %1409 = vmatpush1.msra.mxu0 0.0
    %1410 = vmatprep.subr.mxu0 0.0
    %1411 = vmatpush1.msra.mxu0 0.0
    %1412 = vmatprep.subr.mxu0 0.0
    %1413 = vmatpush1.msra.mxu0 0.0
    %1414 = vmatprep.subr.mxu0 0.0
    %1415 = vmatpush1.msra.mxu0 0.0
    %1416 = vmatprep.subr.mxu0 0.0
    %1417 = vmatpush1.msra.mxu0 0.0
    %1418 = vmatprep.subr.mxu0 0.0
    %1419 = vmatpush1.msra.mxu0 0.0
    %1420 = vmatprep.subr.mxu0 0.0
    %1421 = vmatpush1.msra.mxu0 0.0
    %1422 = vmatprep.subr.mxu0 0.0
    %1423 = vmatpush1.msra.mxu0 0.0
    %1424 = vmatprep.subr.mxu0 0.0
    %1425 = vmatpush1.msra.mxu0 0.0
    %1426 = vmatprep.subr.mxu0 0.0
    %1427 = vmatpush1.msra.mxu0 0.0
    %1428 = vmatprep.subr.mxu0 0.0
    %1429 = vmatpush1.msra.mxu0 0.0
    %1430 = vmatprep.mubr.f32.mxu0 0.0
    %1431 = vmatmul.mubr.f32.gmra.mrb[0].mxu0 %v1364
    %v1432 = vpop.f32.mrb[0].mxu0
    %v1433 = vadd.f32 0.0, %v1432
    %v1434 = vpop.f32.mrb[0].mxu0
    %1435 = vdwg.mxu0
    %v1436 = vadd.f32 %v488, %v1433
    %v1437 = vtanh.pop %v1436
    %v1438 = vxor.u32 %v1436, 2147483648
    %v1439 = vmul.f32 %v1438, 1.442695
    %v1440 = vpow.pop %v1439
    %v1441 = vadd.f32 %v1440, 1.0
    %v1442 = vrcp.pop %v1441
    %v1443 = vmul.f32 1.0, %v1442
    %v1444 = vsel %vm491, %v1437, %v1443
    %v1446 = vrot.slane %v1245, 6
    %v1448 = vmul.f32 %v1444, %v1446
    %1450 = vrot.lane.b32.xlu0 %v1444, 64
    %v1451 = vpop.permute.xlu0 %1450
    %v1453 = vmul.f32 %v1444, %v1451
    %1455 = vrot.lane.b32.xlu0 %v1453, 32
    %v1456 = vpop.permute.xlu0 %1455
    %v1458 = vadd.f32 %v1448, %v1456
    %v1459 = vtanh.pop %v1458
    %1461 = vrot.lane.b32.xlu0 %v1459, 64
    %v1462 = vpop.permute.xlu0 %1461
    %v1464 = vmul.f32 %v1444, %v1462
    %1466 = vrot.lane.b32.xlu0 %v1464, 32
    %v1467 = vpop.permute.xlu0 %1466
    %1470 = vrot.lane.b32.xlu0 %v1360, 64
    %v1471 = vpop.permute.xlu0 %1470
    %v1473 = vsel %vm496, %v1467, %v1471
    %v1475 = vsel %vm613, %v1473, 0
    %1477 = vmatprep.subr.mxu0 0.0
    %1478 = vmatpush1.msra.mxu0 %v69
    %1479 = vmatprep.subr.mxu0 0.0
    %1480 = vmatpush1.msra.mxu0 %v70
    %1481 = vmatprep.subr.mxu0 0.0
    %1482 = vmatpush1.msra.mxu0 %v71
    %1483 = vmatprep.subr.mxu0 0.0
    %1484 = vmatpush1.msra.mxu0 %v72
    %1485 = vmatprep.subr.mxu0 0.0
    %1486 = vmatpush1.msra.mxu0 %v73
    %1487 = vmatprep.subr.mxu0 0.0
    %1488 = vmatpush1.msra.mxu0 %v74
    %1489 = vmatprep.subr.mxu0 0.0
    %1490 = vmatpush1.msra.mxu0 %v75
    %1491 = vmatprep.subr.mxu0 0.0
    %1492 = vmatpush1.msra.mxu0 %v76
    %1493 = vmatprep.subr.mxu0 0.0
    %1494 = vmatpush1.msra.mxu0 0.0
    %1495 = vmatprep.subr.mxu0 0.0
    %1496 = vmatpush1.msra.mxu0 0.0
    %1497 = vmatprep.subr.mxu0 0.0
    %1498 = vmatpush1.msra.mxu0 0.0
    %1499 = vmatprep.subr.mxu0 0.0
    %1500 = vmatpush1.msra.mxu0 0.0
    %1501 = vmatprep.subr.mxu0 0.0
    %1502 = vmatpush1.msra.mxu0 0.0
    %1503 = vmatprep.subr.mxu0 0.0
    %1504 = vmatpush1.msra.mxu0 0.0
    %1505 = vmatprep.subr.mxu0 0.0
    %1506 = vmatpush1.msra.mxu0 0.0
    %1507 = vmatprep.subr.mxu0 0.0
    %1508 = vmatpush1.msra.mxu0 0.0
    %1509 = vmatprep.subr.mxu0 0.0
    %1510 = vmatpush1.msra.mxu0 0.0
    %1511 = vmatprep.subr.mxu0 0.0
    %1512 = vmatpush1.msra.mxu0 0.0
    %1513 = vmatprep.subr.mxu0 0.0
    %1514 = vmatpush1.msra.mxu0 0.0
    %1515 = vmatprep.subr.mxu0 0.0
    %1516 = vmatpush1.msra.mxu0 0.0
    %1517 = vmatprep.subr.mxu0 0.0
    %1518 = vmatpush1.msra.mxu0 0.0
    %1519 = vmatprep.subr.mxu0 0.0
    %1520 = vmatpush1.msra.mxu0 0.0
    %1521 = vmatprep.subr.mxu0 0.0
    %1522 = vmatpush1.msra.mxu0 0.0
    %1523 = vmatprep.subr.mxu0 0.0
    %1524 = vmatpush1.msra.mxu0 0.0
    %1525 = vmatprep.subr.mxu0 0.0
    %1526 = vmatpush1.msra.mxu0 0.0
    %1527 = vmatprep.subr.mxu0 0.0
    %1528 = vmatpush1.msra.mxu0 0.0
    %1529 = vmatprep.subr.mxu0 0.0
    %1530 = vmatpush1.msra.mxu0 0.0
    %1531 = vmatprep.subr.mxu0 0.0
    %1532 = vmatpush1.msra.mxu0 0.0
    %1533 = vmatprep.subr.mxu0 0.0
    %1534 = vmatpush1.msra.mxu0 0.0
    %1535 = vmatprep.subr.mxu0 0.0
    %1536 = vmatpush1.msra.mxu0 0.0
    %1537 = vmatprep.subr.mxu0 0.0
    %1538 = vmatpush1.msra.mxu0 0.0
    %1539 = vmatprep.subr.mxu0 0.0
    %1540 = vmatpush1.msra.mxu0 0.0
    %1541 = vmatprep.mubr.f32.mxu0 0.0
    %1542 = vmatmul.mubr.f32.gmra.mrb[0].mxu0 %v1475
    %v1543 = vpop.f32.mrb[0].mxu0
    %v1544 = vadd.f32 %v612, %v1543
    %v1545 = vpop.f32.mrb[0].mxu0
    %1546 = vdwg.mxu0
    %v1547 = vtanh.pop %v1544
    %v1548 = vxor.u32 %v1544, 2147483648
    %v1549 = vmul.f32 %v1548, 1.442695
    %v1550 = vpow.pop %v1549
    %v1551 = vadd.f32 %v1550, 1.0
    %v1552 = vrcp.pop %v1551
    %v1553 = vmul.f32 1.0, %v1552
    %v1554 = vsel %vm491, %v1547, %v1553
    %v1555 = vmul.f32 %v1554, %v1354
    %1557 = vrot.lane.b32.xlu0 %v1554, 64
    %v1558 = vpop.permute.xlu0 %1557
    %v1560 = vmul.f32 %v1554, %v1558
    %1562 = vrot.lane.b32.xlu0 %v1560, 32
    %v1563 = vpop.permute.xlu0 %1562
    %v1565 = vadd.f32 %v1555, %v1563
    %v1566 = vtanh.pop %v1565
    %1568 = vrot.lane.b32.xlu0 %v1566, 64
    %v1569 = vpop.permute.xlu0 %1568
    %v1571 = vmul.f32 %v1554, %v1569
    %v1572 = vsel %vm496, %v1467, 0
    %1574 = vmatprep.subr.mxu0 0.0
    %1575 = vmatpush1.msra.mxu0 %v65
    %1576 = vmatprep.subr.mxu0 0.0
    %1577 = vmatpush1.msra.mxu0 %v66
    %1578 = vmatprep.subr.mxu0 0.0
    %1579 = vmatpush1.msra.mxu0 %v67
    %1580 = vmatprep.subr.mxu0 0.0
    %1581 = vmatpush1.msra.mxu0 %v68
    %1582 = vmatprep.subr.mxu0 0.0
    %1583 = vmatpush1.msra.mxu0 0.0
    %1584 = vmatprep.subr.mxu0 0.0
    %1585 = vmatpush1.msra.mxu0 0.0
    %1586 = vmatprep.subr.mxu0 0.0
    %1587 = vmatpush1.msra.mxu0 0.0
    %1588 = vmatprep.subr.mxu0 0.0
    %1589 = vmatpush1.msra.mxu0 0.0
    %1590 = vmatprep.subr.mxu0 0.0
    %1591 = vmatpush1.msra.mxu0 0.0
    %1592 = vmatprep.subr.mxu0 0.0
    %1593 = vmatpush1.msra.mxu0 0.0
    %1594 = vmatprep.subr.mxu0 0.0
    %1595 = vmatpush1.msra.mxu0 0.0
    %1596 = vmatprep.subr.mxu0 0.0
    %1597 = vmatpush1.msra.mxu0 0.0
    %1598 = vmatprep.subr.mxu0 0.0
    %1599 = vmatpush1.msra.mxu0 0.0
    %1600 = vmatprep.subr.mxu0 0.0
    %1601 = vmatpush1.msra.mxu0 0.0
    %1602 = vmatprep.subr.mxu0 0.0
    %1603 = vmatpush1.msra.mxu0 0.0
    %1604 = vmatprep.subr.mxu0 0.0
    %1605 = vmatpush1.msra.mxu0 0.0
    %1606 = vmatprep.subr.mxu0 0.0
    %1607 = vmatpush1.msra.mxu0 0.0
    %1608 = vmatprep.subr.mxu0 0.0
    %1609 = vmatpush1.msra.mxu0 0.0
    %1610 = vmatprep.subr.mxu0 0.0
    %1611 = vmatpush1.msra.mxu0 0.0
    %1612 = vmatprep.subr.mxu0 0.0
    %1613 = vmatpush1.msra.mxu0 0.0
    %1614 = vmatprep.subr.mxu0 0.0
    %1615 = vmatpush1.msra.mxu0 0.0
    %1616 = vmatprep.subr.mxu0 0.0
    %1617 = vmatpush1.msra.mxu0 0.0
    %1618 = vmatprep.subr.mxu0 0.0
    %1619 = vmatpush1.msra.mxu0 0.0
    %1620 = vmatprep.subr.mxu0 0.0
    %1621 = vmatpush1.msra.mxu0 0.0
    %1622 = vmatprep.subr.mxu0 0.0
    %1623 = vmatpush1.msra.mxu0 0.0
    %1624 = vmatprep.subr.mxu0 0.0
    %1625 = vmatpush1.msra.mxu0 0.0
    %1626 = vmatprep.subr.mxu0 0.0
    %1627 = vmatpush1.msra.mxu0 0.0
    %1628 = vmatprep.subr.mxu0 0.0
    %1629 = vmatpush1.msra.mxu0 0.0
    %1630 = vmatprep.subr.mxu0 0.0
    %1631 = vmatpush1.msra.mxu0 0.0
    %1632 = vmatprep.subr.mxu0 0.0
    %1633 = vmatpush1.msra.mxu0 0.0
    %1634 = vmatprep.subr.mxu0 0.0
    %1635 = vmatpush1.msra.mxu0 0.0
    %1636 = vmatprep.subr.mxu0 0.0
    %1637 = vmatpush1.msra.mxu0 0.0
    %1638 = vmatprep.mubr.f32.mxu0 0.0
    %1639 = vmatmul.mubr.f32.gmra.mrb[0].mxu0 %v1572
    %v1640 = vpop.f32.mrb[0].mxu0
    %v1641 = vadd.f32 0.0, %v1640
    %v1642 = vpop.f32.mrb[0].mxu0
    %1643 = vdwg.mxu0
    %v1645 = vrot.slane %v1641, 6
    %v1647 = vadd.f32 %v488, %v1645
    %v1648 = vtanh.pop %v1647
    %v1649 = vxor.u32 %v1647, 2147483648
    %v1650 = vmul.f32 %v1649, 1.442695
    %v1651 = vpow.pop %v1650
    %v1652 = vadd.f32 %v1651, 1.0
    %v1653 = vrcp.pop %v1652
    %v1654 = vmul.f32 1.0, %v1653
    %v1655 = vsel %vm491, %v1648, %v1654
    %v1657 = vrot.slane %v1458, 6
    %v1659 = vmul.f32 %v1655, %v1657
    %1661 = vrot.lane.b32.xlu0 %v1655, 64
    %v1662 = vpop.permute.xlu0 %1661
    %v1664 = vmul.f32 %v1655, %v1662
    %1666 = vrot.lane.b32.xlu0 %v1664, 32
    %v1667 = vpop.permute.xlu0 %1666
    %v1669 = vadd.f32 %v1659, %v1667
    %v1670 = vtanh.pop %v1669
    %1672 = vrot.lane.b32.xlu0 %v1670, 64
    %v1673 = vpop.permute.xlu0 %1672
    %v1675 = vmul.f32 %v1655, %v1673
    %1677 = vrot.lane.b32.xlu0 %v1675, 32
    %v1678 = vpop.permute.xlu0 %1677
    %v1681 = vrot.slane %v1571, 6
    %1682 = vrot.lane.b32.xlu0 %v1681, 64
    %v1683 = vpop.permute.xlu0 %1682
    %v1685 = vsel %vm496, %v1678, %v1683
    %v1687 = vrot.slane %v1685, 2
    %v1688 = vsel %vm613, %v1687, 0
    %1690 = vmatprep.subr.mxu0 0.0
    %1691 = vmatpush1.msra.mxu0 %v69
    %1692 = vmatprep.subr.mxu0 0.0
    %1693 = vmatpush1.msra.mxu0 %v70
    %1694 = vmatprep.subr.mxu0 0.0
    %1695 = vmatpush1.msra.mxu0 %v71
    %1696 = vmatprep.subr.mxu0 0.0
    %1697 = vmatpush1.msra.mxu0 %v72
    %1698 = vmatprep.subr.mxu0 0.0
    %1699 = vmatpush1.msra.mxu0 %v73
    %1700 = vmatprep.subr.mxu0 0.0
    %1701 = vmatpush1.msra.mxu0 %v74
    %1702 = vmatprep.subr.mxu0 0.0
    %1703 = vmatpush1.msra.mxu0 %v75
    %1704 = vmatprep.subr.mxu0 0.0
    %1705 = vmatpush1.msra.mxu0 %v76
    %1706 = vmatprep.subr.mxu0 0.0
    %1707 = vmatpush1.msra.mxu0 0.0
    %1708 = vmatprep.subr.mxu0 0.0
    %1709 = vmatpush1.msra.mxu0 0.0
    %1710 = vmatprep.subr.mxu0 0.0
    %1711 = vmatpush1.msra.mxu0 0.0
    %1712 = vmatprep.subr.mxu0 0.0
    %1713 = vmatpush1.msra.mxu0 0.0
    %1714 = vmatprep.subr.mxu0 0.0
    %1715 = vmatpush1.msra.mxu0 0.0
    %1716 = vmatprep.subr.mxu0 0.0
    %1717 = vmatpush1.msra.mxu0 0.0
    %1718 = vmatprep.subr.mxu0 0.0
    %1719 = vmatpush1.msra.mxu0 0.0
    %1720 = vmatprep.subr.mxu0 0.0
    %1721 = vmatpush1.msra.mxu0 0.0
    %1722 = vmatprep.subr.mxu0 0.0
    %1723 = vmatpush1.msra.mxu0 0.0
    %1724 = vmatprep.subr.mxu0 0.0
    %1725 = vmatpush1.msra.mxu0 0.0
    %1726 = vmatprep.subr.mxu0 0.0
    %1727 = vmatpush1.msra.mxu0 0.0
    %1728 = vmatprep.subr.mxu0 0.0
    %1729 = vmatpush1.msra.mxu0 0.0
    %1730 = vmatprep.subr.mxu0 0.0
    %1731 = vmatpush1.msra.mxu0 0.0
    %1732 = vmatprep.subr.mxu0 0.0
    %1733 = vmatpush1.msra.mxu0 0.0
    %1734 = vmatprep.subr.mxu0 0.0
    %1735 = vmatpush1.msra.mxu0 0.0
    %1736 = vmatprep.subr.mxu0 0.0
    %1737 = vmatpush1.msra.mxu0 0.0
    %1738 = vmatprep.subr.mxu0 0.0
    %1739 = vmatpush1.msra.mxu0 0.0
    %1740 = vmatprep.subr.mxu0 0.0
    %1741 = vmatpush1.msra.mxu0 0.0
    %1742 = vmatprep.subr.mxu0 0.0
    %1743 = vmatpush1.msra.mxu0 0.0
    %1744 = vmatprep.subr.mxu0 0.0
    %1745 = vmatpush1.msra.mxu0 0.0
    %1746 = vmatprep.subr.mxu0 0.0
    %1747 = vmatpush1.msra.mxu0 0.0
    %1748 = vmatprep.subr.mxu0 0.0
    %1749 = vmatpush1.msra.mxu0 0.0
    %1750 = vmatprep.subr.mxu0 0.0
    %1751 = vmatpush1.msra.mxu0 0.0
    %1752 = vmatprep.subr.mxu0 0.0
    %1753 = vmatpush1.msra.mxu0 0.0
    %1754 = vmatprep.mubr.f32.mxu0 0.0
    %1755 = vmatmul.mubr.f32.gmra.mrb[0].mxu0 %v1688
    %v1756 = vpop.f32.mrb[0].mxu0
    %v1757 = vadd.f32 %v612, %v1756
    %v1758 = vpop.f32.mrb[0].mxu0
    %1759 = vdwg.mxu0
    %v1760 = vtanh.pop %v1757
    %v1761 = vxor.u32 %v1757, 2147483648
    %v1762 = vmul.f32 %v1761, 1.442695
    %v1763 = vpow.pop %v1762
    %v1764 = vadd.f32 %v1763, 1.0
    %v1765 = vrcp.pop %v1764
    %v1766 = vmul.f32 1.0, %v1765
    %v1767 = vsel %vm491, %v1760, %v1766
    %v1768 = vmul.f32 %v1767, %v1565
    %1770 = vrot.lane.b32.xlu0 %v1767, 64
    %v1771 = vpop.permute.xlu0 %1770
    %v1773 = vmul.f32 %v1767, %v1771
    %1775 = vrot.lane.b32.xlu0 %v1773, 32
    %v1776 = vpop.permute.xlu0 %1775
    %v1778 = vadd.f32 %v1768, %v1776
    %v1779 = vtanh.pop %v1778
    %1781 = vrot.lane.b32.xlu0 %v1779, 64
    %v1782 = vpop.permute.xlu0 %1781
    %v1784 = vmul.f32 %v1767, %v1782
    %v1785 = vrot.slane %v1675, 2
    %1786 = vrot.lane.b32.xlu0 %v1785, 32
    %v1787 = vpop.permute.xlu0 %1786
    %v1788 = vsel %vm496, %v1787, 0
    %1790 = vmatprep.subr.mxu0 0.0
    %1791 = vmatpush1.msra.mxu0 %v65
    %1792 = vmatprep.subr.mxu0 0.0
    %1793 = vmatpush1.msra.mxu0 %v66
    %1794 = vmatprep.subr.mxu0 0.0
    %1795 = vmatpush1.msra.mxu0 %v67
    %1796 = vmatprep.subr.mxu0 0.0
    %1797 = vmatpush1.msra.mxu0 %v68
    %1798 = vmatprep.subr.mxu0 0.0
    %1799 = vmatpush1.msra.mxu0 0.0
    %1800 = vmatprep.subr.mxu0 0.0
    %1801 = vmatpush1.msra.mxu0 0.0
    %1802 = vmatprep.subr.mxu0 0.0
    %1803 = vmatpush1.msra.mxu0 0.0
    %1804 = vmatprep.subr.mxu0 0.0
    %1805 = vmatpush1.msra.mxu0 0.0
    %1806 = vmatprep.subr.mxu0 0.0
    %1807 = vmatpush1.msra.mxu0 0.0
    %1808 = vmatprep.subr.mxu0 0.0
    %1809 = vmatpush1.msra.mxu0 0.0
    %1810 = vmatprep.subr.mxu0 0.0
    %1811 = vmatpush1.msra.mxu0 0.0
    %1812 = vmatprep.subr.mxu0 0.0
    %1813 = vmatpush1.msra.mxu0 0.0
    %1814 = vmatprep.subr.mxu0 0.0
    %1815 = vmatpush1.msra.mxu0 0.0
    %1816 = vmatprep.subr.mxu0 0.0
    %1817 = vmatpush1.msra.mxu0 0.0
    %1818 = vmatprep.subr.mxu0 0.0
    %1819 = vmatpush1.msra.mxu0 0.0
    %1820 = vmatprep.subr.mxu0 0.0
    %1821 = vmatpush1.msra.mxu0 0.0
    %1822 = vmatprep.subr.mxu0 0.0
    %1823 = vmatpush1.msra.mxu0 0.0
    %1824 = vmatprep.subr.mxu0 0.0
    %1825 = vmatpush1.msra.mxu0 0.0
    %1826 = vmatprep.subr.mxu0 0.0
    %1827 = vmatpush1.msra.mxu0 0.0
    %1828 = vmatprep.subr.mxu0 0.0
    %1829 = vmatpush1.msra.mxu0 0.0
    %1830 = vmatprep.subr.mxu0 0.0
    %1831 = vmatpush1.msra.mxu0 0.0
    %1832 = vmatprep.subr.mxu0 0.0
    %1833 = vmatpush1.msra.mxu0 0.0
    %1834 = vmatprep.subr.mxu0 0.0
    %1835 = vmatpush1.msra.mxu0 0.0
    %1836 = vmatprep.subr.mxu0 0.0
    %1837 = vmatpush1.msra.mxu0 0.0
    %1838 = vmatprep.subr.mxu0 0.0
    %1839 = vmatpush1.msra.mxu0 0.0
    %1840 = vmatprep.subr.mxu0 0.0
    %1841 = vmatpush1.msra.mxu0 0.0
    %1842 = vmatprep.subr.mxu0 0.0
    %1843 = vmatpush1.msra.mxu0 0.0
    %1844 = vmatprep.subr.mxu0 0.0
    %1845 = vmatpush1.msra.mxu0 0.0
    %1846 = vmatprep.subr.mxu0 0.0
    %1847 = vmatpush1.msra.mxu0 0.0
    %1848 = vmatprep.subr.mxu0 0.0
    %1849 = vmatpush1.msra.mxu0 0.0
    %1850 = vmatprep.subr.mxu0 0.0
    %1851 = vmatpush1.msra.mxu0 0.0
    %1852 = vmatprep.subr.mxu0 0.0
    %1853 = vmatpush1.msra.mxu0 0.0
    %1854 = vmatprep.mubr.f32.mxu0 0.0
    %1855 = vmatmul.mubr.f32.gmra.mrb[0].mxu0 %v1788
    %v1856 = vpop.f32.mrb[0].mxu0
    %v1857 = vadd.f32 0.0, %v1856
    %v1858 = vpop.f32.mrb[0].mxu0
    %1859 = vdwg.mxu0
    %v1861 = vrot.slane %v1857, 4
    %v1863 = vadd.f32 %v488, %v1861
    %v1864 = vtanh.pop %v1863
    %v1865 = vxor.u32 %v1863, 2147483648
    %v1866 = vmul.f32 %v1865, 1.442695
    %v1867 = vpow.pop %v1866
    %v1868 = vadd.f32 %v1867, 1.0
    %v1869 = vrcp.pop %v1868
    %v1870 = vmul.f32 1.0, %v1869
    %v1871 = vsel %vm491, %v1864, %v1870
    %v1873 = vrot.slane %v1669, 6
    %v1875 = vmul.f32 %v1871, %v1873
    %1877 = vrot.lane.b32.xlu0 %v1871, 64
    %v1878 = vpop.permute.xlu0 %1877
    %v1880 = vmul.f32 %v1871, %v1878
    %1882 = vrot.lane.b32.xlu0 %v1880, 32
    %v1883 = vpop.permute.xlu0 %1882
    %v1885 = vadd.f32 %v1875, %v1883
    %v1886 = vtanh.pop %v1885
    %1888 = vrot.lane.b32.xlu0 %v1886, 64
    %v1889 = vpop.permute.xlu0 %1888
    %v1891 = vmul.f32 %v1871, %v1889
    %1893 = vrot.lane.b32.xlu0 %v1891, 32
    %v1894 = vpop.permute.xlu0 %1893
    %v1897 = vrot.slane %v1784, 4
    %1898 = vrot.lane.b32.xlu0 %v1897, 64
    %v1899 = vpop.permute.xlu0 %1898
    %v1901 = vsel %vm496, %v1894, %v1899
    %v1903 = vrot.slane %v1901, 4
    %v1904 = vsel %vm613, %v1903, 0
    %1906 = vmatprep.subr.mxu0 0.0
    %1907 = vmatpush1.msra.mxu0 %v69
    %1908 = vmatprep.subr.mxu0 0.0
    %1909 = vmatpush1.msra.mxu0 %v70
    %1910 = vmatprep.subr.mxu0 0.0
    %1911 = vmatpush1.msra.mxu0 %v71
    %1912 = vmatprep.subr.mxu0 0.0
    %1913 = vmatpush1.msra.mxu0 %v72
    %1914 = vmatprep.subr.mxu0 0.0
    %1915 = vmatpush1.msra.mxu0 %v73
    %1916 = vmatprep.subr.mxu0 0.0
    %1917 = vmatpush1.msra.mxu0 %v74
    %1918 = vmatprep.subr.mxu0 0.0
    %1919 = vmatpush1.msra.mxu0 %v75
    %1920 = vmatprep.subr.mxu0 0.0
    %1921 = vmatpush1.msra.mxu0 %v76
    %1922 = vmatprep.subr.mxu0 0.0
    %1923 = vmatpush1.msra.mxu0 0.0
    %1924 = vmatprep.subr.mxu0 0.0
    %1925 = vmatpush1.msra.mxu0 0.0
    %1926 = vmatprep.subr.mxu0 0.0
    %1927 = vmatpush1.msra.mxu0 0.0
    %1928 = vmatprep.subr.mxu0 0.0
    %1929 = vmatpush1.msra.mxu0 0.0
    %1930 = vmatprep.subr.mxu0 0.0
    %1931 = vmatpush1.msra.mxu0 0.0
    %1932 = vmatprep.subr.mxu0 0.0
    %1933 = vmatpush1.msra.mxu0 0.0
    %1934 = vmatprep.subr.mxu0 0.0
    %1935 = vmatpush1.msra.mxu0 0.0
    %1936 = vmatprep.subr.mxu0 0.0
    %1937 = vmatpush1.msra.mxu0 0.0
    %1938 = vmatprep.subr.mxu0 0.0
    %1939 = vmatpush1.msra.mxu0 0.0
    %1940 = vmatprep.subr.mxu0 0.0
    %1941 = vmatpush1.msra.mxu0 0.0
    %1942 = vmatprep.subr.mxu0 0.0
    %1943 = vmatpush1.msra.mxu0 0.0
    %1944 = vmatprep.subr.mxu0 0.0
    %1945 = vmatpush1.msra.mxu0 0.0
    %1946 = vmatprep.subr.mxu0 0.0
    %1947 = vmatpush1.msra.mxu0 0.0
    %1948 = vmatprep.subr.mxu0 0.0
    %1949 = vmatpush1.msra.mxu0 0.0
    %1950 = vmatprep.subr.mxu0 0.0
    %1951 = vmatpush1.msra.mxu0 0.0
    %1952 = vmatprep.subr.mxu0 0.0
    %1953 = vmatpush1.msra.mxu0 0.0
    %1954 = vmatprep.subr.mxu0 0.0
    %1955 = vmatpush1.msra.mxu0 0.0
    %1956 = vmatprep.subr.mxu0 0.0
    %1957 = vmatpush1.msra.mxu0 0.0
    %1958 = vmatprep.subr.mxu0 0.0
    %1959 = vmatpush1.msra.mxu0 0.0
    %1960 = vmatprep.subr.mxu0 0.0
    %1961 = vmatpush1.msra.mxu0 0.0
    %1962 = vmatprep.subr.mxu0 0.0
    %1963 = vmatpush1.msra.mxu0 0.0
    %1964 = vmatprep.subr.mxu0 0.0
    %1965 = vmatpush1.msra.mxu0 0.0
    %1966 = vmatprep.subr.mxu0 0.0
    %1967 = vmatpush1.msra.mxu0 0.0
    %1968 = vmatprep.subr.mxu0 0.0
    %1969 = vmatpush1.msra.mxu0 0.0
    %1970 = vmatprep.mubr.f32.mxu0 0.0
    %1971 = vmatmul.mubr.f32.gmra.mrb[0].mxu0 %v1904
    %v1972 = vpop.f32.mrb[0].mxu0
    %v1973 = vadd.f32 %v612, %v1972
    %v1974 = vpop.f32.mrb[0].mxu0
    %1975 = vdwg.mxu0
    %v1976 = vtanh.pop %v1973
    %v1977 = vxor.u32 %v1973, 2147483648
    %v1978 = vmul.f32 %v1977, 1.442695
    %v1979 = vpow.pop %v1978
    %v1980 = vadd.f32 %v1979, 1.0
    %v1981 = vrcp.pop %v1980
    %v1982 = vmul.f32 1.0, %v1981
    %v1983 = vsel %vm491, %v1976, %v1982
    %v1984 = vmul.f32 %v1983, %v1778
    %1986 = vrot.lane.b32.xlu0 %v1983, 64
    %v1987 = vpop.permute.xlu0 %1986
    %v1989 = vmul.f32 %v1983, %v1987
    %1991 = vrot.lane.b32.xlu0 %v1989, 32
    %v1992 = vpop.permute.xlu0 %1991
    %v1994 = vadd.f32 %v1984, %v1992
    %v1995 = vtanh.pop %v1994
    %1997 = vrot.lane.b32.xlu0 %v1995, 64
    %v1998 = vpop.permute.xlu0 %1997
    %v2000 = vmul.f32 %v1983, %v1998
    %v2001 = vrot.slane %v1891, 4
    %2002 = vrot.lane.b32.xlu0 %v2001, 32
    %v2003 = vpop.permute.xlu0 %2002
    %v2004 = vsel %vm496, %v2003, 0
    %2006 = vmatprep.subr.mxu0 0.0
    %2007 = vmatpush1.msra.mxu0 %v65
    %2008 = vmatprep.subr.mxu0 0.0
    %2009 = vmatpush1.msra.mxu0 %v66
    %2010 = vmatprep.subr.mxu0 0.0
    %2011 = vmatpush1.msra.mxu0 %v67
    %2012 = vmatprep.subr.mxu0 0.0
    %2013 = vmatpush1.msra.mxu0 %v68
    %2014 = vmatprep.subr.mxu0 0.0
    %2015 = vmatpush1.msra.mxu0 0.0
    %2016 = vmatprep.subr.mxu0 0.0
    %2017 = vmatpush1.msra.mxu0 0.0
    %2018 = vmatprep.subr.mxu0 0.0
    %2019 = vmatpush1.msra.mxu0 0.0
    %2020 = vmatprep.subr.mxu0 0.0
    %2021 = vmatpush1.msra.mxu0 0.0
    %2022 = vmatprep.subr.mxu0 0.0
    %2023 = vmatpush1.msra.mxu0 0.0
    %2024 = vmatprep.subr.mxu0 0.0
    %2025 = vmatpush1.msra.mxu0 0.0
    %2026 = vmatprep.subr.mxu0 0.0
    %2027 = vmatpush1.msra.mxu0 0.0
    %2028 = vmatprep.subr.mxu0 0.0
    %2029 = vmatpush1.msra.mxu0 0.0
    %2030 = vmatprep.subr.mxu0 0.0
    %2031 = vmatpush1.msra.mxu0 0.0
    %2032 = vmatprep.subr.mxu0 0.0
    %2033 = vmatpush1.msra.mxu0 0.0
    %2034 = vmatprep.subr.mxu0 0.0
    %2035 = vmatpush1.msra.mxu0 0.0
    %2036 = vmatprep.subr.mxu0 0.0
    %2037 = vmatpush1.msra.mxu0 0.0
    %2038 = vmatprep.subr.mxu0 0.0
    %2039 = vmatpush1.msra.mxu0 0.0
    %2040 = vmatprep.subr.mxu0 0.0
    %2041 = vmatpush1.msra.mxu0 0.0
    %2042 = vmatprep.subr.mxu0 0.0
    %2043 = vmatpush1.msra.mxu0 0.0
    %2044 = vmatprep.subr.mxu0 0.0
    %2045 = vmatpush1.msra.mxu0 0.0
    %2046 = vmatprep.subr.mxu0 0.0
    %2047 = vmatpush1.msra.mxu0 0.0
    %2048 = vmatprep.subr.mxu0 0.0
    %2049 = vmatpush1.msra.mxu0 0.0
    %2050 = vmatprep.subr.mxu0 0.0
    %2051 = vmatpush1.msra.mxu0 0.0
    %2052 = vmatprep.subr.mxu0 0.0
    %2053 = vmatpush1.msra.mxu0 0.0
    %2054 = vmatprep.subr.mxu0 0.0
    %2055 = vmatpush1.msra.mxu0 0.0
    %2056 = vmatprep.subr.mxu0 0.0
    %2057 = vmatpush1.msra.mxu0 0.0
    %2058 = vmatprep.subr.mxu0 0.0
    %2059 = vmatpush1.msra.mxu0 0.0
    %2060 = vmatprep.subr.mxu0 0.0
    %2061 = vmatpush1.msra.mxu0 0.0
    %2062 = vmatprep.subr.mxu0 0.0
    %2063 = vmatpush1.msra.mxu0 0.0
    %2064 = vmatprep.subr.mxu0 0.0
    %2065 = vmatpush1.msra.mxu0 0.0
    %2066 = vmatprep.subr.mxu0 0.0
    %2067 = vmatpush1.msra.mxu0 0.0
    %2068 = vmatprep.subr.mxu0 0.0
    %2069 = vmatpush1.msra.mxu0 0.0
    %2070 = vmatprep.mubr.f32.mxu0 0.0
    %2071 = vmatmul.mubr.f32.gmra.mrb[0].mxu0 %v2004
    %v2072 = vpop.f32.mrb[0].mxu0
    %v2073 = vadd.f32 0.0, %v2072
    %v2074 = vpop.f32.mrb[0].mxu0
    %2075 = vdwg.mxu0
    %v2077 = vrot.slane %v2073, 2
    %v2079 = vadd.f32 %v488, %v2077
    %v2080 = vtanh.pop %v2079
    %v2081 = vxor.u32 %v2079, 2147483648
    %v2082 = vmul.f32 %v2081, 1.442695
    %v2083 = vpow.pop %v2082
    %v2084 = vadd.f32 %v2083, 1.0
    %v2085 = vrcp.pop %v2084
    %v2086 = vmul.f32 1.0, %v2085
    %v2087 = vsel %vm491, %v2080, %v2086
    %v2089 = vrot.slane %v1885, 6
    %v2091 = vmul.f32 %v2087, %v2089
    %2093 = vrot.lane.b32.xlu0 %v2087, 64
    %v2094 = vpop.permute.xlu0 %2093
    %v2096 = vmul.f32 %v2087, %v2094
    %2098 = vrot.lane.b32.xlu0 %v2096, 32
    %v2099 = vpop.permute.xlu0 %2098
    %v2101 = vadd.f32 %v2091, %v2099
    %v2102 = vtanh.pop %v2101
    %2104 = vrot.lane.b32.xlu0 %v2102, 64
    %v2105 = vpop.permute.xlu0 %2104
    %v2107 = vmul.f32 %v2087, %v2105
    %2109 = vrot.lane.b32.xlu0 %v2107, 32
    %v2110 = vpop.permute.xlu0 %2109
    %v2113 = vrot.slane %v2000, 2
    %2114 = vrot.lane.b32.xlu0 %v2113, 64
    %v2115 = vpop.permute.xlu0 %2114
    %v2117 = vsel %vm496, %v2110, %v2115
    %v2119 = vrot.slane %v2117, 6
    %v2120 = vsel %vm613, %v2119, 0
    %2122 = vmatprep.subr.mxu0 0.0
    %2123 = vmatpush1.msra.mxu0 %v69
    %2124 = vmatprep.subr.mxu0 0.0
    %2125 = vmatpush1.msra.mxu0 %v70
    %2126 = vmatprep.subr.mxu0 0.0
    %2127 = vmatpush1.msra.mxu0 %v71
    %2128 = vmatprep.subr.mxu0 0.0
    %2129 = vmatpush1.msra.mxu0 %v72
    %2130 = vmatprep.subr.mxu0 0.0
    %2131 = vmatpush1.msra.mxu0 %v73
    %2132 = vmatprep.subr.mxu0 0.0
    %2133 = vmatpush1.msra.mxu0 %v74
    %2134 = vmatprep.subr.mxu0 0.0
    %2135 = vmatpush1.msra.mxu0 %v75
    %2136 = vmatprep.subr.mxu0 0.0
    %2137 = vmatpush1.msra.mxu0 %v76
    %2138 = vmatprep.subr.mxu0 0.0
    %2139 = vmatpush1.msra.mxu0 0.0
    %2140 = vmatprep.subr.mxu0 0.0
    %2141 = vmatpush1.msra.mxu0 0.0
    %2142 = vmatprep.subr.mxu0 0.0
    %2143 = vmatpush1.msra.mxu0 0.0
    %2144 = vmatprep.subr.mxu0 0.0
    %2145 = vmatpush1.msra.mxu0 0.0
    %2146 = vmatprep.subr.mxu0 0.0
    %2147 = vmatpush1.msra.mxu0 0.0
    %2148 = vmatprep.subr.mxu0 0.0
    %2149 = vmatpush1.msra.mxu0 0.0
    %2150 = vmatprep.subr.mxu0 0.0
    %2151 = vmatpush1.msra.mxu0 0.0
    %2152 = vmatprep.subr.mxu0 0.0
    %2153 = vmatpush1.msra.mxu0 0.0
    %2154 = vmatprep.subr.mxu0 0.0
    %2155 = vmatpush1.msra.mxu0 0.0
    %2156 = vmatprep.subr.mxu0 0.0
    %2157 = vmatpush1.msra.mxu0 0.0
    %2158 = vmatprep.subr.mxu0 0.0
    %2159 = vmatpush1.msra.mxu0 0.0
    %2160 = vmatprep.subr.mxu0 0.0
    %2161 = vmatpush1.msra.mxu0 0.0
    %2162 = vmatprep.subr.mxu0 0.0
    %2163 = vmatpush1.msra.mxu0 0.0
    %2164 = vmatprep.subr.mxu0 0.0
    %2165 = vmatpush1.msra.mxu0 0.0
    %2166 = vmatprep.subr.mxu0 0.0
    %2167 = vmatpush1.msra.mxu0 0.0
    %2168 = vmatprep.subr.mxu0 0.0
    %2169 = vmatpush1.msra.mxu0 0.0
    %2170 = vmatprep.subr.mxu0 0.0
    %2171 = vmatpush1.msra.mxu0 0.0
    %2172 = vmatprep.subr.mxu0 0.0
    %2173 = vmatpush1.msra.mxu0 0.0
    %2174 = vmatprep.subr.mxu0 0.0
    %2175 = vmatpush1.msra.mxu0 0.0
    %2176 = vmatprep.subr.mxu0 0.0
    %2177 = vmatpush1.msra.mxu0 0.0
    %2178 = vmatprep.subr.mxu0 0.0
    %2179 = vmatpush1.msra.mxu0 0.0
    %2180 = vmatprep.subr.mxu0 0.0
    %2181 = vmatpush1.msra.mxu0 0.0
    %2182 = vmatprep.subr.mxu0 0.0
    %2183 = vmatpush1.msra.mxu0 0.0
    %2184 = vmatprep.subr.mxu0 0.0
    %2185 = vmatpush1.msra.mxu0 0.0
    %2186 = vmatprep.mubr.f32.mxu0 0.0
    %2187 = vmatmul.mubr.f32.gmra.mrb[0].mxu0 %v2120
    %v2188 = vpop.f32.mrb[0].mxu0
    %v2189 = vadd.f32 %v612, %v2188
    %v2190 = vpop.f32.mrb[0].mxu0
    %2191 = vdwg.mxu0
    %v2192 = vtanh.pop %v2189
    %v2193 = vxor.u32 %v2189, 2147483648
    %v2194 = vmul.f32 %v2193, 1.442695
    %v2195 = vpow.pop %v2194
    %v2196 = vadd.f32 %v2195, 1.0
    %v2197 = vrcp.pop %v2196
    %v2198 = vmul.f32 1.0, %v2197
    %v2199 = vsel %vm491, %v2192, %v2198
    %v2200 = vmul.f32 %v2199, %v1994
    %2202 = vrot.lane.b32.xlu0 %v2199, 64
    %v2203 = vpop.permute.xlu0 %2202
    %v2205 = vmul.f32 %v2199, %v2203
    %2207 = vrot.lane.b32.xlu0 %v2205, 32
    %v2208 = vpop.permute.xlu0 %2207
    %v2210 = vadd.f32 %v2200, %v2208
    %v2211 = vtanh.pop %v2210
    %2213 = vrot.lane.b32.xlu0 %v2211, 64
    %v2214 = vpop.permute.xlu0 %2213
    %v2216 = vmul.f32 %v2199, %v2214
    %v2217 = vrot.slane %v2107, 6
    %v2220 = vrot.slane %v2216, 6
    %v2223 = vrot.slane %v2101, 2
    %2224 = vrot.lane.b32.xlu0 %v2223, 64
    %v2225 = vpop.permute.xlu0 %2224
    %v2228 = vrot.slane %v2210, 2
    %2229 = vrot.lane.b32.xlu0 %v2228, 64
    %v2230 = vpop.permute.xlu0 %2229
    %v2232 = vsel %vm402, %v2217, %v2220
    %v2233 = vsel %vm191, %v2232, %v2225
    %vm2234 = vcmask 1045504
    %v2235 = vsel %vm2234, %v2233, %v2230
    %2237 = vrot.lane.b32.xlu0 %v2235, 32
    %v2238 = vpop.permute.xlu0 %2237
    %2240 = vst.msk [vmem:[%s10] sm:$0xff] %vm496, %v2238
    %v2241 = vrot.slane %v928, 6
    %v2243 = vrot.slane %v1144, 4
    %v2245 = vrot.slane %v1360, 2
    %v2247 = vrot.slane %v1784, 6
    %v2249 = vrot.slane %v2000, 4
    %v2251 = vrot.slane %v2216, 2
    %v2253 = vsel %vm402, %v715, %v2241
    %v2254 = vsel %vm191, %v2253, %v2243
    %v2255 = vsel %vm2234, %v2254, %v2245
    %v2256 = vsel %vm402, %v1571, %v2247
    %v2257 = vsel %vm191, %v2256, %v2249
    %v2258 = vsel %vm2234, %v2257, %v2251
    %2261 = vrot.lane.b32.xlu0 %v2255, 32
    %v2262 = vpop.permute.xlu0 %2261
    %2263 = vrot.lane.b32.xlu0 %v2258, 32
    %v2264 = vpop.permute.xlu0 %2263
    %v2265 = vsel %vm496, %v2262, 0
    %v2267 = vsel %vm496, %v2264, 0
    %v2270 = vsel %vm496, %v169, 0
    %v2273 = vsel %vm496, %v174, 0
    %2275 = vmatprep.subr.mxu0 0.0
    %2276 = vmatpush1.xpose.msra.mxu0 %v2270
    %2277 = vmatprep.subr.mxu0 0.0
    %2278 = vmatpush1.xpose.msra.mxu0 %v2273
    %2279 = vmatprep.subr.mxu0 0.0
    %2280 = vmatpush1.xpose.msra.mxu0 0.0
    %2281 = vmatprep.subr.mxu0 0.0
    %2282 = vmatpush1.xpose.msra.mxu0 0.0
    %2283 = vmatprep.subr.mxu0 0.0
    %2284 = vmatpush1.xpose.msra.mxu0 0.0
    %2285 = vmatprep.subr.mxu0 0.0
    %2286 = vmatpush1.xpose.msra.mxu0 0.0
    %2287 = vmatprep.subr.mxu0 0.0
    %2288 = vmatpush1.xpose.msra.mxu0 0.0
    %2289 = vmatprep.subr.mxu0 0.0
    %2290 = vmatpush1.xpose.msra.mxu0 0.0
    %2291 = vmatprep.subr.mxu0 0.0
    %2292 = vmatpush1.xpose.msra.mxu0 0.0
    %2293 = vmatprep.subr.mxu0 0.0
    %2294 = vmatpush1.xpose.msra.mxu0 0.0
    %2295 = vmatprep.subr.mxu0 0.0
    %2296 = vmatpush1.xpose.msra.mxu0 0.0
    %2297 = vmatprep.subr.mxu0 0.0
    %2298 = vmatpush1.xpose.msra.mxu0 0.0
    %2299 = vmatprep.subr.mxu0 0.0
    %2300 = vmatpush1.xpose.msra.mxu0 0.0
    %2301 = vmatprep.subr.mxu0 0.0
    %2302 = vmatpush1.xpose.msra.mxu0 0.0
    %2303 = vmatprep.subr.mxu0 0.0
    %2304 = vmatpush1.xpose.msra.mxu0 0.0
    %2305 = vmatprep.subr.mxu0 0.0
    %2306 = vmatpush1.xpose.msra.mxu0 0.0
    %2307 = vmatprep.subr.mxu0 0.0
    %2308 = vmatpush1.xpose.msra.mxu0 0.0
    %2309 = vmatprep.subr.mxu0 0.0
    %2310 = vmatpush1.xpose.msra.mxu0 0.0
    %2311 = vmatprep.subr.mxu0 0.0
    %2312 = vmatpush1.xpose.msra.mxu0 0.0
    %2313 = vmatprep.subr.mxu0 0.0
    %2314 = vmatpush1.xpose.msra.mxu0 0.0
    %2315 = vmatprep.subr.mxu0 0.0
    %2316 = vmatpush1.xpose.msra.mxu0 0.0
    %2317 = vmatprep.subr.mxu0 0.0
    %2318 = vmatpush1.xpose.msra.mxu0 0.0
    %2319 = vmatprep.subr.mxu0 0.0
    %2320 = vmatpush1.xpose.msra.mxu0 0.0
    %2321 = vmatprep.subr.mxu0 0.0
    %2322 = vmatpush1.xpose.msra.mxu0 0.0
    %2323 = vmatprep.subr.mxu0 0.0
    %2324 = vmatpush1.xpose.msra.mxu0 0.0
    %2325 = vmatprep.subr.mxu0 0.0
    %2326 = vmatpush1.xpose.msra.mxu0 0.0
    %2327 = vmatprep.subr.mxu0 0.0
    %2328 = vmatpush1.xpose.msra.mxu0 0.0
    %2329 = vmatprep.subr.mxu0 0.0
    %2330 = vmatpush1.xpose.msra.mxu0 0.0
    %2331 = vmatprep.subr.mxu0 0.0
    %2332 = vmatpush1.xpose.msra.mxu0 0.0
    %2333 = vmatprep.subr.mxu0 0.0
    %2334 = vmatpush1.xpose.msra.mxu0 0.0
    %2335 = vmatprep.subr.mxu0 0.0
    %2336 = vmatpush1.xpose.msra.mxu0 0.0
    %2337 = vmatprep.subr.mxu0 0.0
    %2338 = vmatpush1.xpose.msra.mxu0 0.0
    %2339 = vmatprep.mubr.f32.mxu0 0.0
    %2340 = vmatmul.mubr.f32.gmra.mrb[0].mxu0 %v2265
    %v2341 = vpop.f32.mrb[0].mxu0
    %v2342 = vadd.f32 0.0, %v2341
    %v2343 = vpop.f32.mrb[0].mxu0
    %2344 = vmatprep.mubr.f32.mxu0 0.0
    %2345 = vmatmul.mubr.f32.gmra.mrb[0].mxu0 %v2267
    %v2346 = vpop.f32.mrb[0].mxu0
    %v2347 = vadd.f32 0.0, %v2346
    %v2348 = vpop.f32.mrb[0].mxu0
    %2349 = vdwg.mxu0
    %v2350 = vlaneseq
    %v2351 = vshrl.u32 %v2350, 7
    %v2352 = vadd.s32 %v2351, 8
    %vm2353 = vcmp.lt.s32.totalorder %v2351, 0
    %v2354 = vsub.s32 0, %v2351
    %v2355 = vsel %vm2353, %v2354, %v2351
    %v2356 = vshrl.u32 %v2355, 1
    %v2357 = vand.u32 %v2355, 1
    %v2358 = vsub.s32 0, %v2357
    %v2359 = vsel %vm2353, %v2358, %v2357
    %vm2360 = vcmp.lt.s32.totalorder %v2352, 0
    %v2361 = vsub.s32 0, %v2352
    %v2362 = vsel %vm2360, %v2361, %v2352
    %v2363 = vshrl.u32 %v2362, 1
    %v2364 = vand.u32 %v2362, 1
    %v2365 = vsub.s32 0, %v2364
    %v2366 = vsel %vm2360, %v2365, %v2364
    %vm2367 = vcmp.ne.s32.totalorder %v2359, 0
    %vm2368 = vcmp.ne.s32.totalorder %v2366, 0
    %vm2369 = vcmp.lt.s32.totalorder %v2359, 0
    %vm2370 = vcmp.lt.s32.totalorder %v2366, 0
    %vm2371 = vmand %vm2369, %vm2367
    %vm2372 = vmand %vm2370, %vm2368
    %v2373 = vadd.s32 %v2359, 2
    %v2374 = vadd.s32 %v2366, 2
    %v2375 = vsel %vm2371, %v2373, %v2359
    %v2376 = vsel %vm2372, %v2374, %v2366
    %vm2377 = vcmp.lt.s32.totalorder %v362, 0
    %v2378 = vsub.s32 0, %v362
    %v2379 = vsel %vm2377, %v2378, %v362
    %v2380 = vshrl.u32 %v2379, 1
    %v2381 = vand.u32 %v2379, 1
    %v2382 = vsub.s32 0, %v2381
    %v2383 = vsel %vm2377, %v2382, %v2381
    %vm2384 = vcmp.ne.s32.totalorder %v2383, 0
    %vm2385 = vcmp.lt.s32.totalorder %v2383, 0
    %vm2386 = vmand %vm2385, %vm2384
    %v2387 = vadd.s32 %v2383, 2
    %v2388 = vsel %vm2386, %v2387, %v2383
    %vm2389 = vcmp.eq.s32.totalorder %v2375, %v2388
    %vm2390 = vcmp.eq.s32.totalorder %v2376, %v2388
    %v2391 = vsel %vm2389, %v2342, -inf
    %v2392 = vsel %vm2390, %v2347, -inf
    %v2393 = vsel %vm184, %v2391, -inf
    %2394 = vmax.xlane.f32.xlu0 %v2393
    %v2395 = vpop.xlane.xlu0 %2394
    %v2396 = vsel %vm184, %v2392, -inf
    %2397 = vmax.xlane.f32.xlu0 %v2396
    %v2398 = vpop.xlane.xlu0 %2397
    %v2399 = vsub.f32 %v2391, %v2395
    %v2400 = vsub.f32 %v2392, %v2398
    %v2401 = vmul.f32 %v2399, 1.442695
    %v2402 = vpow.pop %v2401
    %v2403 = vmul.f32 %v2400, 1.442695
    %v2404 = vpow.pop %v2403
    %v2405 = vsel %vm184, %v2402, 0.0
    %2406 = vadd.xlane.f32.xlu0 %v2405
    %v2407 = vpop.xlane.xlu0 %2406
    %v2408 = vsel %vm184, %v2404, 0.0
    %2409 = vadd.xlane.f32.xlu0 %v2408
    %v2410 = vpop.xlane.xlu0 %2409
    %v2411 = vrcp.pop %v2407
    %v2412 = vrcp.pop %v2410
    %v2413 = vmul.f32 %v2402, %v2411
    %v2414 = vmul.f32 %v2404, %v2412
    %v2416 = vsel %vm184, %v2413, 0
    %v2419 = vsel %vm184, %v2414, 0
    %v2421 = vsel %vm191, %v83, 0
    %2423 = vmatprep.subr.mxu0 0.0
    %2424 = vmatpush1.msra.mxu0 %v82
    %2425 = vmatprep.subr.mxu0 0.0
    %2426 = vmatpush1.msra.mxu0 %v2421
    %2427 = vmatprep.subr.mxu0 0.0
    %2428 = vmatpush1.msra.mxu0 0.0
    %2429 = vmatprep.subr.mxu0 0.0
    %2430 = vmatpush1.msra.mxu0 0.0
    %2431 = vmatprep.subr.mxu0 0.0
    %2432 = vmatpush1.msra.mxu0 0.0
    %2433 = vmatprep.subr.mxu0 0.0
    %2434 = vmatpush1.msra.mxu0 0.0
    %2435 = vmatprep.subr.mxu0 0.0
    %2436 = vmatpush1.msra.mxu0 0.0
    %2437 = vmatprep.subr.mxu0 0.0
    %2438 = vmatpush1.msra.mxu0 0.0
    %2439 = vmatprep.subr.mxu0 0.0
    %2440 = vmatpush1.msra.mxu0 0.0
    %2441 = vmatprep.subr.mxu0 0.0
    %2442 = vmatpush1.msra.mxu0 0.0
    %2443 = vmatprep.subr.mxu0 0.0
    %2444 = vmatpush1.msra.mxu0 0.0
    %2445 = vmatprep.subr.mxu0 0.0
    %2446 = vmatpush1.msra.mxu0 0.0
    %2447 = vmatprep.subr.mxu0 0.0
    %2448 = vmatpush1.msra.mxu0 0.0
    %2449 = vmatprep.subr.mxu0 0.0
    %2450 = vmatpush1.msra.mxu0 0.0
    %2451 = vmatprep.subr.mxu0 0.0
    %2452 = vmatpush1.msra.mxu0 0.0
    %2453 = vmatprep.subr.mxu0 0.0
    %2454 = vmatpush1.msra.mxu0 0.0
    %2455 = vmatprep.subr.mxu0 0.0
    %2456 = vmatpush1.msra.mxu0 0.0
    %2457 = vmatprep.subr.mxu0 0.0
    %2458 = vmatpush1.msra.mxu0 0.0
    %2459 = vmatprep.subr.mxu0 0.0
    %2460 = vmatpush1.msra.mxu0 0.0
    %2461 = vmatprep.subr.mxu0 0.0
    %2462 = vmatpush1.msra.mxu0 0.0
    %2463 = vmatprep.subr.mxu0 0.0
    %2464 = vmatpush1.msra.mxu0 0.0
    %2465 = vmatprep.subr.mxu0 0.0
    %2466 = vmatpush1.msra.mxu0 0.0
    %2467 = vmatprep.subr.mxu0 0.0
    %2468 = vmatpush1.msra.mxu0 0.0
    %2469 = vmatprep.subr.mxu0 0.0
    %2470 = vmatpush1.msra.mxu0 0.0
    %2471 = vmatprep.subr.mxu0 0.0
    %2472 = vmatpush1.msra.mxu0 0.0
    %2473 = vmatprep.subr.mxu0 0.0
    %2474 = vmatpush1.msra.mxu0 0.0
    %2475 = vmatprep.subr.mxu0 0.0
    %2476 = vmatpush1.msra.mxu0 0.0
    %2477 = vmatprep.subr.mxu0 0.0
    %2478 = vmatpush1.msra.mxu0 0.0
    %2479 = vmatprep.subr.mxu0 0.0
    %2480 = vmatpush1.msra.mxu0 0.0
    %2481 = vmatprep.subr.mxu0 0.0
    %2482 = vmatpush1.msra.mxu0 0.0
    %2483 = vmatprep.subr.mxu0 0.0
    %2484 = vmatpush1.msra.mxu0 0.0
    %2485 = vmatprep.subr.mxu0 0.0
    %2486 = vmatpush1.msra.mxu0 0.0
    %2487 = vmatprep.mubr.f32.mxu0 0.0
    %2488 = vmatmul.mubr.f32.gmra.mrb[0].mxu0 %v2416
    %v2489 = vpop.f32.mrb[0].mxu0
    %v2490 = vadd.f32 0.0, %v2489
    %v2491 = vpop.f32.mrb[0].mxu0
    %2492 = vmatprep.mubr.f32.mxu0 0.0
    %2493 = vmatmul.mubr.f32.gmra.mrb[0].mxu0 %v2419
    %v2494 = vpop.f32.mrb[0].mxu0
    %v2495 = vadd.f32 0.0, %v2494
    %v2496 = vpop.f32.mrb[0].mxu0
    %2497 = vdwg.mxu0
    %v2499 = vsel %vm496, %v262, 0
    %v2502 = vsel %vm496, %v267, 0
    %2504 = vmatprep.subr.mxu0 0.0
    %2505 = vmatpush1.xpose.msra.mxu0 %v2499
    %2506 = vmatprep.subr.mxu0 0.0
    %2507 = vmatpush1.xpose.msra.mxu0 %v2502
    %2508 = vmatprep.subr.mxu0 0.0
    %2509 = vmatpush1.xpose.msra.mxu0 0.0
    %2510 = vmatprep.subr.mxu0 0.0
    %2511 = vmatpush1.xpose.msra.mxu0 0.0
    %2512 = vmatprep.subr.mxu0 0.0
    %2513 = vmatpush1.xpose.msra.mxu0 0.0
    %2514 = vmatprep.subr.mxu0 0.0
    %2515 = vmatpush1.xpose.msra.mxu0 0.0
    %2516 = vmatprep.subr.mxu0 0.0
    %2517 = vmatpush1.xpose.msra.mxu0 0.0
    %2518 = vmatprep.subr.mxu0 0.0
    %2519 = vmatpush1.xpose.msra.mxu0 0.0
    %2520 = vmatprep.subr.mxu0 0.0
    %2521 = vmatpush1.xpose.msra.mxu0 0.0
    %2522 = vmatprep.subr.mxu0 0.0
    %2523 = vmatpush1.xpose.msra.mxu0 0.0
    %2524 = vmatprep.subr.mxu0 0.0
    %2525 = vmatpush1.xpose.msra.mxu0 0.0
    %2526 = vmatprep.subr.mxu0 0.0
    %2527 = vmatpush1.xpose.msra.mxu0 0.0
    %2528 = vmatprep.subr.mxu0 0.0
    %2529 = vmatpush1.xpose.msra.mxu0 0.0
    %2530 = vmatprep.subr.mxu0 0.0
    %2531 = vmatpush1.xpose.msra.mxu0 0.0
    %2532 = vmatprep.subr.mxu0 0.0
    %2533 = vmatpush1.xpose.msra.mxu0 0.0
    %2534 = vmatprep.subr.mxu0 0.0
    %2535 = vmatpush1.xpose.msra.mxu0 0.0
    %2536 = vmatprep.subr.mxu0 0.0
    %2537 = vmatpush1.xpose.msra.mxu0 0.0
    %2538 = vmatprep.subr.mxu0 0.0
    %2539 = vmatpush1.xpose.msra.mxu0 0.0
    %2540 = vmatprep.subr.mxu0 0.0
    %2541 = vmatpush1.xpose.msra.mxu0 0.0
    %2542 = vmatprep.subr.mxu0 0.0
    %2543 = vmatpush1.xpose.msra.mxu0 0.0
    %2544 = vmatprep.subr.mxu0 0.0
    %2545 = vmatpush1.xpose.msra.mxu0 0.0
    %2546 = vmatprep.subr.mxu0 0.0
    %2547 = vmatpush1.xpose.msra.mxu0 0.0
    %2548 = vmatprep.subr.mxu0 0.0
    %2549 = vmatpush1.xpose.msra.mxu0 0.0
    %2550 = vmatprep.subr.mxu0 0.0
    %2551 = vmatpush1.xpose.msra.mxu0 0.0
    %2552 = vmatprep.subr.mxu0 0.0
    %2553 = vmatpush1.xpose.msra.mxu0 0.0
    %2554 = vmatprep.subr.mxu0 0.0
    %2555 = vmatpush1.xpose.msra.mxu0 0.0
    %2556 = vmatprep.subr.mxu0 0.0
    %2557 = vmatpush1.xpose.msra.mxu0 0.0
    %2558 = vmatprep.subr.mxu0 0.0
    %2559 = vmatpush1.xpose.msra.mxu0 0.0
    %2560 = vmatprep.subr.mxu0 0.0
    %2561 = vmatpush1.xpose.msra.mxu0 0.0
    %2562 = vmatprep.subr.mxu0 0.0
    %2563 = vmatpush1.xpose.msra.mxu0 0.0
    %2564 = vmatprep.subr.mxu0 0.0
    %2565 = vmatpush1.xpose.msra.mxu0 0.0
    %2566 = vmatprep.subr.mxu0 0.0
    %2567 = vmatpush1.xpose.msra.mxu0 0.0
    %2568 = vmatprep.mubr.f32.mxu0 0.0
    %2569 = vmatmul.mubr.f32.gmra.mrb[0].mxu0 %v2265
    %v2570 = vpop.f32.mrb[0].mxu0
    %v2571 = vadd.f32 0.0, %v2570
    %v2572 = vpop.f32.mrb[0].mxu0
    %2573 = vmatprep.mubr.f32.mxu0 0.0
    %2574 = vmatmul.mubr.f32.gmra.mrb[0].mxu0 %v2267
    %v2575 = vpop.f32.mrb[0].mxu0
    %v2576 = vadd.f32 0.0, %v2575
    %v2577 = vpop.f32.mrb[0].mxu0
    %2578 = vdwg.mxu0
    %v2579 = vsel %vm2389, %v2571, -inf
    %v2580 = vsel %vm2390, %v2576, -inf
    %v2581 = vsel %vm395, %v2579, -inf
    %2582 = vmax.xlane.f32.xlu0 %v2581
    %v2583 = vpop.xlane.xlu0 %2582
    %v2584 = vsel %vm395, %v2580, -inf
    %2585 = vmax.xlane.f32.xlu0 %v2584
    %v2586 = vpop.xlane.xlu0 %2585
    %v2587 = vsub.f32 %v2579, %v2583
    %v2588 = vsub.f32 %v2580, %v2586
    %v2589 = vmul.f32 %v2587, 1.442695
    %v2590 = vpow.pop %v2589
    %v2591 = vmul.f32 %v2588, 1.442695
    %v2592 = vpow.pop %v2591
    %v2593 = vsel %vm395, %v2590, 0.0
    %2594 = vadd.xlane.f32.xlu0 %v2593
    %v2595 = vpop.xlane.xlu0 %2594
    %v2596 = vsel %vm395, %v2592, 0.0
    %2597 = vadd.xlane.f32.xlu0 %v2596
    %v2598 = vpop.xlane.xlu0 %2597
    %v2599 = vrcp.pop %v2595
    %v2600 = vrcp.pop %v2598
    %v2601 = vmul.f32 %v2590, %v2599
    %v2602 = vmul.f32 %v2592, %v2600
    %v2604 = vsel %vm395, %v2601, 0
    %v2607 = vsel %vm395, %v2602, 0
    %v2609 = vsel %vm402, %v85, 0
    %2611 = vmatprep.subr.mxu0 0.0
    %2612 = vmatpush1.msra.mxu0 %v84
    %2613 = vmatprep.subr.mxu0 0.0
    %2614 = vmatpush1.msra.mxu0 %v2609
    %2615 = vmatprep.subr.mxu0 0.0
    %2616 = vmatpush1.msra.mxu0 0.0
    %2617 = vmatprep.subr.mxu0 0.0
    %2618 = vmatpush1.msra.mxu0 0.0
    %2619 = vmatprep.subr.mxu0 0.0
    %2620 = vmatpush1.msra.mxu0 0.0
    %2621 = vmatprep.subr.mxu0 0.0
    %2622 = vmatpush1.msra.mxu0 0.0
    %2623 = vmatprep.subr.mxu0 0.0
    %2624 = vmatpush1.msra.mxu0 0.0
    %2625 = vmatprep.subr.mxu0 0.0
    %2626 = vmatpush1.msra.mxu0 0.0
    %2627 = vmatprep.subr.mxu0 0.0
    %2628 = vmatpush1.msra.mxu0 0.0
    %2629 = vmatprep.subr.mxu0 0.0
    %2630 = vmatpush1.msra.mxu0 0.0
    %2631 = vmatprep.subr.mxu0 0.0
    %2632 = vmatpush1.msra.mxu0 0.0
    %2633 = vmatprep.subr.mxu0 0.0
    %2634 = vmatpush1.msra.mxu0 0.0
    %2635 = vmatprep.subr.mxu0 0.0
    %2636 = vmatpush1.msra.mxu0 0.0
    %2637 = vmatprep.subr.mxu0 0.0
    %2638 = vmatpush1.msra.mxu0 0.0
    %2639 = vmatprep.subr.mxu0 0.0
    %2640 = vmatpush1.msra.mxu0 0.0
    %2641 = vmatprep.subr.mxu0 0.0
    %2642 = vmatpush1.msra.mxu0 0.0
    %2643 = vmatprep.subr.mxu0 0.0
    %2644 = vmatpush1.msra.mxu0 0.0
    %2645 = vmatprep.subr.mxu0 0.0
    %2646 = vmatpush1.msra.mxu0 0.0
    %2647 = vmatprep.subr.mxu0 0.0
    %2648 = vmatpush1.msra.mxu0 0.0
    %2649 = vmatprep.subr.mxu0 0.0
    %2650 = vmatpush1.msra.mxu0 0.0
    %2651 = vmatprep.subr.mxu0 0.0
    %2652 = vmatpush1.msra.mxu0 0.0
    %2653 = vmatprep.subr.mxu0 0.0
    %2654 = vmatpush1.msra.mxu0 0.0
    %2655 = vmatprep.subr.mxu0 0.0
    %2656 = vmatpush1.msra.mxu0 0.0
    %2657 = vmatprep.subr.mxu0 0.0
    %2658 = vmatpush1.msra.mxu0 0.0
    %2659 = vmatprep.subr.mxu0 0.0
    %2660 = vmatpush1.msra.mxu0 0.0
    %2661 = vmatprep.subr.mxu0 0.0
    %2662 = vmatpush1.msra.mxu0 0.0
    %2663 = vmatprep.subr.mxu0 0.0
    %2664 = vmatpush1.msra.mxu0 0.0
    %2665 = vmatprep.subr.mxu0 0.0
    %2666 = vmatpush1.msra.mxu0 0.0
    %2667 = vmatprep.subr.mxu0 0.0
    %2668 = vmatpush1.msra.mxu0 0.0
    %2669 = vmatprep.subr.mxu0 0.0
    %2670 = vmatpush1.msra.mxu0 0.0
    %2671 = vmatprep.subr.mxu0 0.0
    %2672 = vmatpush1.msra.mxu0 0.0
    %2673 = vmatprep.subr.mxu0 0.0
    %2674 = vmatpush1.msra.mxu0 0.0
    %2675 = vmatprep.mubr.f32.mxu0 0.0
    %2676 = vmatmul.mubr.f32.gmra.mrb[0].mxu0 %v2604
    %v2677 = vpop.f32.mrb[0].mxu0
    %v2678 = vadd.f32 0.0, %v2677
    %v2679 = vpop.f32.mrb[0].mxu0
    %2680 = vmatprep.mubr.f32.mxu0 0.0
    %2681 = vmatmul.mubr.f32.gmra.mrb[0].mxu0 %v2607
    %v2682 = vpop.f32.mrb[0].mxu0
    %v2683 = vadd.f32 0.0, %v2682
    %v2684 = vpop.f32.mrb[0].mxu0
    %2685 = vdwg.mxu0
    %v2687 = vsel %vm496, %v353, 0
    %v2690 = vsel %vm496, %v358, 0
    %2692 = vmatprep.subr.mxu0 0.0
    %2693 = vmatpush1.xpose.msra.mxu0 %v2687
    %2694 = vmatprep.subr.mxu0 0.0
    %2695 = vmatpush1.xpose.msra.mxu0 %v2690
    %2696 = vmatprep.subr.mxu0 0.0
    %2697 = vmatpush1.xpose.msra.mxu0 0.0
    %2698 = vmatprep.subr.mxu0 0.0
    %2699 = vmatpush1.xpose.msra.mxu0 0.0
    %2700 = vmatprep.subr.mxu0 0.0
    %2701 = vmatpush1.xpose.msra.mxu0 0.0
    %2702 = vmatprep.subr.mxu0 0.0
    %2703 = vmatpush1.xpose.msra.mxu0 0.0
    %2704 = vmatprep.subr.mxu0 0.0
    %2705 = vmatpush1.xpose.msra.mxu0 0.0
    %2706 = vmatprep.subr.mxu0 0.0
    %2707 = vmatpush1.xpose.msra.mxu0 0.0
    %2708 = vmatprep.subr.mxu0 0.0
    %2709 = vmatpush1.xpose.msra.mxu0 0.0
    %2710 = vmatprep.subr.mxu0 0.0
    %2711 = vmatpush1.xpose.msra.mxu0 0.0
    %2712 = vmatprep.subr.mxu0 0.0
    %2713 = vmatpush1.xpose.msra.mxu0 0.0
    %2714 = vmatprep.subr.mxu0 0.0
    %2715 = vmatpush1.xpose.msra.mxu0 0.0
    %2716 = vmatprep.subr.mxu0 0.0
    %2717 = vmatpush1.xpose.msra.mxu0 0.0
    %2718 = vmatprep.subr.mxu0 0.0
    %2719 = vmatpush1.xpose.msra.mxu0 0.0
    %2720 = vmatprep.subr.mxu0 0.0
    %2721 = vmatpush1.xpose.msra.mxu0 0.0
    %2722 = vmatprep.subr.mxu0 0.0
    %2723 = vmatpush1.xpose.msra.mxu0 0.0
    %2724 = vmatprep.subr.mxu0 0.0
    %2725 = vmatpush1.xpose.msra.mxu0 0.0
    %2726 = vmatprep.subr.mxu0 0.0
    %2727 = vmatpush1.xpose.msra.mxu0 0.0
    %2728 = vmatprep.subr.mxu0 0.0
    %2729 = vmatpush1.xpose.msra.mxu0 0.0
    %2730 = vmatprep.subr.mxu0 0.0
    %2731 = vmatpush1.xpose.msra.mxu0 0.0
    %2732 = vmatprep.subr.mxu0 0.0
    %2733 = vmatpush1.xpose.msra.mxu0 0.0
    %2734 = vmatprep.subr.mxu0 0.0
    %2735 = vmatpush1.xpose.msra.mxu0 0.0
    %2736 = vmatprep.subr.mxu0 0.0
    %2737 = vmatpush1.xpose.msra.mxu0 0.0
    %2738 = vmatprep.subr.mxu0 0.0
    %2739 = vmatpush1.xpose.msra.mxu0 0.0
    %2740 = vmatprep.subr.mxu0 0.0
    %2741 = vmatpush1.xpose.msra.mxu0 0.0
    %2742 = vmatprep.subr.mxu0 0.0
    %2743 = vmatpush1.xpose.msra.mxu0 0.0
    %2744 = vmatprep.subr.mxu0 0.0
    %2745 = vmatpush1.xpose.msra.mxu0 0.0
    %2746 = vmatprep.subr.mxu0 0.0
    %2747 = vmatpush1.xpose.msra.mxu0 0.0
    %2748 = vmatprep.subr.mxu0 0.0
    %2749 = vmatpush1.xpose.msra.mxu0 0.0
    %2750 = vmatprep.subr.mxu0 0.0
    %2751 = vmatpush1.xpose.msra.mxu0 0.0
    %2752 = vmatprep.subr.mxu0 0.0
    %2753 = vmatpush1.xpose.msra.mxu0 0.0
    %2754 = vmatprep.subr.mxu0 0.0
    %2755 = vmatpush1.xpose.msra.mxu0 0.0
    %2756 = vmatprep.mubr.f32.mxu0 0.0
    %2757 = vmatmul.mubr.f32.gmra.mrb[0].mxu0 %v2265
    %v2758 = vpop.f32.mrb[0].mxu0
    %v2759 = vadd.f32 0.0, %v2758
    %v2760 = vpop.f32.mrb[0].mxu0
    %2761 = vmatprep.mubr.f32.mxu0 0.0
    %2762 = vmatmul.mubr.f32.gmra.mrb[0].mxu0 %v2267
    %v2763 = vpop.f32.mrb[0].mxu0
    %v2764 = vadd.f32 0.0, %v2763
    %v2765 = vpop.f32.mrb[0].mxu0
    %2766 = vdwg.mxu0
    %v2767 = vsel %vm2389, %v2759, -inf
    %v2768 = vsel %vm2390, %v2764, -inf
    %v2769 = vsel %vm395, %v2767, -inf
    %2770 = vmax.xlane.f32.xlu0 %v2769
    %v2771 = vpop.xlane.xlu0 %2770
    %v2772 = vsel %vm395, %v2768, -inf
    %2773 = vmax.xlane.f32.xlu0 %v2772
    %v2774 = vpop.xlane.xlu0 %2773
    %v2775 = vsub.f32 %v2767, %v2771
    %v2776 = vsub.f32 %v2768, %v2774
    %v2777 = vmul.f32 %v2775, 1.442695
    %v2778 = vpow.pop %v2777
    %v2779 = vmul.f32 %v2776, 1.442695
    %v2780 = vpow.pop %v2779
    %v2781 = vsel %vm395, %v2778, 0.0
    %2782 = vadd.xlane.f32.xlu0 %v2781
    %v2783 = vpop.xlane.xlu0 %2782
    %v2784 = vsel %vm395, %v2780, 0.0
    %2785 = vadd.xlane.f32.xlu0 %v2784
    %v2786 = vpop.xlane.xlu0 %2785
    %v2787 = vrcp.pop %v2783
    %v2788 = vrcp.pop %v2786
    %v2789 = vmul.f32 %v2778, %v2787
    %v2790 = vmul.f32 %v2780, %v2788
    %v2792 = vsel %vm395, %v2789, 0
    %v2795 = vsel %vm395, %v2790, 0
    %v2797 = vsel %vm402, %v87, 0
    %2799 = vmatprep.subr.mxu0 0.0
    %2800 = vmatpush1.msra.mxu0 %v86
    %2801 = vmatprep.subr.mxu0 0.0
    %2802 = vmatpush1.msra.mxu0 %v2797
    %2803 = vmatprep.subr.mxu0 0.0
    %2804 = vmatpush1.msra.mxu0 0.0
    %2805 = vmatprep.subr.mxu0 0.0
    %2806 = vmatpush1.msra.mxu0 0.0
    %2807 = vmatprep.subr.mxu0 0.0
    %2808 = vmatpush1.msra.mxu0 0.0
    %2809 = vmatprep.subr.mxu0 0.0
    %2810 = vmatpush1.msra.mxu0 0.0
    %2811 = vmatprep.subr.mxu0 0.0
    %2812 = vmatpush1.msra.mxu0 0.0
    %2813 = vmatprep.subr.mxu0 0.0
    %2814 = vmatpush1.msra.mxu0 0.0
    %2815 = vmatprep.subr.mxu0 0.0
    %2816 = vmatpush1.msra.mxu0 0.0
    %2817 = vmatprep.subr.mxu0 0.0
    %2818 = vmatpush1.msra.mxu0 0.0
    %2819 = vmatprep.subr.mxu0 0.0
    %2820 = vmatpush1.msra.mxu0 0.0
    %2821 = vmatprep.subr.mxu0 0.0
    %2822 = vmatpush1.msra.mxu0 0.0
    %2823 = vmatprep.subr.mxu0 0.0
    %2824 = vmatpush1.msra.mxu0 0.0
    %2825 = vmatprep.subr.mxu0 0.0
    %2826 = vmatpush1.msra.mxu0 0.0
    %2827 = vmatprep.subr.mxu0 0.0
    %2828 = vmatpush1.msra.mxu0 0.0
    %2829 = vmatprep.subr.mxu0 0.0
    %2830 = vmatpush1.msra.mxu0 0.0
    %2831 = vmatprep.subr.mxu0 0.0
    %2832 = vmatpush1.msra.mxu0 0.0
    %2833 = vmatprep.subr.mxu0 0.0
    %2834 = vmatpush1.msra.mxu0 0.0
    %2835 = vmatprep.subr.mxu0 0.0
    %2836 = vmatpush1.msra.mxu0 0.0
    %2837 = vmatprep.subr.mxu0 0.0
    %2838 = vmatpush1.msra.mxu0 0.0
    %2839 = vmatprep.subr.mxu0 0.0
    %2840 = vmatpush1.msra.mxu0 0.0
    %2841 = vmatprep.subr.mxu0 0.0
    %2842 = vmatpush1.msra.mxu0 0.0
    %2843 = vmatprep.subr.mxu0 0.0
    %2844 = vmatpush1.msra.mxu0 0.0
    %2845 = vmatprep.subr.mxu0 0.0
    %2846 = vmatpush1.msra.mxu0 0.0
    %2847 = vmatprep.subr.mxu0 0.0
    %2848 = vmatpush1.msra.mxu0 0.0
    %2849 = vmatprep.subr.mxu0 0.0
    %2850 = vmatpush1.msra.mxu0 0.0
    %2851 = vmatprep.subr.mxu0 0.0
    %2852 = vmatpush1.msra.mxu0 0.0
    %2853 = vmatprep.subr.mxu0 0.0
    %2854 = vmatpush1.msra.mxu0 0.0
    %2855 = vmatprep.subr.mxu0 0.0
    %2856 = vmatpush1.msra.mxu0 0.0
    %2857 = vmatprep.subr.mxu0 0.0
    %2858 = vmatpush1.msra.mxu0 0.0
    %2859 = vmatprep.subr.mxu0 0.0
    %2860 = vmatpush1.msra.mxu0 0.0
    %2861 = vmatprep.subr.mxu0 0.0
    %2862 = vmatpush1.msra.mxu0 0.0
    %2863 = vmatprep.mubr.f32.mxu0 0.0
    %2864 = vmatmul.mubr.f32.gmra.mrb[0].mxu0 %v2792
    %v2865 = vpop.f32.mrb[0].mxu0
    %v2866 = vadd.f32 0.0, %v2865
    %v2867 = vpop.f32.mrb[0].mxu0
    %2868 = vmatprep.mubr.f32.mxu0 0.0
    %2869 = vmatmul.mubr.f32.gmra.mrb[0].mxu0 %v2795
    %v2870 = vpop.f32.mrb[0].mxu0
    %v2871 = vadd.f32 0.0, %v2870
    %v2872 = vpop.f32.mrb[0].mxu0
    %2873 = vdwg.mxu0
    %v2874 = vld [vmem:[#allocation4 + $0x40] sm:$0xff]
    %v2875 = vld [vmem:[#allocation4 + $0x48] sm:$0xff]
    %v2876 = vld [vmem:[#allocation4 + $0xd8] sm:$0x1]
    %v2877 = vlaneseq
    %v2878 = vshrl.u32 %v2877, 7
    %v2879 = vsub.s32 0, %v2878
    %v2880 = vrot.slane %v2876, %v2879
    %v2882 = vsel %vm95, %v2490, 0
    %v2885 = vsel %vm95, %v2495, 0
    %2887 = vmatprep.subr.mxu0 0.0
    %2888 = vmatpush1.msra.mxu0 %v2874
    %2889 = vmatprep.subr.mxu0 0.0
    %2890 = vmatpush1.msra.mxu0 %v2875
    %2891 = vmatprep.subr.mxu0 0.0
    %2892 = vmatpush1.msra.mxu0 0.0
    %2893 = vmatprep.subr.mxu0 0.0
    %2894 = vmatpush1.msra.mxu0 0.0
    %2895 = vmatprep.subr.mxu0 0.0
    %2896 = vmatpush1.msra.mxu0 0.0
    %2897 = vmatprep.subr.mxu0 0.0
    %2898 = vmatpush1.msra.mxu0 0.0
    %2899 = vmatprep.subr.mxu0 0.0
    %2900 = vmatpush1.msra.mxu0 0.0
    %2901 = vmatprep.subr.mxu0 0.0
    %2902 = vmatpush1.msra.mxu0 0.0
    %2903 = vmatprep.subr.mxu0 0.0
    %2904 = vmatpush1.msra.mxu0 0.0
    %2905 = vmatprep.subr.mxu0 0.0
    %2906 = vmatpush1.msra.mxu0 0.0
    %2907 = vmatprep.subr.mxu0 0.0
    %2908 = vmatpush1.msra.mxu0 0.0
    %2909 = vmatprep.subr.mxu0 0.0
    %2910 = vmatpush1.msra.mxu0 0.0
    %2911 = vmatprep.subr.mxu0 0.0
    %2912 = vmatpush1.msra.mxu0 0.0
    %2913 = vmatprep.subr.mxu0 0.0
    %2914 = vmatpush1.msra.mxu0 0.0
    %2915 = vmatprep.subr.mxu0 0.0
    %2916 = vmatpush1.msra.mxu0 0.0
    %2917 = vmatprep.subr.mxu0 0.0
    %2918 = vmatpush1.msra.mxu0 0.0
    %2919 = vmatprep.subr.mxu0 0.0
    %2920 = vmatpush1.msra.mxu0 0.0
    %2921 = vmatprep.subr.mxu0 0.0
    %2922 = vmatpush1.msra.mxu0 0.0
    %2923 = vmatprep.subr.mxu0 0.0
    %2924 = vmatpush1.msra.mxu0 0.0
    %2925 = vmatprep.subr.mxu0 0.0
    %2926 = vmatpush1.msra.mxu0 0.0
    %2927 = vmatprep.subr.mxu0 0.0
    %2928 = vmatpush1.msra.mxu0 0.0
    %2929 = vmatprep.subr.mxu0 0.0
    %2930 = vmatpush1.msra.mxu0 0.0
    %2931 = vmatprep.subr.mxu0 0.0
    %2932 = vmatpush1.msra.mxu0 0.0
    %2933 = vmatprep.subr.mxu0 0.0
    %2934 = vmatpush1.msra.mxu0 0.0
    %2935 = vmatprep.subr.mxu0 0.0
    %2936 = vmatpush1.msra.mxu0 0.0
    %2937 = vmatprep.subr.mxu0 0.0
    %2938 = vmatpush1.msra.mxu0 0.0
    %2939 = vmatprep.subr.mxu0 0.0
    %2940 = vmatpush1.msra.mxu0 0.0
    %2941 = vmatprep.subr.mxu0 0.0
    %2942 = vmatpush1.msra.mxu0 0.0
    %2943 = vmatprep.subr.mxu0 0.0
    %2944 = vmatpush1.msra.mxu0 0.0
    %2945 = vmatprep.subr.mxu0 0.0
    %2946 = vmatpush1.msra.mxu0 0.0
    %2947 = vmatprep.subr.mxu0 0.0
    %2948 = vmatpush1.msra.mxu0 0.0
    %2949 = vmatprep.subr.mxu0 0.0
    %2950 = vmatpush1.msra.mxu0 0.0
    %2951 = vmatprep.mubr.f32.mxu0 0.0
    %2952 = vmatmul.mubr.f32.gmra.mrb[0].mxu0 %v2882
    %v2953 = vpop.f32.mrb[0].mxu0
    %v2954 = vadd.f32 %v2880, %v2953
    %v2955 = vpop.f32.mrb[0].mxu0
    %2956 = vmatprep.mubr.f32.mxu0 0.0
    %2957 = vmatmul.mubr.f32.gmra.mrb[0].mxu0 %v2885
    %v2958 = vpop.f32.mrb[0].mxu0
    %v2959 = vadd.f32 %v2880, %v2958
    %v2960 = vpop.f32.mrb[0].mxu0
    %2961 = vdwg.mxu0
    %v2962 = vmax.f32 %v2954, 0.0
    %v2963 = vmax.f32 %v2959, 0.0
    %v2964 = vld [vmem:[#allocation4 + $0x30] sm:$0xff]
    %v2965 = vld [vmem:[#allocation4 + $0x38] sm:$0xf]
    %v2966 = vld [vmem:[#allocation4 + $0xd0] sm:$0x1]
    %v2967 = vlaneseq
    %v2968 = vshrl.u32 %v2967, 7
    %v2969 = vsub.s32 0, %v2968
    %v2970 = vrot.slane %v2966, %v2969
    %v2972 = vsel %vm184, %v2962, 0
    %v2975 = vsel %vm184, %v2963, 0
    %v2978 = vsel %vm184, %v2678, 0
    %v2981 = vsel %vm184, %v2683, 0
    %v2984 = vsel %vm184, %v2866, 0
    %v2987 = vsel %vm184, %v2871, 0
    %v2990 = vsel %vm191, %v2965, 0
    %2992 = vmatprep.subr.mxu0 0.0
    %2993 = vmatpush1.msra.mxu0 %v2964
    %2994 = vmatprep.subr.mxu0 0.0
    %2995 = vmatpush1.msra.mxu0 %v2990
    %2996 = vmatprep.subr.mxu0 0.0
    %2997 = vmatpush1.msra.mxu0 0.0
    %2998 = vmatprep.subr.mxu0 0.0
    %2999 = vmatpush1.msra.mxu0 0.0
    %3000 = vmatprep.subr.mxu0 0.0
    %3001 = vmatpush1.msra.mxu0 0.0
    %3002 = vmatprep.subr.mxu0 0.0
    %3003 = vmatpush1.msra.mxu0 0.0
    %3004 = vmatprep.subr.mxu0 0.0
    %3005 = vmatpush1.msra.mxu0 0.0
    %3006 = vmatprep.subr.mxu0 0.0
    %3007 = vmatpush1.msra.mxu0 0.0
    %3008 = vmatprep.subr.mxu0 0.0
    %3009 = vmatpush1.msra.mxu0 0.0
    %3010 = vmatprep.subr.mxu0 0.0
    %3011 = vmatpush1.msra.mxu0 0.0
    %3012 = vmatprep.subr.mxu0 0.0
    %3013 = vmatpush1.msra.mxu0 0.0
    %3014 = vmatprep.subr.mxu0 0.0
    %3015 = vmatpush1.msra.mxu0 0.0
    %3016 = vmatprep.subr.mxu0 0.0
    %3017 = vmatpush1.msra.mxu0 0.0
    %3018 = vmatprep.subr.mxu0 0.0
    %3019 = vmatpush1.msra.mxu0 0.0
    %3020 = vmatprep.subr.mxu0 0.0
    %3021 = vmatpush1.msra.mxu0 0.0
    %3022 = vmatprep.subr.mxu0 0.0
    %3023 = vmatpush1.msra.mxu0 0.0
    %3024 = vmatprep.subr.mxu0 0.0
    %3025 = vmatpush1.msra.mxu0 0.0
    %3026 = vmatprep.subr.mxu0 0.0
    %3027 = vmatpush1.msra.mxu0 0.0
    %3028 = vmatprep.subr.mxu0 0.0
    %3029 = vmatpush1.msra.mxu0 0.0
    %3030 = vmatprep.subr.mxu0 0.0
    %3031 = vmatpush1.msra.mxu0 0.0
    %3032 = vmatprep.subr.mxu0 0.0
    %3033 = vmatpush1.msra.mxu0 0.0
    %3034 = vmatprep.subr.mxu0 0.0
    %3035 = vmatpush1.msra.mxu0 0.0
    %3036 = vmatprep.subr.mxu0 0.0
    %3037 = vmatpush1.msra.mxu0 0.0
    %3038 = vmatprep.subr.mxu0 0.0
    %3039 = vmatpush1.msra.mxu0 0.0
    %3040 = vmatprep.subr.mxu0 0.0
    %3041 = vmatpush1.msra.mxu0 0.0
    %3042 = vmatprep.subr.mxu0 0.0
    %3043 = vmatpush1.msra.mxu0 0.0
    %3044 = vmatprep.subr.mxu0 0.0
    %3045 = vmatpush1.msra.mxu0 0.0
    %3046 = vmatprep.subr.mxu0 0.0
    %3047 = vmatpush1.msra.mxu0 0.0
    %3048 = vmatprep.subr.mxu0 0.0
    %3049 = vmatpush1.msra.mxu0 0.0
    %3050 = vmatprep.subr.mxu0 0.0
    %3051 = vmatpush1.msra.mxu0 0.0
    %3052 = vmatprep.subr.mxu0 0.0
    %3053 = vmatpush1.msra.mxu0 0.0
    %3054 = vmatprep.subr.mxu0 0.0
    %3055 = vmatpush1.msra.mxu0 0.0
    %3056 = vmatprep.mubr.f32.mxu0 0.0
    %3057 = vmatmul.mubr.f32.gmra.mrb[0].mxu0 %v2972
    %v3058 = vpop.f32.mrb[0].mxu0
    %v3059 = vadd.f32 %v2970, %v3058
    %v3060 = vpop.f32.mrb[0].mxu0
    %3061 = vmatprep.mubr.f32.mxu0 0.0
    %3062 = vmatmul.mubr.f32.gmra.mrb[0].mxu0 %v2975
    %v3063 = vpop.f32.mrb[0].mxu0
    %v3064 = vadd.f32 %v2970, %v3063
    %v3065 = vpop.f32.mrb[0].mxu0
    %3066 = vmatprep.mubr.f32.mxu0 0.0
    %3067 = vmatmul.mubr.f32.gmra.mrb[0].mxu0 %v2978
    %v3068 = vpop.f32.mrb[0].mxu0
    %v3069 = vadd.f32 %v2970, %v3068
    %v3070 = vpop.f32.mrb[0].mxu0
    %3071 = vmatprep.mubr.f32.mxu0 0.0
    %3072 = vmatmul.mubr.f32.gmra.mrb[0].mxu0 %v2981
    %v3073 = vpop.f32.mrb[0].mxu0
    %v3074 = vadd.f32 %v2970, %v3073
    %v3075 = vpop.f32.mrb[0].mxu0
    %3076 = vmatprep.mubr.f32.mxu0 0.0
    %3077 = vmatmul.mubr.f32.gmra.mrb[0].mxu0 %v2984
    %v3078 = vpop.f32.mrb[0].mxu0
    %v3079 = vadd.f32 %v2970, %v3078
    %v3080 = vpop.f32.mrb[0].mxu0
    %3081 = vmatprep.mubr.f32.mxu0 0.0
    %3082 = vmatmul.mubr.f32.gmra.mrb[0].mxu0 %v2987
    %v3083 = vpop.f32.mrb[0].mxu0
    %v3084 = vadd.f32 %v2970, %v3083
    %v3085 = vpop.f32.mrb[0].mxu0
    %3086 = vdwg.mxu0
    %v3088 = vsel %vm496, %v3059, 0
    %v3091 = vsel %vm496, %v3064, 0
    %v3094 = vsel %vm496, %v3069, 0
    %v3097 = vsel %vm496, %v3074, 0
    %v3100 = vsel %vm496, %v3079, 0
    %v3103 = vsel %vm496, %v3084, 0
    %3105 = vmatprep.subr.mxu0 0.0
    %3106 = vmatpush1.xpose.msra.mxu0 %v3088
    %3107 = vmatprep.subr.mxu0 0.0
    %3108 = vmatpush1.xpose.msra.mxu0 %v3091
    %3109 = vmatprep.subr.mxu0 0.0
    %3110 = vmatpush1.xpose.msra.mxu0 %v3094
    %3111 = vmatprep.subr.mxu0 0.0
    %3112 = vmatpush1.xpose.msra.mxu0 %v3097
    %3113 = vmatprep.subr.mxu0 0.0
    %3114 = vmatpush1.xpose.msra.mxu0 %v3100
    %3115 = vmatprep.subr.mxu0 0.0
    %3116 = vmatpush1.xpose.msra.mxu0 %v3103
    %3117 = vmatprep.subr.mxu0 0.0
    %3118 = vmatpush1.xpose.msra.mxu0 0.0
    %3119 = vmatprep.subr.mxu0 0.0
    %3120 = vmatpush1.xpose.msra.mxu0 0.0
    %3121 = vmatprep.subr.mxu0 0.0
    %3122 = vmatpush1.xpose.msra.mxu0 0.0
    %3123 = vmatprep.subr.mxu0 0.0
    %3124 = vmatpush1.xpose.msra.mxu0 0.0
    %3125 = vmatprep.subr.mxu0 0.0
    %3126 = vmatpush1.xpose.msra.mxu0 0.0
    %3127 = vmatprep.subr.mxu0 0.0
    %3128 = vmatpush1.xpose.msra.mxu0 0.0
    %3129 = vmatprep.subr.mxu0 0.0
    %3130 = vmatpush1.xpose.msra.mxu0 0.0
    %3131 = vmatprep.subr.mxu0 0.0
    %3132 = vmatpush1.xpose.msra.mxu0 0.0
    %3133 = vmatprep.subr.mxu0 0.0
    %3134 = vmatpush1.xpose.msra.mxu0 0.0
    %3135 = vmatprep.subr.mxu0 0.0
    %3136 = vmatpush1.xpose.msra.mxu0 0.0
    %3137 = vmatprep.subr.mxu0 0.0
    %3138 = vmatpush1.xpose.msra.mxu0 0.0
    %3139 = vmatprep.subr.mxu0 0.0
    %3140 = vmatpush1.xpose.msra.mxu0 0.0
    %3141 = vmatprep.subr.mxu0 0.0
    %3142 = vmatpush1.xpose.msra.mxu0 0.0
    %3143 = vmatprep.subr.mxu0 0.0
    %3144 = vmatpush1.xpose.msra.mxu0 0.0
    %3145 = vmatprep.subr.mxu0 0.0
    %3146 = vmatpush1.xpose.msra.mxu0 0.0
    %3147 = vmatprep.subr.mxu0 0.0
    %3148 = vmatpush1.xpose.msra.mxu0 0.0
    %3149 = vmatprep.subr.mxu0 0.0
    %3150 = vmatpush1.xpose.msra.mxu0 0.0
    %3151 = vmatprep.subr.mxu0 0.0
    %3152 = vmatpush1.xpose.msra.mxu0 0.0
    %3153 = vmatprep.subr.mxu0 0.0
    %3154 = vmatpush1.xpose.msra.mxu0 0.0
    %3155 = vmatprep.subr.mxu0 0.0
    %3156 = vmatpush1.xpose.msra.mxu0 0.0
    %3157 = vmatprep.subr.mxu0 0.0
    %3158 = vmatpush1.xpose.msra.mxu0 0.0
    %3159 = vmatprep.subr.mxu0 0.0
    %3160 = vmatpush1.xpose.msra.mxu0 0.0
    %3161 = vmatprep.subr.mxu0 0.0
    %3162 = vmatpush1.xpose.msra.mxu0 0.0
    %3163 = vmatprep.subr.mxu0 0.0
    %3164 = vmatpush1.xpose.msra.mxu0 0.0
    %3165 = vmatprep.subr.mxu0 0.0
    %3166 = vmatpush1.xpose.msra.mxu0 0.0
    %3167 = vmatprep.subr.mxu0 0.0
    %3168 = vmatpush1.xpose.msra.mxu0 0.0
    %3169 = vmatprep.mubr.f32.mxu0 0.0
    %3170 = vmatmul.mubr.f32.gmra.mrb[0].mxu0 %v2265
    %v3171 = vpop.f32.mrb[0].mxu0
    %v3172 = vadd.f32 0.0, %v3171
    %v3173 = vpop.f32.mrb[0].mxu0
    %3174 = vmatprep.mubr.f32.mxu0 0.0
    %3175 = vmatmul.mubr.f32.gmra.mrb[0].mxu0 %v2267
    %v3176 = vpop.f32.mrb[0].mxu0
    %v3177 = vadd.f32 0.0, %v3176
    %v3178 = vpop.f32.mrb[0].mxu0
    %3179 = vdwg.mxu0
    %v3180 = vsel %vm2389, %v3172, -inf
    %v3181 = vsel %vm2390, %v3177, -inf
    %vm3182 = vcmask 392192
    %v3183 = vsel %vm3182, %v3180, -inf
    %3184 = vmax.xlane.f32.xlu0 %v3183
    %v3185 = vpop.xlane.xlu0 %3184
    %v3186 = vsel %vm3182, %v3181, -inf
    %3187 = vmax.xlane.f32.xlu0 %v3186
    %v3188 = vpop.xlane.xlu0 %3187
    %v3189 = vsub.f32 %v3180, %v3185
    %v3190 = vsub.f32 %v3181, %v3188
    %v3191 = vmul.f32 %v3189, 1.442695
    %v3192 = vpow.pop %v3191
    %v3193 = vmul.f32 %v3190, 1.442695
    %v3194 = vpow.pop %v3193
    %v3195 = vsel %vm3182, %v3192, 0.0
    %3196 = vadd.xlane.f32.xlu0 %v3195
    %v3197 = vpop.xlane.xlu0 %3196
    %v3198 = vsel %vm3182, %v3194, 0.0
    %3199 = vadd.xlane.f32.xlu0 %v3198
    %v3200 = vpop.xlane.xlu0 %3199
    %v3201 = vrcp.pop %v3197
    %v3202 = vrcp.pop %v3200
    %v3203 = vmul.f32 %v3192, %v3201
    %v3204 = vmul.f32 %v3194, %v3202
    %v3206 = vsel %vm3182, %v3203, 0
    %v3209 = vsel %vm3182, %v3204, 0
    %3211 = vmatprep.subr.mxu0 0.0
    %3212 = vmatpush1.msra.mxu0 %v2962
    %3213 = vmatprep.subr.mxu0 0.0
    %3214 = vmatpush1.msra.mxu0 %v2963
    %3215 = vmatprep.subr.mxu0 0.0
    %3216 = vmatpush1.msra.mxu0 %v2678
    %3217 = vmatprep.subr.mxu0 0.0
    %3218 = vmatpush1.msra.mxu0 %v2683
    %3219 = vmatprep.subr.mxu0 0.0
    %3220 = vmatpush1.msra.mxu0 %v2866
    %3221 = vmatprep.subr.mxu0 0.0
    %3222 = vmatpush1.msra.mxu0 %v2871
    %3223 = vmatprep.subr.mxu0 0.0
    %3224 = vmatpush1.msra.mxu0 0.0
    %3225 = vmatprep.subr.mxu0 0.0
    %3226 = vmatpush1.msra.mxu0 0.0
    %3227 = vmatprep.subr.mxu0 0.0
    %3228 = vmatpush1.msra.mxu0 0.0
    %3229 = vmatprep.subr.mxu0 0.0
    %3230 = vmatpush1.msra.mxu0 0.0
    %3231 = vmatprep.subr.mxu0 0.0
    %3232 = vmatpush1.msra.mxu0 0.0
    %3233 = vmatprep.subr.mxu0 0.0
    %3234 = vmatpush1.msra.mxu0 0.0
    %3235 = vmatprep.subr.mxu0 0.0
    %3236 = vmatpush1.msra.mxu0 0.0
    %3237 = vmatprep.subr.mxu0 0.0
    %3238 = vmatpush1.msra.mxu0 0.0
    %3239 = vmatprep.subr.mxu0 0.0
    %3240 = vmatpush1.msra.mxu0 0.0
    %3241 = vmatprep.subr.mxu0 0.0
    %3242 = vmatpush1.msra.mxu0 0.0
    %3243 = vmatprep.subr.mxu0 0.0
    %3244 = vmatpush1.msra.mxu0 0.0
    %3245 = vmatprep.subr.mxu0 0.0
    %3246 = vmatpush1.msra.mxu0 0.0
    %3247 = vmatprep.subr.mxu0 0.0
    %3248 = vmatpush1.msra.mxu0 0.0
    %3249 = vmatprep.subr.mxu0 0.0
    %3250 = vmatpush1.msra.mxu0 0.0
    %3251 = vmatprep.subr.mxu0 0.0
    %3252 = vmatpush1.msra.mxu0 0.0
    %3253 = vmatprep.subr.mxu0 0.0
    %3254 = vmatpush1.msra.mxu0 0.0
    %3255 = vmatprep.subr.mxu0 0.0
    %3256 = vmatpush1.msra.mxu0 0.0
    %3257 = vmatprep.subr.mxu0 0.0
    %3258 = vmatpush1.msra.mxu0 0.0
    %3259 = vmatprep.subr.mxu0 0.0
    %3260 = vmatpush1.msra.mxu0 0.0
    %3261 = vmatprep.subr.mxu0 0.0
    %3262 = vmatpush1.msra.mxu0 0.0
    %3263 = vmatprep.subr.mxu0 0.0
    %3264 = vmatpush1.msra.mxu0 0.0
    %3265 = vmatprep.subr.mxu0 0.0
    %3266 = vmatpush1.msra.mxu0 0.0
    %3267 = vmatprep.subr.mxu0 0.0
    %3268 = vmatpush1.msra.mxu0 0.0
    %3269 = vmatprep.subr.mxu0 0.0
    %3270 = vmatpush1.msra.mxu0 0.0
    %3271 = vmatprep.subr.mxu0 0.0
    %3272 = vmatpush1.msra.mxu0 0.0
    %3273 = vmatprep.subr.mxu0 0.0
    %3274 = vmatpush1.msra.mxu0 0.0
    %3275 = vmatprep.mubr.f32.mxu0 0.0
    %3276 = vmatmul.mubr.f32.gmra.mrb[0].mxu0 %v3206
    %v3277 = vpop.f32.mrb[0].mxu0
    %v3278 = vadd.f32 0.0, %v3277
    %v3279 = vpop.f32.mrb[0].mxu0
    %3280 = vmatprep.mubr.f32.mxu0 0.0
    %3281 = vmatmul.mubr.f32.gmra.mrb[0].mxu0 %v3209
    %v3282 = vpop.f32.mrb[0].mxu0
    %v3283 = vadd.f32 0.0, %v3282
    %v3284 = vpop.f32.mrb[0].mxu0
    %3285 = vdwg.mxu0
    %v3286 = vld [vmem:[#allocation4 + $0x50] sm:$0xff]
    %v3287 = vld [vmem:[#allocation4 + $0x58] sm:$0xf]
    %v3288 = vld [vmem:[#allocation4 + $0xe0] sm:$0x1]
    %v3289 = vlaneseq
    %v3290 = vshrl.u32 %v3289, 7
    %v3291 = vsub.s32 0, %v3290
    %v3292 = vrot.slane %v3288, %v3291
    %v3294 = vsel %vm184, %v3278, 0
    %v3297 = vsel %vm184, %v3283, 0
    %v3300 = vsel %vm191, %v3287, 0
    %3302 = vmatprep.subr.mxu0 0.0
    %3303 = vmatpush1.msra.mxu0 %v3286
    %3304 = vmatprep.subr.mxu0 0.0
    %3305 = vmatpush1.msra.mxu0 %v3300
    %3306 = vmatprep.subr.mxu0 0.0
    %3307 = vmatpush1.msra.mxu0 0.0
    %3308 = vmatprep.subr.mxu0 0.0
    %3309 = vmatpush1.msra.mxu0 0.0
    %3310 = vmatprep.subr.mxu0 0.0
    %3311 = vmatpush1.msra.mxu0 0.0
    %3312 = vmatprep.subr.mxu0 0.0
    %3313 = vmatpush1.msra.mxu0 0.0
    %3314 = vmatprep.subr.mxu0 0.0
    %3315 = vmatpush1.msra.mxu0 0.0
    %3316 = vmatprep.subr.mxu0 0.0
    %3317 = vmatpush1.msra.mxu0 0.0
    %3318 = vmatprep.subr.mxu0 0.0
    %3319 = vmatpush1.msra.mxu0 0.0
    %3320 = vmatprep.subr.mxu0 0.0
    %3321 = vmatpush1.msra.mxu0 0.0
    %3322 = vmatprep.subr.mxu0 0.0
    %3323 = vmatpush1.msra.mxu0 0.0
    %3324 = vmatprep.subr.mxu0 0.0
    %3325 = vmatpush1.msra.mxu0 0.0
    %3326 = vmatprep.subr.mxu0 0.0
    %3327 = vmatpush1.msra.mxu0 0.0
    %3328 = vmatprep.subr.mxu0 0.0
    %3329 = vmatpush1.msra.mxu0 0.0
    %3330 = vmatprep.subr.mxu0 0.0
    %3331 = vmatpush1.msra.mxu0 0.0
    %3332 = vmatprep.subr.mxu0 0.0
    %3333 = vmatpush1.msra.mxu0 0.0
    %3334 = vmatprep.subr.mxu0 0.0
    %3335 = vmatpush1.msra.mxu0 0.0
    %3336 = vmatprep.subr.mxu0 0.0
    %3337 = vmatpush1.msra.mxu0 0.0
    %3338 = vmatprep.subr.mxu0 0.0
    %3339 = vmatpush1.msra.mxu0 0.0
    %3340 = vmatprep.subr.mxu0 0.0
    %3341 = vmatpush1.msra.mxu0 0.0
    %3342 = vmatprep.subr.mxu0 0.0
    %3343 = vmatpush1.msra.mxu0 0.0
    %3344 = vmatprep.subr.mxu0 0.0
    %3345 = vmatpush1.msra.mxu0 0.0
    %3346 = vmatprep.subr.mxu0 0.0
    %3347 = vmatpush1.msra.mxu0 0.0
    %3348 = vmatprep.subr.mxu0 0.0
    %3349 = vmatpush1.msra.mxu0 0.0
    %3350 = vmatprep.subr.mxu0 0.0
    %3351 = vmatpush1.msra.mxu0 0.0
    %3352 = vmatprep.subr.mxu0 0.0
    %3353 = vmatpush1.msra.mxu0 0.0
    %3354 = vmatprep.subr.mxu0 0.0
    %3355 = vmatpush1.msra.mxu0 0.0
    %3356 = vmatprep.subr.mxu0 0.0
    %3357 = vmatpush1.msra.mxu0 0.0
    %3358 = vmatprep.subr.mxu0 0.0
    %3359 = vmatpush1.msra.mxu0 0.0
    %3360 = vmatprep.subr.mxu0 0.0
    %3361 = vmatpush1.msra.mxu0 0.0
    %3362 = vmatprep.subr.mxu0 0.0
    %3363 = vmatpush1.msra.mxu0 0.0
    %3364 = vmatprep.subr.mxu0 0.0
    %3365 = vmatpush1.msra.mxu0 0.0
    %3366 = vmatprep.mubr.f32.mxu0 0.0
    %3367 = vmatmul.mubr.f32.gmra.mrb[0].mxu0 %v3294
    %v3368 = vpop.f32.mrb[0].mxu0
    %v3369 = vadd.f32 %v3292, %v3368
    %v3370 = vpop.f32.mrb[0].mxu0
    %3371 = vmatprep.mubr.f32.mxu0 0.0
    %3372 = vmatmul.mubr.f32.gmra.mrb[0].mxu0 %v3297
    %v3373 = vpop.f32.mrb[0].mxu0
    %v3374 = vadd.f32 %v3292, %v3373
    %v3375 = vpop.f32.mrb[0].mxu0
    %3376 = vdwg.mxu0
    %v3377 = vmax.f32 %v3369, 0.0
    %v3378 = vmax.f32 %v3374, 0.0
    %v3379 = vld [vmem:[#allocation4 + $0x60] sm:$0xff]
    %v3380 = vld [vmem:[#allocation4 + $0x68] sm:$0xff]
    %v3381 = vld [vmem:[#allocation4 + $0x70] sm:$0xff]
    %v3382 = vld [vmem:[#allocation4 + $0x78] sm:$0xff]
    %v3383 = vld [vmem:[#allocation4 + $0x80] sm:$0xff]
    %v3384 = vld [vmem:[#allocation4 + $0x88] sm:$0xff]
    %v3385 = vld [vmem:[#allocation4 + $0x90] sm:$0xff]
    %v3386 = vld [vmem:[#allocation4 + $0x98] sm:$0xff]
    %3387 = vmatprep.subr.mxu0 0.0
    %3388 = vmatpush1.msra.mxu0 %v3383
    %3389 = vmatprep.subr.mxu0 0.0
    %3390 = vmatpush1.msra.mxu0 %v3384
    %3391 = vmatprep.subr.mxu0 0.0
    %3392 = vmatpush1.msra.mxu0 %v3385
    %3393 = vmatprep.subr.mxu0 0.0
    %3394 = vmatpush1.msra.mxu0 %v3386
    %3395 = vmatprep.subr.mxu0 0.0
    %3396 = vmatpush1.msra.mxu0 0.0
    %3397 = vmatprep.subr.mxu0 0.0
    %3398 = vmatpush1.msra.mxu0 0.0
    %3399 = vmatprep.subr.mxu0 0.0
    %3400 = vmatpush1.msra.mxu0 0.0
    %3401 = vmatprep.subr.mxu0 0.0
    %3402 = vmatpush1.msra.mxu0 0.0
    %3403 = vmatprep.subr.mxu0 0.0
    %3404 = vmatpush1.msra.mxu0 0.0
    %3405 = vmatprep.subr.mxu0 0.0
    %3406 = vmatpush1.msra.mxu0 0.0
    %3407 = vmatprep.subr.mxu0 0.0
    %3408 = vmatpush1.msra.mxu0 0.0
    %3409 = vmatprep.subr.mxu0 0.0
    %3410 = vmatpush1.msra.mxu0 0.0
    %3411 = vmatprep.subr.mxu0 0.0
    %3412 = vmatpush1.msra.mxu0 0.0
    %3413 = vmatprep.subr.mxu0 0.0
    %3414 = vmatpush1.msra.mxu0 0.0
    %3415 = vmatprep.subr.mxu0 0.0
    %3416 = vmatpush1.msra.mxu0 0.0
    %3417 = vmatprep.subr.mxu0 0.0
    %3418 = vmatpush1.msra.mxu0 0.0
    %3419 = vmatprep.subr.mxu0 0.0
    %3420 = vmatpush1.msra.mxu0 0.0
    %3421 = vmatprep.subr.mxu0 0.0
    %3422 = vmatpush1.msra.mxu0 0.0
    %3423 = vmatprep.subr.mxu0 0.0
    %3424 = vmatpush1.msra.mxu0 0.0
    %3425 = vmatprep.subr.mxu0 0.0
    %3426 = vmatpush1.msra.mxu0 0.0
    %3427 = vmatprep.subr.mxu0 0.0
    %3428 = vmatpush1.msra.mxu0 0.0
    %3429 = vmatprep.subr.mxu0 0.0
    %3430 = vmatpush1.msra.mxu0 0.0
    %3431 = vmatprep.subr.mxu0 0.0
    %3432 = vmatpush1.msra.mxu0 0.0
    %3433 = vmatprep.subr.mxu0 0.0
    %3434 = vmatpush1.msra.mxu0 0.0
    %3435 = vmatprep.subr.mxu0 0.0
    %3436 = vmatpush1.msra.mxu0 0.0
    %3437 = vmatprep.subr.mxu0 0.0
    %3438 = vmatpush1.msra.mxu0 0.0
    %3439 = vmatprep.subr.mxu0 0.0
    %3440 = vmatpush1.msra.mxu0 0.0
    %3441 = vmatprep.subr.mxu0 0.0
    %3442 = vmatpush1.msra.mxu0 0.0
    %3443 = vmatprep.subr.mxu0 0.0
    %3444 = vmatpush1.msra.mxu0 0.0
    %3445 = vmatprep.subr.mxu0 0.0
    %3446 = vmatpush1.msra.mxu0 0.0
    %3447 = vmatprep.subr.mxu0 0.0
    %3448 = vmatpush1.msra.mxu0 0.0
    %3449 = vmatprep.subr.mxu0 0.0
    %3450 = vmatpush1.msra.mxu0 0.0
    %3451 = vmatprep.mubr.f32.mxu0 0.0
    %3452 = vmatmul.mubr.f32.gmra.mrb[0].mxu0 %v2265
    %v3453 = vpop.f32.mrb[0].mxu0
    %v3454 = vadd.f32 0.0, %v3453
    %v3455 = vpop.f32.mrb[0].mxu0
    %3456 = vmatprep.mubr.f32.mxu0 0.0
    %3457 = vmatmul.mubr.f32.gmra.mrb[0].mxu0 %v2267
    %v3458 = vpop.f32.mrb[0].mxu0
    %v3459 = vadd.f32 0.0, %v3458
    %v3460 = vpop.f32.mrb[0].mxu0
    %3461 = vdwg.mxu0
    %v3463 = vsel %vm496, %v3377, 0
    %v3466 = vsel %vm496, %v3378, 0
    %3468 = vmatprep.subr.mxu0 0.0
    %3469 = vmatpush1.msra.mxu0 %v3379
    %3470 = vmatprep.subr.mxu0 0.0
    %3471 = vmatpush1.msra.mxu0 %v3380
    %3472 = vmatprep.subr.mxu0 0.0
    %3473 = vmatpush1.msra.mxu0 %v3381
    %3474 = vmatprep.subr.mxu0 0.0
    %3475 = vmatpush1.msra.mxu0 %v3382
    %3476 = vmatprep.subr.mxu0 0.0
    %3477 = vmatpush1.msra.mxu0 0.0
    %3478 = vmatprep.subr.mxu0 0.0
    %3479 = vmatpush1.msra.mxu0 0.0
    %3480 = vmatprep.subr.mxu0 0.0
    %3481 = vmatpush1.msra.mxu0 0.0
    %3482 = vmatprep.subr.mxu0 0.0
    %3483 = vmatpush1.msra.mxu0 0.0
    %3484 = vmatprep.subr.mxu0 0.0
    %3485 = vmatpush1.msra.mxu0 0.0
    %3486 = vmatprep.subr.mxu0 0.0
    %3487 = vmatpush1.msra.mxu0 0.0
    %3488 = vmatprep.subr.mxu0 0.0
    %3489 = vmatpush1.msra.mxu0 0.0
    %3490 = vmatprep.subr.mxu0 0.0
    %3491 = vmatpush1.msra.mxu0 0.0
    %3492 = vmatprep.subr.mxu0 0.0
    %3493 = vmatpush1.msra.mxu0 0.0
    %3494 = vmatprep.subr.mxu0 0.0
    %3495 = vmatpush1.msra.mxu0 0.0
    %3496 = vmatprep.subr.mxu0 0.0
    %3497 = vmatpush1.msra.mxu0 0.0
    %3498 = vmatprep.subr.mxu0 0.0
    %3499 = vmatpush1.msra.mxu0 0.0
    %3500 = vmatprep.subr.mxu0 0.0
    %3501 = vmatpush1.msra.mxu0 0.0
    %3502 = vmatprep.subr.mxu0 0.0
    %3503 = vmatpush1.msra.mxu0 0.0
    %3504 = vmatprep.subr.mxu0 0.0
    %3505 = vmatpush1.msra.mxu0 0.0
    %3506 = vmatprep.subr.mxu0 0.0
    %3507 = vmatpush1.msra.mxu0 0.0
    %3508 = vmatprep.subr.mxu0 0.0
    %3509 = vmatpush1.msra.mxu0 0.0
    %3510 = vmatprep.subr.mxu0 0.0
    %3511 = vmatpush1.msra.mxu0 0.0
    %3512 = vmatprep.subr.mxu0 0.0
    %3513 = vmatpush1.msra.mxu0 0.0
    %3514 = vmatprep.subr.mxu0 0.0
    %3515 = vmatpush1.msra.mxu0 0.0
    %3516 = vmatprep.subr.mxu0 0.0
    %3517 = vmatpush1.msra.mxu0 0.0
    %3518 = vmatprep.subr.mxu0 0.0
    %3519 = vmatpush1.msra.mxu0 0.0
    %3520 = vmatprep.subr.mxu0 0.0
    %3521 = vmatpush1.msra.mxu0 0.0
    %3522 = vmatprep.subr.mxu0 0.0
    %3523 = vmatpush1.msra.mxu0 0.0
    %3524 = vmatprep.subr.mxu0 0.0
    %3525 = vmatpush1.msra.mxu0 0.0
    %3526 = vmatprep.subr.mxu0 0.0
    %3527 = vmatpush1.msra.mxu0 0.0
    %3528 = vmatprep.subr.mxu0 0.0
    %3529 = vmatpush1.msra.mxu0 0.0
    %3530 = vmatprep.subr.mxu0 0.0
    %3531 = vmatpush1.msra.mxu0 0.0
    %3532 = vmatprep.mubr.f32.mxu0 0.0
    %3533 = vmatmul.mubr.f32.gmra.mrb[0].mxu0 %v3463
    %v3534 = vpop.f32.mrb[0].mxu0
    %v3535 = vadd.f32 %v3454, %v3534
    %v3536 = vpop.f32.mrb[0].mxu0
    %3537 = vmatprep.mubr.f32.mxu0 0.0
    %3538 = vmatmul.mubr.f32.gmra.mrb[0].mxu0 %v3466
    %v3539 = vpop.f32.mrb[0].mxu0
    %v3540 = vadd.f32 %v3459, %v3539
    %v3541 = vpop.f32.mrb[0].mxu0
    %3542 = vdwg.mxu0
    %v3543 = vld [vmem:[#allocation4 + $0xe8] sm:$0x1]
    %v3544 = vlaneseq
    %v3545 = vshrl.u32 %v3544, 7
    %v3546 = vsub.s32 0, %v3545
    %v3547 = vrot.slane %v3543, %v3546
    %v3548 = vadd.f32 %v3535, %v3547
    %v3549 = vadd.f32 %v3540, %v3547
    %v3550 = vmax.f32 %v3548, 0.0
    %v3551 = vmax.f32 %v3549, 0.0
    %v3552 = vld [vmem:[#allocation4 + $0xa0] sm:$0xff]
    %v3553 = vld [vmem:[#allocation4 + $0xa8] sm:$0xff]
    %v3554 = vld [vmem:[#allocation4 + $0xb0] sm:$0xff]
    %v3555 = vld [vmem:[#allocation4 + $0xf0] sm:$0x1]
    %v3556 = vlaneseq
    %v3557 = vshrl.u32 %v3556, 7
    %v3558 = vsub.s32 0, %v3557
    %v3559 = vrot.slane %v3555, %v3558
    %vm3560 = vcmask 195584
    %v3562 = vsel %vm3560, %v3550, 0
    %v3565 = vsel %vm3560, %v3551, 0
    %3567 = vmatprep.subr.mxu0 0.0
    %3568 = vmatpush1.msra.mxu0 %v3552
    %3569 = vmatprep.subr.mxu0 0.0
    %3570 = vmatpush1.msra.mxu0 %v3553
    %3571 = vmatprep.subr.mxu0 0.0
    %3572 = vmatpush1.msra.mxu0 %v3554
    %3573 = vmatprep.subr.mxu0 0.0
    %3574 = vmatpush1.msra.mxu0 0.0
    %3575 = vmatprep.subr.mxu0 0.0
    %3576 = vmatpush1.msra.mxu0 0.0
    %3577 = vmatprep.subr.mxu0 0.0
    %3578 = vmatpush1.msra.mxu0 0.0
    %3579 = vmatprep.subr.mxu0 0.0
    %3580 = vmatpush1.msra.mxu0 0.0
    %3581 = vmatprep.subr.mxu0 0.0
    %3582 = vmatpush1.msra.mxu0 0.0
    %3583 = vmatprep.subr.mxu0 0.0
    %3584 = vmatpush1.msra.mxu0 0.0
    %3585 = vmatprep.subr.mxu0 0.0
    %3586 = vmatpush1.msra.mxu0 0.0
    %3587 = vmatprep.subr.mxu0 0.0
    %3588 = vmatpush1.msra.mxu0 0.0
    %3589 = vmatprep.subr.mxu0 0.0
    %3590 = vmatpush1.msra.mxu0 0.0
    %3591 = vmatprep.subr.mxu0 0.0
    %3592 = vmatpush1.msra.mxu0 0.0
    %3593 = vmatprep.subr.mxu0 0.0
    %3594 = vmatpush1.msra.mxu0 0.0
    %3595 = vmatprep.subr.mxu0 0.0
    %3596 = vmatpush1.msra.mxu0 0.0
    %3597 = vmatprep.subr.mxu0 0.0
    %3598 = vmatpush1.msra.mxu0 0.0
    %3599 = vmatprep.subr.mxu0 0.0
    %3600 = vmatpush1.msra.mxu0 0.0
    %3601 = vmatprep.subr.mxu0 0.0
    %3602 = vmatpush1.msra.mxu0 0.0
    %3603 = vmatprep.subr.mxu0 0.0
    %3604 = vmatpush1.msra.mxu0 0.0
    %3605 = vmatprep.subr.mxu0 0.0
    %3606 = vmatpush1.msra.mxu0 0.0
    %3607 = vmatprep.subr.mxu0 0.0
    %3608 = vmatpush1.msra.mxu0 0.0
    %3609 = vmatprep.subr.mxu0 0.0
    %3610 = vmatpush1.msra.mxu0 0.0
    %3611 = vmatprep.subr.mxu0 0.0
    %3612 = vmatpush1.msra.mxu0 0.0
    %3613 = vmatprep.subr.mxu0 0.0
    %3614 = vmatpush1.msra.mxu0 0.0
    %3615 = vmatprep.subr.mxu0 0.0
    %3616 = vmatpush1.msra.mxu0 0.0
    %3617 = vmatprep.subr.mxu0 0.0
    %3618 = vmatpush1.msra.mxu0 0.0
    %3619 = vmatprep.subr.mxu0 0.0
    %3620 = vmatpush1.msra.mxu0 0.0
    %3621 = vmatprep.subr.mxu0 0.0
    %3622 = vmatpush1.msra.mxu0 0.0
    %3623 = vmatprep.subr.mxu0 0.0
    %3624 = vmatpush1.msra.mxu0 0.0
    %3625 = vmatprep.subr.mxu0 0.0
    %3626 = vmatpush1.msra.mxu0 0.0
    %3627 = vmatprep.subr.mxu0 0.0
    %3628 = vmatpush1.msra.mxu0 0.0
    %3629 = vmatprep.subr.mxu0 0.0
    %3630 = vmatpush1.msra.mxu0 0.0
    %3631 = vmatprep.mubr.f32.mxu0 0.0
    %3632 = vmatmul.mubr.f32.gmra.mrb[0].mxu0 %v3562
    %v3633 = vpop.f32.mrb[0].mxu0
    %v3634 = vadd.f32 %v3559, %v3633
    %v3635 = vpop.f32.mrb[0].mxu0
    %3636 = vmatprep.mubr.f32.mxu0 0.0
    %3637 = vmatmul.mubr.f32.gmra.mrb[0].mxu0 %v3565
    %v3638 = vpop.f32.mrb[0].mxu0
    %v3639 = vadd.f32 %v3559, %v3638
    %v3640 = vpop.f32.mrb[0].mxu0
    %3641 = vdwg.mxu0
    %v3642 = vmax.f32 %v3634, 0.0
    %v3643 = vmax.f32 %v3639, 0.0
    %v3644 = vlaneseq
    %v3645 = vshrl.u32 %v3644, 7
    %v3646 = vsub.s32 0, %v3645
    %v3647 = vrot.slane %v81, %v3646
    %v3649 = vsel %vm496, %v3642, 0
    %v3652 = vsel %vm496, %v3643, 0
    %3654 = vmatprep.subr.mxu0 0.0
    %3655 = vmatpush1.msra.mxu0 %v77
    %3656 = vmatprep.subr.mxu0 0.0
    %3657 = vmatpush1.msra.mxu0 %v78
    %3658 = vmatprep.subr.mxu0 0.0
    %3659 = vmatpush1.msra.mxu0 %v79
    %3660 = vmatprep.subr.mxu0 0.0
    %3661 = vmatpush1.msra.mxu0 %v80
    %3662 = vmatprep.subr.mxu0 0.0
    %3663 = vmatpush1.msra.mxu0 0.0
    %3664 = vmatprep.subr.mxu0 0.0
    %3665 = vmatpush1.msra.mxu0 0.0
    %3666 = vmatprep.subr.mxu0 0.0
    %3667 = vmatpush1.msra.mxu0 0.0
    %3668 = vmatprep.subr.mxu0 0.0
    %3669 = vmatpush1.msra.mxu0 0.0
    %3670 = vmatprep.subr.mxu0 0.0
    %3671 = vmatpush1.msra.mxu0 0.0
    %3672 = vmatprep.subr.mxu0 0.0
    %3673 = vmatpush1.msra.mxu0 0.0
    %3674 = vmatprep.subr.mxu0 0.0
    %3675 = vmatpush1.msra.mxu0 0.0
    %3676 = vmatprep.subr.mxu0 0.0
    %3677 = vmatpush1.msra.mxu0 0.0
    %3678 = vmatprep.subr.mxu0 0.0
    %3679 = vmatpush1.msra.mxu0 0.0
    %3680 = vmatprep.subr.mxu0 0.0
    %3681 = vmatpush1.msra.mxu0 0.0
    %3682 = vmatprep.subr.mxu0 0.0
    %3683 = vmatpush1.msra.mxu0 0.0
    %3684 = vmatprep.subr.mxu0 0.0
    %3685 = vmatpush1.msra.mxu0 0.0
    %3686 = vmatprep.subr.mxu0 0.0
    %3687 = vmatpush1.msra.mxu0 0.0
    %3688 = vmatprep.subr.mxu0 0.0
    %3689 = vmatpush1.msra.mxu0 0.0
    %3690 = vmatprep.subr.mxu0 0.0
    %3691 = vmatpush1.msra.mxu0 0.0
    %3692 = vmatprep.subr.mxu0 0.0
    %3693 = vmatpush1.msra.mxu0 0.0
    %3694 = vmatprep.subr.mxu0 0.0
    %3695 = vmatpush1.msra.mxu0 0.0
    %3696 = vmatprep.subr.mxu0 0.0
    %3697 = vmatpush1.msra.mxu0 0.0
    %3698 = vmatprep.subr.mxu0 0.0
    %3699 = vmatpush1.msra.mxu0 0.0
    %3700 = vmatprep.subr.mxu0 0.0
    %3701 = vmatpush1.msra.mxu0 0.0
    %3702 = vmatprep.subr.mxu0 0.0
    %3703 = vmatpush1.msra.mxu0 0.0
    %3704 = vmatprep.subr.mxu0 0.0
    %3705 = vmatpush1.msra.mxu0 0.0
    %3706 = vmatprep.subr.mxu0 0.0
    %3707 = vmatpush1.msra.mxu0 0.0
    %3708 = vmatprep.subr.mxu0 0.0
    %3709 = vmatpush1.msra.mxu0 0.0
    %3710 = vmatprep.subr.mxu0 0.0
    %3711 = vmatpush1.msra.mxu0 0.0
    %3712 = vmatprep.subr.mxu0 0.0
    %3713 = vmatpush1.msra.mxu0 0.0
    %3714 = vmatprep.subr.mxu0 0.0
    %3715 = vmatpush1.msra.mxu0 0.0
    %3716 = vmatprep.subr.mxu0 0.0
    %3717 = vmatpush1.msra.mxu0 0.0
    %3718 = vmatprep.mubr.f32.mxu0 0.0
    %3719 = vmatmul.mubr.f32.gmra.mrb[0].mxu0 %v3649
    %v3720 = vpop.f32.mrb[0].mxu0
    %v3721 = vadd.f32 %v3647, %v3720
    %v3722 = vpop.f32.mrb[0].mxu0
    %3723 = vmatprep.mubr.f32.mxu0 0.0
    %3724 = vmatmul.mubr.f32.gmra.mrb[0].mxu0 %v3652
    %v3725 = vpop.f32.mrb[0].mxu0
    %v3726 = vadd.f32 %v3647, %v3725
    %v3727 = vpop.f32.mrb[0].mxu0
    %3728 = vdwg.mxu0
    %vm3729 = vcmp.ge.s32.totalorder %v362, 1
    %vm3730 = vcmp.lt.s32.totalorder %v362, 11
    %vm3731 = vmand %vm3729, %vm3730
    %v3732 = vsel %vm3731, %v3721, -inf
    %v3733 = vsel %vm3731, %v3726, -inf
    %3734 = vmax.xlane.f32.xlu0 %v3732
    %v3735 = vpop.xlane.xlu0 %3734
    %3736 = vmax.xlane.f32.xlu0 %v3733
    %v3737 = vpop.xlane.xlu0 %3736
    %v3738 = vsub.f32 %v3721, %v3735
    %v3739 = vsub.f32 %v3726, %v3737
    %v3740 = vsel %vm3731, %v3738, -inf
    %v3741 = vsel %vm3731, %v3739, -inf
    %v3742 = vmul.f32 %v3740, 1.442695
    %v3743 = vpow.pop %v3742
    %v3744 = vmul.f32 %v3741, 1.442695
    %v3745 = vpow.pop %v3744
    %3746 = vadd.xlane.f32.xlu0 %v3743
    %v3747 = vpop.xlane.xlu0 %3746
    %3748 = vadd.xlane.f32.xlu0 %v3745
    %v3749 = vpop.xlane.xlu0 %3748
    %v3750 = vlog2.pop %v3747
    %v3751 = vmul.f32 %v3750, 0.6931472
    %v3752 = vlog2.pop %v3749
    %v3753 = vmul.f32 %v3752, 0.6931472
    %v3754 = vsub.f32 %v3738, %v3751
    %v3755 = vsub.f32 %v3739, %v3753
    %vm3756 = vcmp.eq.s32.totalorder %v362, 0
    %v3757 = vmax.f32 %v3721, 0.0
    %v3758 = vmax.f32 %v3726, 0.0
    %v3759 = vsel %vm3731, %v3754, 0.0
    %v3760 = vsel %vm3731, %v3755, 0.0
    %v3761 = vsel %vm3756, %v3757, %v3759
    %v3762 = vsel %vm3756, %v3758, %v3760
    %3763 = vst [vmem:[%s9] sm:$0xff] %v3761
    %3764 = vst [vmem:[%s9 + $0x8] sm:$0xff] %v3762
    // Predicated region
    $region46: #{forward.1} parent=1 // pred_check
      _
    $region47: #{forward.1} parent=1 // pred_check_branch
      %3766 = sbr.rel (0) target = $region49
    $region48: #{forward.1} parent=1 // pred_region
      _
    $region49: #{forward.1} parent=1 // pred_fallthru
      _
    // Predicated region
    $region50: #{forward.1} parent=1 // pred_check
      _
    $region51: #{forward.1} parent=1 // pred_check_branch
      %3768 = sbr.rel (0) target = $region53
    $region52: #{forward.1} parent=1 // pred_region
      _
    $region53: #{forward.1} parent=1 // pred_fallthru
      _
    // Predicated region
    $region54: #{forward.1} parent=1 // pred_check
      _
    $region55: #{forward.1} parent=1 // pred_check_branch
      %3770 = sbr.rel (0) target = $region57
    $region56: #{forward.1} parent=1 // pred_region
      _
    $region57: #{forward.1} parent=1 // pred_fallthru
      _
    // Predicated region
    $region58: #{forward.1} parent=1 // pred_check
      _
    $region59: #{forward.1} parent=1 // pred_check_branch
      %3772 = sbr.rel (0) target = $region61
    $region60: #{forward.1} parent=1 // pred_region
      _
    $region61: #{forward.1} parent=1 // pred_fallthru
      _
    %3773 = vsyncpa [#allocation3], 1
    %3774 = vsyncpa [#allocation5], 1

</llo_original>
